<compile_context>
chip_gen: v5e
topology: v5e:2x2
jax: 0.10.0
libtpu: 0.0.40
codegen_flags: <defaults>
</compile_context>

<pallas_src>
import functools

import jax
import jax.numpy as jnp
from jax.experimental import pallas as pl
from jax.experimental.pallas import tpu as pltpu

LN_EPS = 1e-5  # PyTorch nn.LayerNorm default
_INV_SQRT2 = 0.7071067811865476


def _layernorm(v, g, b):
    mu = jnp.mean(v, axis=-1, keepdims=True)
    var = jnp.mean((v - mu) ** 2, axis=-1, keepdims=True)
    return (v - mu) * jax.lax.rsqrt(var + LN_EPS) * g + b


def _gelu_exact(v):
    return 0.5 * v * (1.0 + jax.lax.erf(v * jnp.float32(_INV_SQRT2)))


# ----------------------------------------------------------------------------
# Fused Block kernel (x + ripe -> attn(+rioe bias) -> +res -> MLP -> +res)
# ----------------------------------------------------------------------------
def _block_kernel(xq_ref, xk_ref, peq_ref, pek_ref, rioe_ref,
                  wq_ref, wk_ref, wv_ref, wproj_ref, bproj_ref,
                  g1_ref, b1_ref, g2_ref, b2_ref,
                  wfc1_ref, bfc1_ref, wfc2_ref, bfc2_ref,
                  gf_ref, bf_ref,
                  o_ref,
                  q_scr, m_scr, l_scr, acc_scr,
                  *, num_heads, head_dim, scale, bias_mul_bf16, apply_final_ln):
    f32 = jnp.float32
    bf16 = jnp.bfloat16
    H, hd = num_heads, head_dim

    ki = pl.program_id(2)
    nk = pl.num_programs(2)

    def block_input(x_ref, pe_ref):
        # TransformerEncoder adds ripe before every block: block(x + ripe, rioe)
        return x_ref[...].astype(f32) + pe_ref[...].astype(f32)

    # ---- init once per (batch, q-tile): LN1 + q projection, fold softmax scale
    @pl.when(ki == 0)
    def _init():
        xq = block_input(xq_ref, peq_ref)
        xnq = _layernorm(xq, g1_ref[...], b1_ref[...])
        q = jnp.dot(xnq.astype(bf16), wq_ref[...], preferred_element_type=f32)
        q_scr[...] = q * scale                    # scale folded into q once
        m_scr[...] = jnp.full(m_scr.shape, -jnp.inf, m_scr.dtype)
        l_scr[...] = jnp.zeros(l_scr.shape, l_scr.dtype)
        acc_scr[...] = jnp.zeros(acc_scr.shape, acc_scr.dtype)

    # ---- per kv tile: LN1 + k/v projections for these rows (bf16 MXU, f32 acc)
    # TODO(synk): on v7x this kv-side recompute could be hoisted into a small
    # preceding pallas_call streaming LN1(x+ripe)@{Wk,Wv}; it is hidden under
    # the rioe HBM stream on v5e/v6e.
    xk = block_input(xk_ref, pek_ref)
    xnk = _layernorm(xk, g1_ref[...], b1_ref[...]).astype(bf16)
    k = jnp.dot(xnk, wk_ref[...], preferred_element_type=f32)     # (tk, C)
    v = jnp.dot(xnk, wv_ref[...], preferred_element_type=f32)     # (tk, C)

    nt_dims = (((1,), (1,)), ((), ()))            # A @ B^T without a transpose

    # ---- per-head online softmax; everything stays lane-dense (T, C) ----
    for h in range(H):
        sl = slice(h * hd, (h + 1) * hd)
        q_h = q_scr[:, sl]                        # (tq, hd) f32, pre-scaled
        k_h = k[:, sl]                            # (tk, hd)
        v_h = v[:, sl]                            # (tk, hd)

        # rioe bias: fused multiply+reduce over the (tq, tk, hd) slice of the
        # rioe ref -- no (tq, tk, C) f32 intermediate is ever built.
        rio_h = rioe_ref[:, :, sl]                # (tq, tk, hd) bf16
        if bias_mul_bf16:                         # v6e/v7x: bf16 VPU multiply
            bias_h = jnp.sum(rio_h * q_h.astype(bf16)[:, None, :],
                             axis=-1, dtype=f32)
        else:                                     # v5e-safe: f32 multiply
            bias_h = jnp.sum(rio_h.astype(f32) * q_h[:, None, :], axis=-1)

        s_h = jax.lax.dot_general(q_h.astype(bf16), k_h.astype(bf16), nt_dims,
                                  preferred_element_type=f32) + bias_h  # (tq,tk)

        m_prev = m_scr[:, h:h + 1]                # (tq, 1)
        m_new = jnp.maximum(m_prev, jnp.max(s_h, axis=-1, keepdims=True))
        alpha = jnp.exp(m_prev - m_new)
        p = jnp.exp(s_h - m_new)                  # (tq, tk)
        l_scr[:, h:h + 1] = alpha * l_scr[:, h:h + 1] + jnp.sum(
            p, axis=-1, keepdims=True)
        m_scr[:, h:h + 1] = m_new
        acc_scr[:, sl] = alpha * acc_scr[:, sl] + jnp.dot(
            p.astype(bf16), v_h.astype(bf16), preferred_element_type=f32)

    # ---- finalize: projection + residual, LN2, MLP (exact GELU) + residual ----
    @pl.when(ki == nk - 1)
    def _fin():
        inv_l = 1.0 / l_scr[...]                  # exact (PyTorch parity)
        for h in range(H):
            sl = slice(h * hd, (h + 1) * hd)
            acc_scr[:, sl] = acc_scr[:, sl] * inv_l[:, h:h + 1]
        attn = acc_scr[...]                       # (tq, C), lane-dense
        attn = (jnp.dot(attn.astype(bf16), wproj_ref[...],
                        preferred_element_type=f32) + bproj_ref[...])
        x1 = block_input(xq_ref, peq_ref) + attn  # residual 1
        xn2 = _layernorm(x1, g2_ref[...], b2_ref[...])
        h1 = (jnp.dot(xn2.astype(bf16), wfc1_ref[...],
                      preferred_element_type=f32) + bfc1_ref[...])
        h1 = _gelu_exact(h1)
        h2 = (jnp.dot(h1.astype(bf16), wfc2_ref[...],
                      preferred_element_type=f32) + bfc2_ref[...])
        y = x1 + h2                               # residual 2
        if apply_final_ln:                        # encoder's final nn.LayerNorm
            y = _layernorm(y, gf_ref[...], bf_ref[...])
        o_ref[...] = y.astype(o_ref.dtype)


def block_forward(x, ripe, rioe, params, *, num_heads, tq=None, tk=None,
                  bias_mul_bf16=False, final_ln=None,
                  vmem_limit_bytes=48 * 1024 * 1024):
    B, N, C = x.shape
    assert C % num_heads == 0
    head_dim = C // num_heads
    scale = head_dim ** (-0.5)
    Hm = params["wfc1"].shape[1]

    # v7x-safe defaults (64 MiB VMEM): tq=128, tk=64 when C>256 keeps the
    # double-buffered bf16 rioe tile + weights well under the scoped limit.
    # On v5e/v6e (128 MiB VMEM) pass tk=256 and a larger vmem_limit_bytes.
    if tq is None:
        tq = min(N, 128)
    if tk is None:
        tk = min(N, 128 if C <= 256 else 64)
    assert N % tq == 0 and N % tk == 0
    nq, nk = N // tq, N // tk

    apply_final_ln = final_ln is not None
    if final_ln is None:
        gf = jnp.ones((1, C), jnp.float32)
        bf = jnp.zeros((1, C), jnp.float32)
    else:
        gf, bf = final_ln

    kernel = functools.partial(
        _block_kernel, num_heads=num_heads, head_dim=head_dim, scale=scale,
        bias_mul_bf16=bias_mul_bf16, apply_final_ln=apply_final_ln)

    def full_spec(shape):
        # Stationary weights/biases (index map constant over the grid).
        # TODO(synk): single-buffer these via pipeline_mode=pl.Buffered(1) to
        # reclaim the second buffer on VMEM-tight (v7x) configs.
        return pl.BlockSpec(shape, lambda b, qi, ki: (0,) * len(shape))

    q_side = lambda b, qi, ki: (b, qi, 0)   # query-row tiles (constant over ki)
    k_side = lambda b, qi, ki: (b, ki, 0)   # key/value-row tiles

    flops = int(2 * B * N * C * (3 * C)          # qkv projections
                + 4 * B * N * N * C              # QK^T + attn@V
                + 2 * B * N * N * C              # rioe bias multiply-reduce
                + 2 * B * N * C * C              # output projection
                + 4 * B * N * C * Hm)            # MLP fc1 + fc2
    transcendentals = int(B * num_heads * N * N + B * N * Hm)
    bytes_accessed = int(rioe.size * rioe.dtype.itemsize
                         + (2 * x.size + 2 * ripe.size) * x.dtype.itemsize
                         + sum(int(p.size) * p.dtype.itemsize
                               for p in params.values()))
    cost = pl.CostEstimate(flops=flops, transcendentals=transcendentals,
                           bytes_accessed=bytes_accessed)

    return pl.pallas_call(
        kernel,
        out_shape=jax.ShapeDtypeStruct((B, N, C), x.dtype),
        grid=(B, nq, nk),
        in_specs=[
            pl.BlockSpec((None, tq, C), q_side),                   # x   (q rows)
            pl.BlockSpec((None, tk, C), k_side),                   # x   (kv rows)
            pl.BlockSpec((None, tq, C), q_side),                   # ripe (q rows)
            pl.BlockSpec((None, tk, C), k_side),                   # ripe (kv rows)
            # rioe streamed as (tq, tk, C) bf16 tiles; read exactly once.
            # TODO(synk): fp8 (e4m3) storage would halve the dominant HBM term.
            pl.BlockSpec((None, tq, tk, C),
                         lambda b, qi, ki: (b, qi, ki, 0)),
            full_spec((C, C)),      # wq   (bf16)
            full_spec((C, C)),      # wk   (bf16)
            full_spec((C, C)),      # wv   (bf16)
            full_spec((C, C)),      # wproj(bf16)
            full_spec((1, C)),      # bproj
            full_spec((1, C)),      # norm1 gamma
            full_spec((1, C)),      # norm1 beta
            full_spec((1, C)),      # norm2 gamma
            full_spec((1, C)),      # norm2 beta
            full_spec((C, Hm)),     # wfc1 (bf16)
            full_spec((1, Hm)),     # bfc1
            full_spec((Hm, C)),     # wfc2 (bf16)
            full_spec((1, C)),      # bfc2
            full_spec((1, C)),      # final LN gamma (used iff apply_final_ln)
            full_spec((1, C)),      # final LN beta
        ],
        out_specs=pl.BlockSpec((None, tq, C), q_side),
        scratch_shapes=[
            pltpu.VMEM((tq, C), jnp.float32),           # scaled q (lane-dense)
            pltpu.VMEM((tq, num_heads), jnp.float32),   # running max
            pltpu.VMEM((tq, num_heads), jnp.float32),   # running denom
            pltpu.VMEM((tq, C), jnp.float32),           # output acc (lane-dense)
        ],
        compiler_params=pltpu.CompilerParams(
            dimension_semantics=("parallel", "parallel", "arbitrary"),
            vmem_limit_bytes=vmem_limit_bytes),
        cost_estimate=cost,
    )(x, x, ripe, ripe, rioe,
      params["wq"], params["wk"], params["wv"], params["wproj"], params["bproj"],
      params["g1"], params["b1"], params["g2"], params["b2"],
      params["wfc1"], params["bfc1"], params["wfc2"], params["bfc2"],
      gf, bf)


# ----------------------------------------------------------------------------
# Standalone final LayerNorm kernel (only used when fuse_final_ln=False)
# ----------------------------------------------------------------------------
def _ln_kernel(x_ref, g_ref, b_ref, o_ref):
    x = x_ref[...].astype(jnp.float32)
    o_ref[...] = _layernorm(x, g_ref[...], b_ref[...]).astype(o_ref.dtype)


def layernorm_forward(x, g, b, *, tr=None):
    B, N, C = x.shape
    tr = tr or min(N, 512)   # >=512-row tiles approach HBM roofline
    assert N % tr == 0
    return pl.pallas_call(
        _ln_kernel,
        out_shape=jax.ShapeDtypeStruct((B, N, C), x.dtype),
        grid=(B, N // tr),
        in_specs=[pl.BlockSpec((None, tr, C), lambda b, i: (b, i, 0)),
                  pl.BlockSpec((1, C), lambda b, i: (0, 0)),
                  pl.BlockSpec((1, C), lambda b, i: (0, 0))],
        out_specs=pl.BlockSpec((None, tr, C), lambda b, i: (b, i, 0)),
        compiler_params=pltpu.CompilerParams(
            dimension_semantics=("parallel", "parallel")),
    )(x, g, b)


def transformer_encoder_forward(x, ripe, rioe, layers, norm_g, norm_b,
                                *, num_heads, tq=None, tk=None,
                                bias_mul_bf16=False, fuse_final_ln=True):
    n_layers = len(layers)
    for i, params in enumerate(layers):
        is_last = i == n_layers - 1
        fl = (norm_g, norm_b) if (is_last and fuse_final_ln) else None
        x = block_forward(x, ripe, rioe, params, num_heads=num_heads,
                          tq=tq, tk=tk, bias_mul_bf16=bias_mul_bf16,
                          final_ln=fl)
    if not fuse_final_ln:
        x = layernorm_forward(x, norm_g, norm_b)
    return x


# ----------------------------------------------------------------------------
# Pure-JAX reference mirroring the PyTorch TransformerEncoder.forward
# ----------------------------------------------------------------------------
def encoder_reference(x, ripe, rioe, layers, norm_g, norm_b, *, num_heads):
    f32 = jnp.float32
    B, N, C = x.shape
    hd = C // num_heads
    scale = hd ** (-0.5)
    rioe_f = rioe.astype(f32)
    ripe_f = ripe.astype(f32)

    def ln(v, g, b):
        mu = jnp.mean(v, -1, keepdims=True)
        var = jnp.mean((v - mu) ** 2, -1, keepdims=True)
        return (v - mu) / jnp.sqrt(var + LN_EPS) * g + b

    def block(xb, p):
        wq, wk, wv = (p["wq"].astype(f32), p["wk"].astype(f32), p["wv"].astype(f32))
        wproj, wfc1, wfc2 = (p["wproj"].astype(f32), p["wfc1"].astype(f32),
                             p["wfc2"].astype(f32))
        xn = ln(xb, p["g1"][0], p["b1"][0])
        q = (xn @ wq).reshape(B, N, num_heads, hd).transpose(0, 2, 1, 3)
        k = (xn @ wk).reshape(B, N, num_heads, hd).transpose(0, 2, 1, 3)
        v = (xn @ wv).reshape(B, N, num_heads, hd).transpose(0, 2, 1, 3)
        eq = rioe_f.reshape(B, N, N, num_heads, hd).transpose(0, 3, 1, 2, 4)
        bias = jnp.einsum('bhid,bhijd->bhij', q, eq)
        attn = (jnp.einsum('bhid,bhjd->bhij', q, k) + bias) * scale
        attn = jax.nn.softmax(attn, axis=-1)
        out = jnp.einsum('bhij,bhjd->bhid', attn, v)
        out = out.transpose(0, 2, 1, 3).reshape(B, N, C)
        out = out @ wproj + p["bproj"][0]
        x1 = xb + out
        xn2 = ln(x1, p["g2"][0], p["b2"][0])
        h1 = xn2 @ wfc1 + p["bfc1"][0]
        h1 = 0.5 * h1 * (1.0 + jax.lax.erf(h1 * jnp.float32(_INV_SQRT2)))
        h2 = h1 @ wfc2 + p["bfc2"][0]
        return x1 + h2

    for p in layers:
        x = block(x + ripe_f, p)
    return ln(x, norm_g[0], norm_b[0])


def init_layer_params(key, C, hidden):
    ks = jax.random.split(key, 9)
    std = 0.02
    wb = lambda k, s: (std * jax.random.normal(k, s, jnp.float32)).astype(jnp.bfloat16)
    return {
        # matmul weights stored pre-transposed (y = x @ W) and in bf16 (MXU-native)
        "wq": wb(ks[0], (C, C)),
        "wk": wb(ks[1], (C, C)),
        "wv": wb(ks[2], (C, C)),
        "wproj": wb(ks[3], (C, C)),
        "bproj": std * jax.random.normal(ks[4], (1, C), jnp.float32),
        "g1": jnp.ones((1, C), jnp.float32),
        "b1": jnp.zeros((1, C), jnp.float32),
        "g2": jnp.ones((1, C), jnp.float32),
        "b2": jnp.zeros((1, C), jnp.float32),
        "wfc1": wb(ks[5], (C, hidden)),
        "bfc1": std * jax.random.normal(ks[6], (1, hidden), jnp.float32),
        "wfc2": wb(ks[7], (hidden, C)),
        "bfc2": std * jax.random.normal(ks[8], (1, C), jnp.float32),
    }


if __name__ == "__main__":
    B, N, C = 2, 16, 128
    num_heads = 8
    depth = 2
    mlp_hidden = int(C * 4.0)
    tq = tk = 8   # exercises the kv-tiled online-softmax path: grid = (B, 2, 2)

    key = jax.random.PRNGKey(0)
    kx, kpe, kr, kp = jax.random.split(key, 4)
    x = jax.random.normal(kx, (B, N, C), jnp.float32)
    ripe = jax.random.normal(kpe, (B, N, C), jnp.float32)
    # rioe stored bf16 in HBM (dominant bytes term); kernel reads hd-wide
    # slices of each tile exactly once.
    rioe = jax.random.normal(kr, (B, N, N, C), jnp.float32).astype(jnp.bfloat16)

    layers = [init_layer_params(k, C, mlp_hidden)
              for k in jax.random.split(kp, depth)]
    norm_g = jnp.ones((1, C), jnp.float32)
    norm_b = jnp.zeros((1, C), jnp.float32)

    out = transformer_encoder_forward(x, ripe, rioe, layers, norm_g, norm_b,
                                      num_heads=num_heads, tq=tq, tk=tk)
    out = jax.block_until_ready(out)

    ref = encoder_reference(x, ripe, rioe, layers, norm_g, norm_b,
                            num_heads=num_heads)
    assert out.shape == (B, N, C)
    max_err = jnp.max(jnp.abs(out - ref))
    assert jnp.allclose(out, ref, rtol=2e-2, atol=2e-2), \
        f"mismatch vs reference (max |err| = {max_err})"

    print("KERNEL_OK")
</pallas_src>

<mosaic_0001>
module attributes {stable_mosaic.version = 11 : i64} {
  func.func @_block_kernel(%arg0: i32, %arg1: i32, %arg2: i32, %arg3: memref<1x8x128xf32, #tpu.memory_space<vmem>>, %arg4: memref<1x8x128xf32, #tpu.memory_space<vmem>>, %arg5: memref<1x8x128xf32, #tpu.memory_space<vmem>>, %arg6: memref<1x8x128xf32, #tpu.memory_space<vmem>>, %arg7: memref<1x8x8x128xbf16, #tpu.memory_space<vmem>>, %arg8: memref<128x128xbf16, #tpu.memory_space<vmem>>, %arg9: memref<128x128xbf16, #tpu.memory_space<vmem>>, %arg10: memref<128x128xbf16, #tpu.memory_space<vmem>>, %arg11: memref<128x128xbf16, #tpu.memory_space<vmem>>, %arg12: memref<1x128xf32, #tpu.memory_space<vmem>>, %arg13: memref<1x128xf32, #tpu.memory_space<vmem>>, %arg14: memref<1x128xf32, #tpu.memory_space<vmem>>, %arg15: memref<1x128xf32, #tpu.memory_space<vmem>>, %arg16: memref<1x128xf32, #tpu.memory_space<vmem>>, %arg17: memref<128x512xbf16, #tpu.memory_space<vmem>>, %arg18: memref<1x512xf32, #tpu.memory_space<vmem>>, %arg19: memref<512x128xbf16, #tpu.memory_space<vmem>>, %arg20: memref<1x128xf32, #tpu.memory_space<vmem>>, %arg21: memref<1x128xf32, #tpu.memory_space<vmem>>, %arg22: memref<1x128xf32, #tpu.memory_space<vmem>>, %arg23: memref<1x8x128xf32, #tpu.memory_space<vmem>>, %arg24: memref<8x128xf32, #tpu.memory_space<vmem>>, %arg25: memref<8x8xf32, #tpu.memory_space<vmem>>, %arg26: memref<8x8xf32, #tpu.memory_space<vmem>>, %arg27: memref<8x128xf32, #tpu.memory_space<vmem>>) attributes {dimension_semantics = [#tpu.dimension_semantics<parallel>, #tpu.dimension_semantics<parallel>, #tpu.dimension_semantics<arbitrary>], iteration_bounds = array<i64: 2, 2, 2>, scalar_prefetch = 0 : i64, scratch_operands = 4 : i64, tpu.core_type = #tpu.core_type<tc>, window_params = [{transform_indices = @transform_0, window_bounds = array<i64: 1, 8, 128>}, {transform_indices = @transform_1, window_bounds = array<i64: 1, 8, 128>}, {transform_indices = @transform_2, window_bounds = array<i64: 1, 8, 128>}, {transform_indices = @transform_3, window_bounds = array<i64: 1, 8, 128>}, {transform_indices = @transform_4, window_bounds = array<i64: 1, 8, 8, 128>}, {pipeline_mode = #tpu.pipeline_mode<synchronous>, transform_indices = @transform_5, window_bounds = array<i64: 128, 128>}, {pipeline_mode = #tpu.pipeline_mode<synchronous>, transform_indices = @transform_6, window_bounds = array<i64: 128, 128>}, {pipeline_mode = #tpu.pipeline_mode<synchronous>, transform_indices = @transform_7, window_bounds = array<i64: 128, 128>}, {pipeline_mode = #tpu.pipeline_mode<synchronous>, transform_indices = @transform_8, window_bounds = array<i64: 128, 128>}, {pipeline_mode = #tpu.pipeline_mode<synchronous>, transform_indices = @transform_9, window_bounds = array<i64: 1, 128>}, {pipeline_mode = #tpu.pipeline_mode<synchronous>, transform_indices = @transform_10, window_bounds = array<i64: 1, 128>}, {pipeline_mode = #tpu.pipeline_mode<synchronous>, transform_indices = @transform_11, window_bounds = array<i64: 1, 128>}, {pipeline_mode = #tpu.pipeline_mode<synchronous>, transform_indices = @transform_12, window_bounds = array<i64: 1, 128>}, {pipeline_mode = #tpu.pipeline_mode<synchronous>, transform_indices = @transform_13, window_bounds = array<i64: 1, 128>}, {pipeline_mode = #tpu.pipeline_mode<synchronous>, transform_indices = @transform_14, window_bounds = array<i64: 128, 512>}, {pipeline_mode = #tpu.pipeline_mode<synchronous>, transform_indices = @transform_15, window_bounds = array<i64: 1, 512>}, {pipeline_mode = #tpu.pipeline_mode<synchronous>, transform_indices = @transform_16, window_bounds = array<i64: 512, 128>}, {pipeline_mode = #tpu.pipeline_mode<synchronous>, transform_indices = @transform_17, window_bounds = array<i64: 1, 128>}, {pipeline_mode = #tpu.pipeline_mode<synchronous>, transform_indices = @transform_18, window_bounds = array<i64: 1, 128>}, {pipeline_mode = #tpu.pipeline_mode<synchronous>, transform_indices = @transform_19, window_bounds = array<i64: 1, 128>}, {transform_indices = @transform_20, window_bounds = array<i64: 1, 8, 128>}]} {
    %c0_i32 = arith.constant 0 : i32
    %0 = arith.cmpi eq, %arg2, %c0_i32 : i32
    %1 = arith.extui %0 : i1 to i32
    %c0_i32_0 = arith.constant 0 : i32
    %2 = arith.cmpi ne, %1, %c0_i32_0 : i32
    scf.if %2 {
      %c0_191 = arith.constant 0 : index
      %c0_192 = arith.constant 0 : index
      %c0_193 = arith.constant 0 : index
      %344 = vector.load %arg3[%c0_191, %c0_192, %c0_193] : memref<1x8x128xf32, #tpu.memory_space<vmem>>, vector<1x8x128xf32>
      %345 = vector.shape_cast %344 : vector<1x8x128xf32> to vector<8x128xf32>
      %c0_194 = arith.constant 0 : index
      %c0_195 = arith.constant 0 : index
      %c0_196 = arith.constant 0 : index
      %346 = vector.load %arg5[%c0_194, %c0_195, %c0_196] : memref<1x8x128xf32, #tpu.memory_space<vmem>>, vector<1x8x128xf32>
      %347 = vector.shape_cast %346 : vector<1x8x128xf32> to vector<8x128xf32>
      %348 = arith.addf %345, %347 : vector<8x128xf32>
      %c0_197 = arith.constant 0 : index
      %c0_198 = arith.constant 0 : index
      %349 = vector.load %arg13[%c0_197, %c0_198] : memref<1x128xf32, #tpu.memory_space<vmem>>, vector<1x128xf32>
      %c0_199 = arith.constant 0 : index
      %c0_200 = arith.constant 0 : index
      %350 = vector.load %arg14[%c0_199, %c0_200] : memref<1x128xf32, #tpu.memory_space<vmem>>, vector<1x128xf32>
      %cst_201 = arith.constant dense<0.000000e+00> : vector<8xf32>
      %351 = vector.multi_reduction <add>, %348, %cst_201 [1] : vector<8x128xf32> to vector<8xf32>
      %352 = vector.shape_cast %351 : vector<8xf32> to vector<8x1xf32>
      %cst_202 = arith.constant 1.280000e+02 : f32
      %353 = vector.broadcast %cst_202 : f32 to vector<8x1xf32>
      %354 = arith.divf %352, %353 : vector<8x1xf32>
      %355 = vector.broadcast %354 : vector<8x1xf32> to vector<8x128xf32>
      %356 = arith.subf %348, %355 : vector<8x128xf32>
      %357 = arith.mulf %356, %356 : vector<8x128xf32>
      %cst_203 = arith.constant dense<0.000000e+00> : vector<8xf32>
      %358 = vector.multi_reduction <add>, %357, %cst_203 [1] : vector<8x128xf32> to vector<8xf32>
      %359 = vector.shape_cast %358 : vector<8xf32> to vector<8x1xf32>
      %cst_204 = arith.constant 1.280000e+02 : f32
      %360 = vector.broadcast %cst_204 : f32 to vector<8x1xf32>
      %361 = arith.divf %359, %360 : vector<8x1xf32>
      %362 = vector.broadcast %354 : vector<8x1xf32> to vector<8x128xf32>
      %363 = arith.subf %348, %362 : vector<8x128xf32>
      %cst_205 = arith.constant 9.99999974E-6 : f32
      %364 = vector.broadcast %cst_205 : f32 to vector<8x1xf32>
      %365 = arith.addf %361, %364 : vector<8x1xf32>
      %366 = math.rsqrt %365 : vector<8x1xf32>
      %367 = vector.broadcast %366 : vector<8x1xf32> to vector<8x128xf32>
      %368 = arith.mulf %363, %367 : vector<8x128xf32>
      %369 = vector.broadcast %349 : vector<1x128xf32> to vector<8x128xf32>
      %370 = arith.mulf %368, %369 : vector<8x128xf32>
      %371 = vector.broadcast %350 : vector<1x128xf32> to vector<8x128xf32>
      %372 = arith.addf %370, %371 : vector<8x128xf32>
      %373 = arith.truncf %372 : vector<8x128xf32> to vector<8x128xbf16>
      %c0_206 = arith.constant 0 : index
      %c0_207 = arith.constant 0 : index
      %374 = vector.load %arg8[%c0_206, %c0_207] : memref<128x128xbf16, #tpu.memory_space<vmem>>, vector<128x128xbf16>
      %cst_208 = arith.constant dense<0.000000e+00> : vector<8x128xf32>
      %375 = tpu.matmul %373, %374, %cst_208 {dimension_numbers = #tpu.dot_dimension_numbers<[1], [0], [0], [1], [0, 0, 1, 1], [], []>} : vector<8x128xbf16>, vector<128x128xbf16>, vector<8x128xf32> -> vector<8x128xf32>
      %cst_209 = arith.constant 2.500000e-01 : f32
      %376 = vector.broadcast %cst_209 : f32 to vector<8x128xf32>
      %377 = arith.mulf %375, %376 : vector<8x128xf32>
      %c0_210 = arith.constant 0 : index
      %c0_211 = arith.constant 0 : index
      %378 = vector.load %arg24[%c0_210, %c0_211] : memref<8x128xf32, #tpu.memory_space<vmem>>, vector<8x128xf32>
      tpu.vector_store %arg24[%c0_210, %c0_211], %377 {strides = array<i32>} : memref<8x128xf32, #tpu.memory_space<vmem>>, vector<8x128xf32>,
      %cst_212 = arith.constant 0xFF800000 : f32
      %379 = vector.broadcast %cst_212 : f32 to vector<8x8xf32>
      %c0_213 = arith.constant 0 : index
      %c0_214 = arith.constant 0 : index
      %380 = vector.load %arg25[%c0_213, %c0_214] : memref<8x8xf32, #tpu.memory_space<vmem>>, vector<8x8xf32>
      tpu.vector_store %arg25[%c0_213, %c0_214], %379 {strides = array<i32>} : memref<8x8xf32, #tpu.memory_space<vmem>>, vector<8x8xf32>,
      %cst_215 = arith.constant 0.000000e+00 : f32
      %381 = vector.broadcast %cst_215 : f32 to vector<8x8xf32>
      %c0_216 = arith.constant 0 : index
      %c0_217 = arith.constant 0 : index
      %382 = vector.load %arg26[%c0_216, %c0_217] : memref<8x8xf32, #tpu.memory_space<vmem>>, vector<8x8xf32>
      tpu.vector_store %arg26[%c0_216, %c0_217], %381 {strides = array<i32>} : memref<8x8xf32, #tpu.memory_space<vmem>>, vector<8x8xf32>,
      %cst_218 = arith.constant 0.000000e+00 : f32
      %383 = vector.broadcast %cst_218 : f32 to vector<8x128xf32>
      %c0_219 = arith.constant 0 : index
      %c0_220 = arith.constant 0 : index
      %384 = vector.load %arg27[%c0_219, %c0_220] : memref<8x128xf32, #tpu.memory_space<vmem>>, vector<8x128xf32>
      tpu.vector_store %arg27[%c0_219, %c0_220], %383 {strides = array<i32>} : memref<8x128xf32, #tpu.memory_space<vmem>>, vector<8x128xf32>,
    } else {
    }
    %c0 = arith.constant 0 : index
    %c0_1 = arith.constant 0 : index
    %c0_2 = arith.constant 0 : index
    %3 = vector.load %arg4[%c0, %c0_1, %c0_2] : memref<1x8x128xf32, #tpu.memory_space<vmem>>, vector<1x8x128xf32>
    %4 = vector.shape_cast %3 : vector<1x8x128xf32> to vector<8x128xf32>
    %c0_3 = arith.constant 0 : index
    %c0_4 = arith.constant 0 : index
    %c0_5 = arith.constant 0 : index
    %5 = vector.load %arg6[%c0_3, %c0_4, %c0_5] : memref<1x8x128xf32, #tpu.memory_space<vmem>>, vector<1x8x128xf32>
    %6 = vector.shape_cast %5 : vector<1x8x128xf32> to vector<8x128xf32>
    %7 = arith.addf %4, %6 : vector<8x128xf32>
    %c0_6 = arith.constant 0 : index
    %c0_7 = arith.constant 0 : index
    %8 = vector.load %arg13[%c0_6, %c0_7] : memref<1x128xf32, #tpu.memory_space<vmem>>, vector<1x128xf32>
    %c0_8 = arith.constant 0 : index
    %c0_9 = arith.constant 0 : index
    %9 = vector.load %arg14[%c0_8, %c0_9] : memref<1x128xf32, #tpu.memory_space<vmem>>, vector<1x128xf32>
    %cst = arith.constant dense<0.000000e+00> : vector<8xf32>
    %10 = vector.multi_reduction <add>, %7, %cst [1] : vector<8x128xf32> to vector<8xf32>
    %11 = vector.shape_cast %10 : vector<8xf32> to vector<8x1xf32>
    %cst_10 = arith.constant 1.280000e+02 : f32
    %12 = vector.broadcast %cst_10 : f32 to vector<8x1xf32>
    %13 = arith.divf %11, %12 : vector<8x1xf32>
    %14 = vector.broadcast %13 : vector<8x1xf32> to vector<8x128xf32>
    %15 = arith.subf %7, %14 : vector<8x128xf32>
    %16 = arith.mulf %15, %15 : vector<8x128xf32>
    %cst_11 = arith.constant dense<0.000000e+00> : vector<8xf32>
    %17 = vector.multi_reduction <add>, %16, %cst_11 [1] : vector<8x128xf32> to vector<8xf32>
    %18 = vector.shape_cast %17 : vector<8xf32> to vector<8x1xf32>
    %cst_12 = arith.constant 1.280000e+02 : f32
    %19 = vector.broadcast %cst_12 : f32 to vector<8x1xf32>
    %20 = arith.divf %18, %19 : vector<8x1xf32>
    %21 = vector.broadcast %13 : vector<8x1xf32> to vector<8x128xf32>
    %22 = arith.subf %7, %21 : vector<8x128xf32>
    %cst_13 = arith.constant 9.99999974E-6 : f32
    %23 = vector.broadcast %cst_13 : f32 to vector<8x1xf32>
    %24 = arith.addf %20, %23 : vector<8x1xf32>
    %25 = math.rsqrt %24 : vector<8x1xf32>
    %26 = vector.broadcast %25 : vector<8x1xf32> to vector<8x128xf32>
    %27 = arith.mulf %22, %26 : vector<8x128xf32>
    %28 = vector.broadcast %8 : vector<1x128xf32> to vector<8x128xf32>
    %29 = arith.mulf %27, %28 : vector<8x128xf32>
    %30 = vector.broadcast %9 : vector<1x128xf32> to vector<8x128xf32>
    %31 = arith.addf %29, %30 : vector<8x128xf32>
    %32 = arith.truncf %31 : vector<8x128xf32> to vector<8x128xbf16>
    %c0_14 = arith.constant 0 : index
    %c0_15 = arith.constant 0 : index
    %33 = vector.load %arg9[%c0_14, %c0_15] : memref<128x128xbf16, #tpu.memory_space<vmem>>, vector<128x128xbf16>
    %cst_16 = arith.constant dense<0.000000e+00> : vector<8x128xf32>
    %34 = tpu.matmul %32, %33, %cst_16 {dimension_numbers = #tpu.dot_dimension_numbers<[1], [0], [0], [1], [0, 0, 1, 1], [], []>} : vector<8x128xbf16>, vector<128x128xbf16>, vector<8x128xf32> -> vector<8x128xf32>
    %c0_17 = arith.constant 0 : index
    %c0_18 = arith.constant 0 : index
    %35 = vector.load %arg10[%c0_17, %c0_18] : memref<128x128xbf16, #tpu.memory_space<vmem>>, vector<128x128xbf16>
    %cst_19 = arith.constant dense<0.000000e+00> : vector<8x128xf32>
    %36 = tpu.matmul %32, %35, %cst_19 {dimension_numbers = #tpu.dot_dimension_numbers<[1], [0], [0], [1], [0, 0, 1, 1], [], []>} : vector<8x128xbf16>, vector<128x128xbf16>, vector<8x128xf32> -> vector<8x128xf32>
    %c0_20 = arith.constant 0 : index
    %c0_21 = arith.constant 0 : index
    %37 = vector.load %arg24[%c0_20, %c0_21] : memref<8x128xf32, #tpu.memory_space<vmem>>, vector<8x16xf32>
    %38 = vector.extract_strided_slice %34 {offsets = [0, 0], sizes = [8, 16], strides = [1, 1]} : vector<8x128xf32> to vector<8x16xf32>
    %39 = vector.extract_strided_slice %36 {offsets = [0, 0], sizes = [8, 16], strides = [1, 1]} : vector<8x128xf32> to vector<8x16xf32>
    %c0_22 = arith.constant 0 : index
    %c0_23 = arith.constant 0 : index
    %c0_24 = arith.constant 0 : index
    %c0_25 = arith.constant 0 : index
    %40 = vector.load %arg7[%c0_22, %c0_23, %c0_24, %c0_25] : memref<1x8x8x128xbf16, #tpu.memory_space<vmem>>, vector<1x8x8x16xbf16>
    %41 = vector.shape_cast %40 : vector<1x8x8x16xbf16> to vector<8x8x16xbf16>
    %42 = arith.extf %41 : vector<8x8x16xbf16> to vector<8x8x16xf32>
    %43 = vector.shape_cast %37 : vector<8x16xf32> to vector<8x1x16xf32>
    %44 = vector.broadcast %43 : vector<8x1x16xf32> to vector<8x8x16xf32>
    %45 = arith.mulf %42, %44 : vector<8x8x16xf32>
    %cst_26 = arith.constant dense<0.000000e+00> : vector<8x8xf32>
    %46 = vector.multi_reduction <add>, %45, %cst_26 [2] : vector<8x8x16xf32> to vector<8x8xf32>
    %47 = arith.truncf %37 : vector<8x16xf32> to vector<8x16xbf16>
    %48 = arith.truncf %38 : vector<8x16xf32> to vector<8x16xbf16>
    %cst_27 = arith.constant dense<0.000000e+00> : vector<8x8xf32>
    %49 = tpu.matmul %47, %48, %cst_27 {dimension_numbers = #tpu.dot_dimension_numbers<[1], [1], [0], [0], [0, 0, 1, 0], [], []>} : vector<8x16xbf16>, vector<8x16xbf16>, vector<8x8xf32> -> vector<8x8xf32>
    %50 = arith.addf %49, %46 : vector<8x8xf32>
    %c0_28 = arith.constant 0 : index
    %c0_29 = arith.constant 0 : index
    %51 = vector.load %arg25[%c0_28, %c0_29] : memref<8x8xf32, #tpu.memory_space<vmem>>, vector<8x1xf32>
    %cst_30 = arith.constant dense<0xFF800000> : vector<8xf32>
    %52 = vector.multi_reduction <maximumf>, %50, %cst_30 [1] : vector<8x8xf32> to vector<8xf32>
    %53 = vector.shape_cast %52 : vector<8xf32> to vector<8x1xf32>
    %54 = arith.maximumf %51, %53 : vector<8x1xf32>
    %55 = arith.subf %51, %54 : vector<8x1xf32>
    %56 = math.exp %55 : vector<8x1xf32>
    %57 = vector.broadcast %54 : vector<8x1xf32> to vector<8x8xf32>
    %58 = arith.subf %50, %57 : vector<8x8xf32>
    %59 = math.exp %58 : vector<8x8xf32>
    %c0_31 = arith.constant 0 : index
    %c0_32 = arith.constant 0 : index
    %60 = vector.load %arg26[%c0_31, %c0_32] : memref<8x8xf32, #tpu.memory_space<vmem>>, vector<8x1xf32>
    %61 = arith.mulf %56, %60 : vector<8x1xf32>
    %cst_33 = arith.constant dense<0.000000e+00> : vector<8xf32>
    %62 = vector.multi_reduction <add>, %59, %cst_33 [1] : vector<8x8xf32> to vector<8xf32>
    %63 = vector.shape_cast %62 : vector<8xf32> to vector<8x1xf32>
    %64 = arith.addf %61, %63 : vector<8x1xf32>
    %c0_34 = arith.constant 0 : index
    %c0_35 = arith.constant 0 : index
    %65 = vector.load %arg26[%c0_34, %c0_35] : memref<8x8xf32, #tpu.memory_space<vmem>>, vector<8x1xf32>
    tpu.vector_store %arg26[%c0_34, %c0_35], %64 {strides = array<i32>} : memref<8x8xf32, #tpu.memory_space<vmem>>, vector<8x1xf32>,
    %c0_36 = arith.constant 0 : index
    %c0_37 = arith.constant 0 : index
    %66 = vector.load %arg25[%c0_36, %c0_37] : memref<8x8xf32, #tpu.memory_space<vmem>>, vector<8x1xf32>
    tpu.vector_store %arg25[%c0_36, %c0_37], %54 {strides = array<i32>} : memref<8x8xf32, #tpu.memory_space<vmem>>, vector<8x1xf32>,
    %c0_38 = arith.constant 0 : index
    %c0_39 = arith.constant 0 : index
    %67 = vector.load %arg27[%c0_38, %c0_39] : memref<8x128xf32, #tpu.memory_space<vmem>>, vector<8x16xf32>
    %68 = vector.broadcast %56 : vector<8x1xf32> to vector<8x16xf32>
    %69 = arith.mulf %68, %67 : vector<8x16xf32>
    %70 = arith.truncf %59 : vector<8x8xf32> to vector<8x8xbf16>
    %71 = arith.truncf %39 : vector<8x16xf32> to vector<8x16xbf16>
    %cst_40 = arith.constant dense<0.000000e+00> : vector<8x16xf32>
    %72 = tpu.matmul %70, %71, %cst_40 {dimension_numbers = #tpu.dot_dimension_numbers<[1], [0], [0], [1], [0, 0, 1, 1], [], []>} : vector<8x8xbf16>, vector<8x16xbf16>, vector<8x16xf32> -> vector<8x16xf32>
    %73 = arith.addf %69, %72 : vector<8x16xf32>
    %c0_41 = arith.constant 0 : index
    %c0_42 = arith.constant 0 : index
    %74 = vector.load %arg27[%c0_41, %c0_42] : memref<8x128xf32, #tpu.memory_space<vmem>>, vector<8x16xf32>
    tpu.vector_store %arg27[%c0_41, %c0_42], %73 {strides = array<i32>} : memref<8x128xf32, #tpu.memory_space<vmem>>, vector<8x16xf32>,
    %c0_43 = arith.constant 0 : index
    %c16 = arith.constant 16 : index
    %75 = vector.load %arg24[%c0_43, %c16] : memref<8x128xf32, #tpu.memory_space<vmem>>, vector<8x16xf32>
    %76 = vector.extract_strided_slice %34 {offsets = [0, 16], sizes = [8, 16], strides = [1, 1]} : vector<8x128xf32> to vector<8x16xf32>
    %77 = vector.extract_strided_slice %36 {offsets = [0, 16], sizes = [8, 16], strides = [1, 1]} : vector<8x128xf32> to vector<8x16xf32>
    %c0_44 = arith.constant 0 : index
    %c0_45 = arith.constant 0 : index
    %c0_46 = arith.constant 0 : index
    %c16_47 = arith.constant 16 : index
    %78 = vector.load %arg7[%c0_44, %c0_45, %c0_46, %c16_47] : memref<1x8x8x128xbf16, #tpu.memory_space<vmem>>, vector<1x8x8x16xbf16>
    %79 = vector.shape_cast %78 : vector<1x8x8x16xbf16> to vector<8x8x16xbf16>
    %80 = arith.extf %79 : vector<8x8x16xbf16> to vector<8x8x16xf32>
    %81 = vector.shape_cast %75 : vector<8x16xf32> to vector<8x1x16xf32>
    %82 = vector.broadcast %81 : vector<8x1x16xf32> to vector<8x8x16xf32>
    %83 = arith.mulf %80, %82 : vector<8x8x16xf32>
    %cst_48 = arith.constant dense<0.000000e+00> : vector<8x8xf32>
    %84 = vector.multi_reduction <add>, %83, %cst_48 [2] : vector<8x8x16xf32> to vector<8x8xf32>
    %85 = arith.truncf %75 : vector<8x16xf32> to vector<8x16xbf16>
    %86 = arith.truncf %76 : vector<8x16xf32> to vector<8x16xbf16>
    %cst_49 = arith.constant dense<0.000000e+00> : vector<8x8xf32>
    %87 = tpu.matmul %85, %86, %cst_49 {dimension_numbers = #tpu.dot_dimension_numbers<[1], [1], [0], [0], [0, 0, 1, 0], [], []>} : vector<8x16xbf16>, vector<8x16xbf16>, vector<8x8xf32> -> vector<8x8xf32>
    %88 = arith.addf %87, %84 : vector<8x8xf32>
    %c0_50 = arith.constant 0 : index
    %c1 = arith.constant 1 : index
    %89 = vector.load %arg25[%c0_50, %c1] : memref<8x8xf32, #tpu.memory_space<vmem>>, vector<8x1xf32>
    %cst_51 = arith.constant dense<0xFF800000> : vector<8xf32>
    %90 = vector.multi_reduction <maximumf>, %88, %cst_51 [1] : vector<8x8xf32> to vector<8xf32>
    %91 = vector.shape_cast %90 : vector<8xf32> to vector<8x1xf32>
    %92 = arith.maximumf %89, %91 : vector<8x1xf32>
    %93 = arith.subf %89, %92 : vector<8x1xf32>
    %94 = math.exp %93 : vector<8x1xf32>
    %95 = vector.broadcast %92 : vector<8x1xf32> to vector<8x8xf32>
    %96 = arith.subf %88, %95 : vector<8x8xf32>
    %97 = math.exp %96 : vector<8x8xf32>
    %c0_52 = arith.constant 0 : index
    %c1_53 = arith.constant 1 : index
    %98 = vector.load %arg26[%c0_52, %c1_53] : memref<8x8xf32, #tpu.memory_space<vmem>>, vector<8x1xf32>
    %99 = arith.mulf %94, %98 : vector<8x1xf32>
    %cst_54 = arith.constant dense<0.000000e+00> : vector<8xf32>
    %100 = vector.multi_reduction <add>, %97, %cst_54 [1] : vector<8x8xf32> to vector<8xf32>
    %101 = vector.shape_cast %100 : vector<8xf32> to vector<8x1xf32>
    %102 = arith.addf %99, %101 : vector<8x1xf32>
    %c0_55 = arith.constant 0 : index
    %c1_56 = arith.constant 1 : index
    %103 = vector.load %arg26[%c0_55, %c1_56] : memref<8x8xf32, #tpu.memory_space<vmem>>, vector<8x1xf32>
    tpu.vector_store %arg26[%c0_55, %c1_56], %102 {strides = array<i32>} : memref<8x8xf32, #tpu.memory_space<vmem>>, vector<8x1xf32>,
    %c0_57 = arith.constant 0 : index
    %c1_58 = arith.constant 1 : index
    %104 = vector.load %arg25[%c0_57, %c1_58] : memref<8x8xf32, #tpu.memory_space<vmem>>, vector<8x1xf32>
    tpu.vector_store %arg25[%c0_57, %c1_58], %92 {strides = array<i32>} : memref<8x8xf32, #tpu.memory_space<vmem>>, vector<8x1xf32>,
    %c0_59 = arith.constant 0 : index
    %c16_60 = arith.constant 16 : index
    %105 = vector.load %arg27[%c0_59, %c16_60] : memref<8x128xf32, #tpu.memory_space<vmem>>, vector<8x16xf32>
    %106 = vector.broadcast %94 : vector<8x1xf32> to vector<8x16xf32>
    %107 = arith.mulf %106, %105 : vector<8x16xf32>
    %108 = arith.truncf %97 : vector<8x8xf32> to vector<8x8xbf16>
    %109 = arith.truncf %77 : vector<8x16xf32> to vector<8x16xbf16>
    %cst_61 = arith.constant dense<0.000000e+00> : vector<8x16xf32>
    %110 = tpu.matmul %108, %109, %cst_61 {dimension_numbers = #tpu.dot_dimension_numbers<[1], [0], [0], [1], [0, 0, 1, 1], [], []>} : vector<8x8xbf16>, vector<8x16xbf16>, vector<8x16xf32> -> vector<8x16xf32>
    %111 = arith.addf %107, %110 : vector<8x16xf32>
    %c0_62 = arith.constant 0 : index
    %c16_63 = arith.constant 16 : index
    %112 = vector.load %arg27[%c0_62, %c16_63] : memref<8x128xf32, #tpu.memory_space<vmem>>, vector<8x16xf32>
    tpu.vector_store %arg27[%c0_62, %c16_63], %111 {strides = array<i32>} : memref<8x128xf32, #tpu.memory_space<vmem>>, vector<8x16xf32>,
    %c0_64 = arith.constant 0 : index
    %c32 = arith.constant 32 : index
    %113 = vector.load %arg24[%c0_64, %c32] : memref<8x128xf32, #tpu.memory_space<vmem>>, vector<8x16xf32>
    %114 = vector.extract_strided_slice %34 {offsets = [0, 32], sizes = [8, 16], strides = [1, 1]} : vector<8x128xf32> to vector<8x16xf32>
    %115 = vector.extract_strided_slice %36 {offsets = [0, 32], sizes = [8, 16], strides = [1, 1]} : vector<8x128xf32> to vector<8x16xf32>
    %c0_65 = arith.constant 0 : index
    %c0_66 = arith.constant 0 : index
    %c0_67 = arith.constant 0 : index
    %c32_68 = arith.constant 32 : index
    %116 = vector.load %arg7[%c0_65, %c0_66, %c0_67, %c32_68] : memref<1x8x8x128xbf16, #tpu.memory_space<vmem>>, vector<1x8x8x16xbf16>
    %117 = vector.shape_cast %116 : vector<1x8x8x16xbf16> to vector<8x8x16xbf16>
    %118 = arith.extf %117 : vector<8x8x16xbf16> to vector<8x8x16xf32>
    %119 = vector.shape_cast %113 : vector<8x16xf32> to vector<8x1x16xf32>
    %120 = vector.broadcast %119 : vector<8x1x16xf32> to vector<8x8x16xf32>
    %121 = arith.mulf %118, %120 : vector<8x8x16xf32>
    %cst_69 = arith.constant dense<0.000000e+00> : vector<8x8xf32>
    %122 = vector.multi_reduction <add>, %121, %cst_69 [2] : vector<8x8x16xf32> to vector<8x8xf32>
    %123 = arith.truncf %113 : vector<8x16xf32> to vector<8x16xbf16>
    %124 = arith.truncf %114 : vector<8x16xf32> to vector<8x16xbf16>
    %cst_70 = arith.constant dense<0.000000e+00> : vector<8x8xf32>
    %125 = tpu.matmul %123, %124, %cst_70 {dimension_numbers = #tpu.dot_dimension_numbers<[1], [1], [0], [0], [0, 0, 1, 0], [], []>} : vector<8x16xbf16>, vector<8x16xbf16>, vector<8x8xf32> -> vector<8x8xf32>
    %126 = arith.addf %125, %122 : vector<8x8xf32>
    %c0_71 = arith.constant 0 : index
    %c2 = arith.constant 2 : index
    %127 = vector.load %arg25[%c0_71, %c2] : memref<8x8xf32, #tpu.memory_space<vmem>>, vector<8x1xf32>
    %cst_72 = arith.constant dense<0xFF800000> : vector<8xf32>
    %128 = vector.multi_reduction <maximumf>, %126, %cst_72 [1] : vector<8x8xf32> to vector<8xf32>
    %129 = vector.shape_cast %128 : vector<8xf32> to vector<8x1xf32>
    %130 = arith.maximumf %127, %129 : vector<8x1xf32>
    %131 = arith.subf %127, %130 : vector<8x1xf32>
    %132 = math.exp %131 : vector<8x1xf32>
    %133 = vector.broadcast %130 : vector<8x1xf32> to vector<8x8xf32>
    %134 = arith.subf %126, %133 : vector<8x8xf32>
    %135 = math.exp %134 : vector<8x8xf32>
    %c0_73 = arith.constant 0 : index
    %c2_74 = arith.constant 2 : index
    %136 = vector.load %arg26[%c0_73, %c2_74] : memref<8x8xf32, #tpu.memory_space<vmem>>, vector<8x1xf32>
    %137 = arith.mulf %132, %136 : vector<8x1xf32>
    %cst_75 = arith.constant dense<0.000000e+00> : vector<8xf32>
    %138 = vector.multi_reduction <add>, %135, %cst_75 [1] : vector<8x8xf32> to vector<8xf32>
    %139 = vector.shape_cast %138 : vector<8xf32> to vector<8x1xf32>
    %140 = arith.addf %137, %139 : vector<8x1xf32>
    %c0_76 = arith.constant 0 : index
    %c2_77 = arith.constant 2 : index
    %141 = vector.load %arg26[%c0_76, %c2_77] : memref<8x8xf32, #tpu.memory_space<vmem>>, vector<8x1xf32>
    tpu.vector_store %arg26[%c0_76, %c2_77], %140 {strides = array<i32>} : memref<8x8xf32, #tpu.memory_space<vmem>>, vector<8x1xf32>,
    %c0_78 = arith.constant 0 : index
    %c2_79 = arith.constant 2 : index
    %142 = vector.load %arg25[%c0_78, %c2_79] : memref<8x8xf32, #tpu.memory_space<vmem>>, vector<8x1xf32>
    tpu.vector_store %arg25[%c0_78, %c2_79], %130 {strides = array<i32>} : memref<8x8xf32, #tpu.memory_space<vmem>>, vector<8x1xf32>,
    %c0_80 = arith.constant 0 : index
    %c32_81 = arith.constant 32 : index
    %143 = vector.load %arg27[%c0_80, %c32_81] : memref<8x128xf32, #tpu.memory_space<vmem>>, vector<8x16xf32>
    %144 = vector.broadcast %132 : vector<8x1xf32> to vector<8x16xf32>
    %145 = arith.mulf %144, %143 : vector<8x16xf32>
    %146 = arith.truncf %135 : vector<8x8xf32> to vector<8x8xbf16>
    %147 = arith.truncf %115 : vector<8x16xf32> to vector<8x16xbf16>
    %cst_82 = arith.constant dense<0.000000e+00> : vector<8x16xf32>
    %148 = tpu.matmul %146, %147, %cst_82 {dimension_numbers = #tpu.dot_dimension_numbers<[1], [0], [0], [1], [0, 0, 1, 1], [], []>} : vector<8x8xbf16>, vector<8x16xbf16>, vector<8x16xf32> -> vector<8x16xf32>
    %149 = arith.addf %145, %148 : vector<8x16xf32>
    %c0_83 = arith.constant 0 : index
    %c32_84 = arith.constant 32 : index
    %150 = vector.load %arg27[%c0_83, %c32_84] : memref<8x128xf32, #tpu.memory_space<vmem>>, vector<8x16xf32>
    tpu.vector_store %arg27[%c0_83, %c32_84], %149 {strides = array<i32>} : memref<8x128xf32, #tpu.memory_space<vmem>>, vector<8x16xf32>,
    %c0_85 = arith.constant 0 : index
    %c48 = arith.constant 48 : index
    %151 = vector.load %arg24[%c0_85, %c48] : memref<8x128xf32, #tpu.memory_space<vmem>>, vector<8x16xf32>
    %152 = vector.extract_strided_slice %34 {offsets = [0, 48], sizes = [8, 16], strides = [1, 1]} : vector<8x128xf32> to vector<8x16xf32>
    %153 = vector.extract_strided_slice %36 {offsets = [0, 48], sizes = [8, 16], strides = [1, 1]} : vector<8x128xf32> to vector<8x16xf32>
    %c0_86 = arith.constant 0 : index
    %c0_87 = arith.constant 0 : index
    %c0_88 = arith.constant 0 : index
    %c48_89 = arith.constant 48 : index
    %154 = vector.load %arg7[%c0_86, %c0_87, %c0_88, %c48_89] : memref<1x8x8x128xbf16, #tpu.memory_space<vmem>>, vector<1x8x8x16xbf16>
    %155 = vector.shape_cast %154 : vector<1x8x8x16xbf16> to vector<8x8x16xbf16>
    %156 = arith.extf %155 : vector<8x8x16xbf16> to vector<8x8x16xf32>
    %157 = vector.shape_cast %151 : vector<8x16xf32> to vector<8x1x16xf32>
    %158 = vector.broadcast %157 : vector<8x1x16xf32> to vector<8x8x16xf32>
    %159 = arith.mulf %156, %158 : vector<8x8x16xf32>
    %cst_90 = arith.constant dense<0.000000e+00> : vector<8x8xf32>
    %160 = vector.multi_reduction <add>, %159, %cst_90 [2] : vector<8x8x16xf32> to vector<8x8xf32>
    %161 = arith.truncf %151 : vector<8x16xf32> to vector<8x16xbf16>
    %162 = arith.truncf %152 : vector<8x16xf32> to vector<8x16xbf16>
    %cst_91 = arith.constant dense<0.000000e+00> : vector<8x8xf32>
    %163 = tpu.matmul %161, %162, %cst_91 {dimension_numbers = #tpu.dot_dimension_numbers<[1], [1], [0], [0], [0, 0, 1, 0], [], []>} : vector<8x16xbf16>, vector<8x16xbf16>, vector<8x8xf32> -> vector<8x8xf32>
    %164 = arith.addf %163, %160 : vector<8x8xf32>
    %c0_92 = arith.constant 0 : index
    %c3 = arith.constant 3 : index
    %165 = vector.load %arg25[%c0_92, %c3] : memref<8x8xf32, #tpu.memory_space<vmem>>, vector<8x1xf32>
    %cst_93 = arith.constant dense<0xFF800000> : vector<8xf32>
    %166 = vector.multi_reduction <maximumf>, %164, %cst_93 [1] : vector<8x8xf32> to vector<8xf32>
    %167 = vector.shape_cast %166 : vector<8xf32> to vector<8x1xf32>
    %168 = arith.maximumf %165, %167 : vector<8x1xf32>
    %169 = arith.subf %165, %168 : vector<8x1xf32>
    %170 = math.exp %169 : vector<8x1xf32>
    %171 = vector.broadcast %168 : vector<8x1xf32> to vector<8x8xf32>
    %172 = arith.subf %164, %171 : vector<8x8xf32>
    %173 = math.exp %172 : vector<8x8xf32>
    %c0_94 = arith.constant 0 : index
    %c3_95 = arith.constant 3 : index
    %174 = vector.load %arg26[%c0_94, %c3_95] : memref<8x8xf32, #tpu.memory_space<vmem>>, vector<8x1xf32>
    %175 = arith.mulf %170, %174 : vector<8x1xf32>
    %cst_96 = arith.constant dense<0.000000e+00> : vector<8xf32>
    %176 = vector.multi_reduction <add>, %173, %cst_96 [1] : vector<8x8xf32> to vector<8xf32>
    %177 = vector.shape_cast %176 : vector<8xf32> to vector<8x1xf32>
    %178 = arith.addf %175, %177 : vector<8x1xf32>
    %c0_97 = arith.constant 0 : index
    %c3_98 = arith.constant 3 : index
    %179 = vector.load %arg26[%c0_97, %c3_98] : memref<8x8xf32, #tpu.memory_space<vmem>>, vector<8x1xf32>
    tpu.vector_store %arg26[%c0_97, %c3_98], %178 {strides = array<i32>} : memref<8x8xf32, #tpu.memory_space<vmem>>, vector<8x1xf32>,
    %c0_99 = arith.constant 0 : index
    %c3_100 = arith.constant 3 : index
    %180 = vector.load %arg25[%c0_99, %c3_100] : memref<8x8xf32, #tpu.memory_space<vmem>>, vector<8x1xf32>
    tpu.vector_store %arg25[%c0_99, %c3_100], %168 {strides = array<i32>} : memref<8x8xf32, #tpu.memory_space<vmem>>, vector<8x1xf32>,
    %c0_101 = arith.constant 0 : index
    %c48_102 = arith.constant 48 : index
    %181 = vector.load %arg27[%c0_101, %c48_102] : memref<8x128xf32, #tpu.memory_space<vmem>>, vector<8x16xf32>
    %182 = vector.broadcast %170 : vector<8x1xf32> to vector<8x16xf32>
    %183 = arith.mulf %182, %181 : vector<8x16xf32>
    %184 = arith.truncf %173 : vector<8x8xf32> to vector<8x8xbf16>
    %185 = arith.truncf %153 : vector<8x16xf32> to vector<8x16xbf16>
    %cst_103 = arith.constant dense<0.000000e+00> : vector<8x16xf32>
    %186 = tpu.matmul %184, %185, %cst_103 {dimension_numbers = #tpu.dot_dimension_numbers<[1], [0], [0], [1], [0, 0, 1, 1], [], []>} : vector<8x8xbf16>, vector<8x16xbf16>, vector<8x16xf32> -> vector<8x16xf32>
    %187 = arith.addf %183, %186 : vector<8x16xf32>
    %c0_104 = arith.constant 0 : index
    %c48_105 = arith.constant 48 : index
    %188 = vector.load %arg27[%c0_104, %c48_105] : memref<8x128xf32, #tpu.memory_space<vmem>>, vector<8x16xf32>
    tpu.vector_store %arg27[%c0_104, %c48_105], %187 {strides = array<i32>} : memref<8x128xf32, #tpu.memory_space<vmem>>, vector<8x16xf32>,
    %c0_106 = arith.constant 0 : index
    %c64 = arith.constant 64 : index
    %189 = vector.load %arg24[%c0_106, %c64] : memref<8x128xf32, #tpu.memory_space<vmem>>, vector<8x16xf32>
    %190 = vector.extract_strided_slice %34 {offsets = [0, 64], sizes = [8, 16], strides = [1, 1]} : vector<8x128xf32> to vector<8x16xf32>
    %191 = vector.extract_strided_slice %36 {offsets = [0, 64], sizes = [8, 16], strides = [1, 1]} : vector<8x128xf32> to vector<8x16xf32>
    %c0_107 = arith.constant 0 : index
    %c0_108 = arith.constant 0 : index
    %c0_109 = arith.constant 0 : index
    %c64_110 = arith.constant 64 : index
    %192 = vector.load %arg7[%c0_107, %c0_108, %c0_109, %c64_110] : memref<1x8x8x128xbf16, #tpu.memory_space<vmem>>, vector<1x8x8x16xbf16>
    %193 = vector.shape_cast %192 : vector<1x8x8x16xbf16> to vector<8x8x16xbf16>
    %194 = arith.extf %193 : vector<8x8x16xbf16> to vector<8x8x16xf32>
    %195 = vector.shape_cast %189 : vector<8x16xf32> to vector<8x1x16xf32>
    %196 = vector.broadcast %195 : vector<8x1x16xf32> to vector<8x8x16xf32>
    %197 = arith.mulf %194, %196 : vector<8x8x16xf32>
    %cst_111 = arith.constant dense<0.000000e+00> : vector<8x8xf32>
    %198 = vector.multi_reduction <add>, %197, %cst_111 [2] : vector<8x8x16xf32> to vector<8x8xf32>
    %199 = arith.truncf %189 : vector<8x16xf32> to vector<8x16xbf16>
    %200 = arith.truncf %190 : vector<8x16xf32> to vector<8x16xbf16>
    %cst_112 = arith.constant dense<0.000000e+00> : vector<8x8xf32>
    %201 = tpu.matmul %199, %200, %cst_112 {dimension_numbers = #tpu.dot_dimension_numbers<[1], [1], [0], [0], [0, 0, 1, 0], [], []>} : vector<8x16xbf16>, vector<8x16xbf16>, vector<8x8xf32> -> vector<8x8xf32>
    %202 = arith.addf %201, %198 : vector<8x8xf32>
    %c0_113 = arith.constant 0 : index
    %c4 = arith.constant 4 : index
    %203 = vector.load %arg25[%c0_113, %c4] : memref<8x8xf32, #tpu.memory_space<vmem>>, vector<8x1xf32>
    %cst_114 = arith.constant dense<0xFF800000> : vector<8xf32>
    %204 = vector.multi_reduction <maximumf>, %202, %cst_114 [1] : vector<8x8xf32> to vector<8xf32>
    %205 = vector.shape_cast %204 : vector<8xf32> to vector<8x1xf32>
    %206 = arith.maximumf %203, %205 : vector<8x1xf32>
    %207 = arith.subf %203, %206 : vector<8x1xf32>
    %208 = math.exp %207 : vector<8x1xf32>
    %209 = vector.broadcast %206 : vector<8x1xf32> to vector<8x8xf32>
    %210 = arith.subf %202, %209 : vector<8x8xf32>
    %211 = math.exp %210 : vector<8x8xf32>
    %c0_115 = arith.constant 0 : index
    %c4_116 = arith.constant 4 : index
    %212 = vector.load %arg26[%c0_115, %c4_116] : memref<8x8xf32, #tpu.memory_space<vmem>>, vector<8x1xf32>
    %213 = arith.mulf %208, %212 : vector<8x1xf32>
    %cst_117 = arith.constant dense<0.000000e+00> : vector<8xf32>
    %214 = vector.multi_reduction <add>, %211, %cst_117 [1] : vector<8x8xf32> to vector<8xf32>
    %215 = vector.shape_cast %214 : vector<8xf32> to vector<8x1xf32>
    %216 = arith.addf %213, %215 : vector<8x1xf32>
    %c0_118 = arith.constant 0 : index
    %c4_119 = arith.constant 4 : index
    %217 = vector.load %arg26[%c0_118, %c4_119] : memref<8x8xf32, #tpu.memory_space<vmem>>, vector<8x1xf32>
    tpu.vector_store %arg26[%c0_118, %c4_119], %216 {strides = array<i32>} : memref<8x8xf32, #tpu.memory_space<vmem>>, vector<8x1xf32>,
    %c0_120 = arith.constant 0 : index
    %c4_121 = arith.constant 4 : index
    %218 = vector.load %arg25[%c0_120, %c4_121] : memref<8x8xf32, #tpu.memory_space<vmem>>, vector<8x1xf32>
    tpu.vector_store %arg25[%c0_120, %c4_121], %206 {strides = array<i32>} : memref<8x8xf32, #tpu.memory_space<vmem>>, vector<8x1xf32>,
    %c0_122 = arith.constant 0 : index
    %c64_123 = arith.constant 64 : index
    %219 = vector.load %arg27[%c0_122, %c64_123] : memref<8x128xf32, #tpu.memory_space<vmem>>, vector<8x16xf32>
    %220 = vector.broadcast %208 : vector<8x1xf32> to vector<8x16xf32>
    %221 = arith.mulf %220, %219 : vector<8x16xf32>
    %222 = arith.truncf %211 : vector<8x8xf32> to vector<8x8xbf16>
    %223 = arith.truncf %191 : vector<8x16xf32> to vector<8x16xbf16>
    %cst_124 = arith.constant dense<0.000000e+00> : vector<8x16xf32>
    %224 = tpu.matmul %222, %223, %cst_124 {dimension_numbers = #tpu.dot_dimension_numbers<[1], [0], [0], [1], [0, 0, 1, 1], [], []>} : vector<8x8xbf16>, vector<8x16xbf16>, vector<8x16xf32> -> vector<8x16xf32>
    %225 = arith.addf %221, %224 : vector<8x16xf32>
    %c0_125 = arith.constant 0 : index
    %c64_126 = arith.constant 64 : index
    %226 = vector.load %arg27[%c0_125, %c64_126] : memref<8x128xf32, #tpu.memory_space<vmem>>, vector<8x16xf32>
    tpu.vector_store %arg27[%c0_125, %c64_126], %225 {strides = array<i32>} : memref<8x128xf32, #tpu.memory_space<vmem>>, vector<8x16xf32>,
    %c0_127 = arith.constant 0 : index
    %c80 = arith.constant 80 : index
    %227 = vector.load %arg24[%c0_127, %c80] : memref<8x128xf32, #tpu.memory_space<vmem>>, vector<8x16xf32>
    %228 = vector.extract_strided_slice %34 {offsets = [0, 80], sizes = [8, 16], strides = [1, 1]} : vector<8x128xf32> to vector<8x16xf32>
    %229 = vector.extract_strided_slice %36 {offsets = [0, 80], sizes = [8, 16], strides = [1, 1]} : vector<8x128xf32> to vector<8x16xf32>
    %c0_128 = arith.constant 0 : index
    %c0_129 = arith.constant 0 : index
    %c0_130 = arith.constant 0 : index
    %c80_131 = arith.constant 80 : index
    %230 = vector.load %arg7[%c0_128, %c0_129, %c0_130, %c80_131] : memref<1x8x8x128xbf16, #tpu.memory_space<vmem>>, vector<1x8x8x16xbf16>
    %231 = vector.shape_cast %230 : vector<1x8x8x16xbf16> to vector<8x8x16xbf16>
    %232 = arith.extf %231 : vector<8x8x16xbf16> to vector<8x8x16xf32>
    %233 = vector.shape_cast %227 : vector<8x16xf32> to vector<8x1x16xf32>
    %234 = vector.broadcast %233 : vector<8x1x16xf32> to vector<8x8x16xf32>
    %235 = arith.mulf %232, %234 : vector<8x8x16xf32>
    %cst_132 = arith.constant dense<0.000000e+00> : vector<8x8xf32>
    %236 = vector.multi_reduction <add>, %235, %cst_132 [2] : vector<8x8x16xf32> to vector<8x8xf32>
    %237 = arith.truncf %227 : vector<8x16xf32> to vector<8x16xbf16>
    %238 = arith.truncf %228 : vector<8x16xf32> to vector<8x16xbf16>
    %cst_133 = arith.constant dense<0.000000e+00> : vector<8x8xf32>
    %239 = tpu.matmul %237, %238, %cst_133 {dimension_numbers = #tpu.dot_dimension_numbers<[1], [1], [0], [0], [0, 0, 1, 0], [], []>} : vector<8x16xbf16>, vector<8x16xbf16>, vector<8x8xf32> -> vector<8x8xf32>
    %240 = arith.addf %239, %236 : vector<8x8xf32>
    %c0_134 = arith.constant 0 : index
    %c5 = arith.constant 5 : index
    %241 = vector.load %arg25[%c0_134, %c5] : memref<8x8xf32, #tpu.memory_space<vmem>>, vector<8x1xf32>
    %cst_135 = arith.constant dense<0xFF800000> : vector<8xf32>
    %242 = vector.multi_reduction <maximumf>, %240, %cst_135 [1] : vector<8x8xf32> to vector<8xf32>
    %243 = vector.shape_cast %242 : vector<8xf32> to vector<8x1xf32>
    %244 = arith.maximumf %241, %243 : vector<8x1xf32>
    %245 = arith.subf %241, %244 : vector<8x1xf32>
    %246 = math.exp %245 : vector<8x1xf32>
    %247 = vector.broadcast %244 : vector<8x1xf32> to vector<8x8xf32>
    %248 = arith.subf %240, %247 : vector<8x8xf32>
    %249 = math.exp %248 : vector<8x8xf32>
    %c0_136 = arith.constant 0 : index
    %c5_137 = arith.constant 5 : index
    %250 = vector.load %arg26[%c0_136, %c5_137] : memref<8x8xf32, #tpu.memory_space<vmem>>, vector<8x1xf32>
    %251 = arith.mulf %246, %250 : vector<8x1xf32>
    %cst_138 = arith.constant dense<0.000000e+00> : vector<8xf32>
    %252 = vector.multi_reduction <add>, %249, %cst_138 [1] : vector<8x8xf32> to vector<8xf32>
    %253 = vector.shape_cast %252 : vector<8xf32> to vector<8x1xf32>
    %254 = arith.addf %251, %253 : vector<8x1xf32>
    %c0_139 = arith.constant 0 : index
    %c5_140 = arith.constant 5 : index
    %255 = vector.load %arg26[%c0_139, %c5_140] : memref<8x8xf32, #tpu.memory_space<vmem>>, vector<8x1xf32>
    tpu.vector_store %arg26[%c0_139, %c5_140], %254 {strides = array<i32>} : memref<8x8xf32, #tpu.memory_space<vmem>>, vector<8x1xf32>,
    %c0_141 = arith.constant 0 : index
    %c5_142 = arith.constant 5 : index
    %256 = vector.load %arg25[%c0_141, %c5_142] : memref<8x8xf32, #tpu.memory_space<vmem>>, vector<8x1xf32>
    tpu.vector_store %arg25[%c0_141, %c5_142], %244 {strides = array<i32>} : memref<8x8xf32, #tpu.memory_space<vmem>>, vector<8x1xf32>,
    %c0_143 = arith.constant 0 : index
    %c80_144 = arith.constant 80 : index
    %257 = vector.load %arg27[%c0_143, %c80_144] : memref<8x128xf32, #tpu.memory_space<vmem>>, vector<8x16xf32>
    %258 = vector.broadcast %246 : vector<8x1xf32> to vector<8x16xf32>
    %259 = arith.mulf %258, %257 : vector<8x16xf32>
    %260 = arith.truncf %249 : vector<8x8xf32> to vector<8x8xbf16>
    %261 = arith.truncf %229 : vector<8x16xf32> to vector<8x16xbf16>
    %cst_145 = arith.constant dense<0.000000e+00> : vector<8x16xf32>
    %262 = tpu.matmul %260, %261, %cst_145 {dimension_numbers = #tpu.dot_dimension_numbers<[1], [0], [0], [1], [0, 0, 1, 1], [], []>} : vector<8x8xbf16>, vector<8x16xbf16>, vector<8x16xf32> -> vector<8x16xf32>
    %263 = arith.addf %259, %262 : vector<8x16xf32>
    %c0_146 = arith.constant 0 : index
    %c80_147 = arith.constant 80 : index
    %264 = vector.load %arg27[%c0_146, %c80_147] : memref<8x128xf32, #tpu.memory_space<vmem>>, vector<8x16xf32>
    tpu.vector_store %arg27[%c0_146, %c80_147], %263 {strides = array<i32>} : memref<8x128xf32, #tpu.memory_space<vmem>>, vector<8x16xf32>,
    %c0_148 = arith.constant 0 : index
    %c96 = arith.constant 96 : index
    %265 = vector.load %arg24[%c0_148, %c96] : memref<8x128xf32, #tpu.memory_space<vmem>>, vector<8x16xf32>
    %266 = vector.extract_strided_slice %34 {offsets = [0, 96], sizes = [8, 16], strides = [1, 1]} : vector<8x128xf32> to vector<8x16xf32>
    %267 = vector.extract_strided_slice %36 {offsets = [0, 96], sizes = [8, 16], strides = [1, 1]} : vector<8x128xf32> to vector<8x16xf32>
    %c0_149 = arith.constant 0 : index
    %c0_150 = arith.constant 0 : index
    %c0_151 = arith.constant 0 : index
    %c96_152 = arith.constant 96 : index
    %268 = vector.load %arg7[%c0_149, %c0_150, %c0_151, %c96_152] : memref<1x8x8x128xbf16, #tpu.memory_space<vmem>>, vector<1x8x8x16xbf16>
    %269 = vector.shape_cast %268 : vector<1x8x8x16xbf16> to vector<8x8x16xbf16>
    %270 = arith.extf %269 : vector<8x8x16xbf16> to vector<8x8x16xf32>
    %271 = vector.shape_cast %265 : vector<8x16xf32> to vector<8x1x16xf32>
    %272 = vector.broadcast %271 : vector<8x1x16xf32> to vector<8x8x16xf32>
    %273 = arith.mulf %270, %272 : vector<8x8x16xf32>
    %cst_153 = arith.constant dense<0.000000e+00> : vector<8x8xf32>
    %274 = vector.multi_reduction <add>, %273, %cst_153 [2] : vector<8x8x16xf32> to vector<8x8xf32>
    %275 = arith.truncf %265 : vector<8x16xf32> to vector<8x16xbf16>
    %276 = arith.truncf %266 : vector<8x16xf32> to vector<8x16xbf16>
    %cst_154 = arith.constant dense<0.000000e+00> : vector<8x8xf32>
    %277 = tpu.matmul %275, %276, %cst_154 {dimension_numbers = #tpu.dot_dimension_numbers<[1], [1], [0], [0], [0, 0, 1, 0], [], []>} : vector<8x16xbf16>, vector<8x16xbf16>, vector<8x8xf32> -> vector<8x8xf32>
    %278 = arith.addf %277, %274 : vector<8x8xf32>
    %c0_155 = arith.constant 0 : index
    %c6 = arith.constant 6 : index
    %279 = vector.load %arg25[%c0_155, %c6] : memref<8x8xf32, #tpu.memory_space<vmem>>, vector<8x1xf32>
    %cst_156 = arith.constant dense<0xFF800000> : vector<8xf32>
    %280 = vector.multi_reduction <maximumf>, %278, %cst_156 [1] : vector<8x8xf32> to vector<8xf32>
    %281 = vector.shape_cast %280 : vector<8xf32> to vector<8x1xf32>
    %282 = arith.maximumf %279, %281 : vector<8x1xf32>
    %283 = arith.subf %279, %282 : vector<8x1xf32>
    %284 = math.exp %283 : vector<8x1xf32>
    %285 = vector.broadcast %282 : vector<8x1xf32> to vector<8x8xf32>
    %286 = arith.subf %278, %285 : vector<8x8xf32>
    %287 = math.exp %286 : vector<8x8xf32>
    %c0_157 = arith.constant 0 : index
    %c6_158 = arith.constant 6 : index
    %288 = vector.load %arg26[%c0_157, %c6_158] : memref<8x8xf32, #tpu.memory_space<vmem>>, vector<8x1xf32>
    %289 = arith.mulf %284, %288 : vector<8x1xf32>
    %cst_159 = arith.constant dense<0.000000e+00> : vector<8xf32>
    %290 = vector.multi_reduction <add>, %287, %cst_159 [1] : vector<8x8xf32> to vector<8xf32>
    %291 = vector.shape_cast %290 : vector<8xf32> to vector<8x1xf32>
    %292 = arith.addf %289, %291 : vector<8x1xf32>
    %c0_160 = arith.constant 0 : index
    %c6_161 = arith.constant 6 : index
    %293 = vector.load %arg26[%c0_160, %c6_161] : memref<8x8xf32, #tpu.memory_space<vmem>>, vector<8x1xf32>
    tpu.vector_store %arg26[%c0_160, %c6_161], %292 {strides = array<i32>} : memref<8x8xf32, #tpu.memory_space<vmem>>, vector<8x1xf32>,
    %c0_162 = arith.constant 0 : index
    %c6_163 = arith.constant 6 : index
    %294 = vector.load %arg25[%c0_162, %c6_163] : memref<8x8xf32, #tpu.memory_space<vmem>>, vector<8x1xf32>
    tpu.vector_store %arg25[%c0_162, %c6_163], %282 {strides = array<i32>} : memref<8x8xf32, #tpu.memory_space<vmem>>, vector<8x1xf32>,
    %c0_164 = arith.constant 0 : index
    %c96_165 = arith.constant 96 : index
    %295 = vector.load %arg27[%c0_164, %c96_165] : memref<8x128xf32, #tpu.memory_space<vmem>>, vector<8x16xf32>
    %296 = vector.broadcast %284 : vector<8x1xf32> to vector<8x16xf32>
    %297 = arith.mulf %296, %295 : vector<8x16xf32>
    %298 = arith.truncf %287 : vector<8x8xf32> to vector<8x8xbf16>
    %299 = arith.truncf %267 : vector<8x16xf32> to vector<8x16xbf16>
    %cst_166 = arith.constant dense<0.000000e+00> : vector<8x16xf32>
    %300 = tpu.matmul %298, %299, %cst_166 {dimension_numbers = #tpu.dot_dimension_numbers<[1], [0], [0], [1], [0, 0, 1, 1], [], []>} : vector<8x8xbf16>, vector<8x16xbf16>, vector<8x16xf32> -> vector<8x16xf32>
    %301 = arith.addf %297, %300 : vector<8x16xf32>
    %c0_167 = arith.constant 0 : index
    %c96_168 = arith.constant 96 : index
    %302 = vector.load %arg27[%c0_167, %c96_168] : memref<8x128xf32, #tpu.memory_space<vmem>>, vector<8x16xf32>
    tpu.vector_store %arg27[%c0_167, %c96_168], %301 {strides = array<i32>} : memref<8x128xf32, #tpu.memory_space<vmem>>, vector<8x16xf32>,
    %c0_169 = arith.constant 0 : index
    %c112 = arith.constant 112 : index
    %303 = vector.load %arg24[%c0_169, %c112] : memref<8x128xf32, #tpu.memory_space<vmem>>, vector<8x16xf32>
    %304 = vector.extract_strided_slice %34 {offsets = [0, 112], sizes = [8, 16], strides = [1, 1]} : vector<8x128xf32> to vector<8x16xf32>
    %305 = vector.extract_strided_slice %36 {offsets = [0, 112], sizes = [8, 16], strides = [1, 1]} : vector<8x128xf32> to vector<8x16xf32>
    %c0_170 = arith.constant 0 : index
    %c0_171 = arith.constant 0 : index
    %c0_172 = arith.constant 0 : index
    %c112_173 = arith.constant 112 : index
    %306 = vector.load %arg7[%c0_170, %c0_171, %c0_172, %c112_173] : memref<1x8x8x128xbf16, #tpu.memory_space<vmem>>, vector<1x8x8x16xbf16>
    %307 = vector.shape_cast %306 : vector<1x8x8x16xbf16> to vector<8x8x16xbf16>
    %308 = arith.extf %307 : vector<8x8x16xbf16> to vector<8x8x16xf32>
    %309 = vector.shape_cast %303 : vector<8x16xf32> to vector<8x1x16xf32>
    %310 = vector.broadcast %309 : vector<8x1x16xf32> to vector<8x8x16xf32>
    %311 = arith.mulf %308, %310 : vector<8x8x16xf32>
    %cst_174 = arith.constant dense<0.000000e+00> : vector<8x8xf32>
    %312 = vector.multi_reduction <add>, %311, %cst_174 [2] : vector<8x8x16xf32> to vector<8x8xf32>
    %313 = arith.truncf %303 : vector<8x16xf32> to vector<8x16xbf16>
    %314 = arith.truncf %304 : vector<8x16xf32> to vector<8x16xbf16>
    %cst_175 = arith.constant dense<0.000000e+00> : vector<8x8xf32>
    %315 = tpu.matmul %313, %314, %cst_175 {dimension_numbers = #tpu.dot_dimension_numbers<[1], [1], [0], [0], [0, 0, 1, 0], [], []>} : vector<8x16xbf16>, vector<8x16xbf16>, vector<8x8xf32> -> vector<8x8xf32>
    %316 = arith.addf %315, %312 : vector<8x8xf32>
    %c0_176 = arith.constant 0 : index
    %c7 = arith.constant 7 : index
    %317 = vector.load %arg25[%c0_176, %c7] : memref<8x8xf32, #tpu.memory_space<vmem>>, vector<8x1xf32>
    %cst_177 = arith.constant dense<0xFF800000> : vector<8xf32>
    %318 = vector.multi_reduction <maximumf>, %316, %cst_177 [1] : vector<8x8xf32> to vector<8xf32>
    %319 = vector.shape_cast %318 : vector<8xf32> to vector<8x1xf32>
    %320 = arith.maximumf %317, %319 : vector<8x1xf32>
    %321 = arith.subf %317, %320 : vector<8x1xf32>
    %322 = math.exp %321 : vector<8x1xf32>
    %323 = vector.broadcast %320 : vector<8x1xf32> to vector<8x8xf32>
    %324 = arith.subf %316, %323 : vector<8x8xf32>
    %325 = math.exp %324 : vector<8x8xf32>
    %c0_178 = arith.constant 0 : index
    %c7_179 = arith.constant 7 : index
    %326 = vector.load %arg26[%c0_178, %c7_179] : memref<8x8xf32, #tpu.memory_space<vmem>>, vector<8x1xf32>
    %327 = arith.mulf %322, %326 : vector<8x1xf32>
    %cst_180 = arith.constant dense<0.000000e+00> : vector<8xf32>
    %328 = vector.multi_reduction <add>, %325, %cst_180 [1] : vector<8x8xf32> to vector<8xf32>
    %329 = vector.shape_cast %328 : vector<8xf32> to vector<8x1xf32>
    %330 = arith.addf %327, %329 : vector<8x1xf32>
    %c0_181 = arith.constant 0 : index
    %c7_182 = arith.constant 7 : index
    %331 = vector.load %arg26[%c0_181, %c7_182] : memref<8x8xf32, #tpu.memory_space<vmem>>, vector<8x1xf32>
    tpu.vector_store %arg26[%c0_181, %c7_182], %330 {strides = array<i32>} : memref<8x8xf32, #tpu.memory_space<vmem>>, vector<8x1xf32>,
    %c0_183 = arith.constant 0 : index
    %c7_184 = arith.constant 7 : index
    %332 = vector.load %arg25[%c0_183, %c7_184] : memref<8x8xf32, #tpu.memory_space<vmem>>, vector<8x1xf32>
    tpu.vector_store %arg25[%c0_183, %c7_184], %320 {strides = array<i32>} : memref<8x8xf32, #tpu.memory_space<vmem>>, vector<8x1xf32>,
    %c0_185 = arith.constant 0 : index
    %c112_186 = arith.constant 112 : index
    %333 = vector.load %arg27[%c0_185, %c112_186] : memref<8x128xf32, #tpu.memory_space<vmem>>, vector<8x16xf32>
    %334 = vector.broadcast %322 : vector<8x1xf32> to vector<8x16xf32>
    %335 = arith.mulf %334, %333 : vector<8x16xf32>
    %336 = arith.truncf %325 : vector<8x8xf32> to vector<8x8xbf16>
    %337 = arith.truncf %305 : vector<8x16xf32> to vector<8x16xbf16>
    %cst_187 = arith.constant dense<0.000000e+00> : vector<8x16xf32>
    %338 = tpu.matmul %336, %337, %cst_187 {dimension_numbers = #tpu.dot_dimension_numbers<[1], [0], [0], [1], [0, 0, 1, 1], [], []>} : vector<8x8xbf16>, vector<8x16xbf16>, vector<8x16xf32> -> vector<8x16xf32>
    %339 = arith.addf %335, %338 : vector<8x16xf32>
    %c0_188 = arith.constant 0 : index
    %c112_189 = arith.constant 112 : index
    %340 = vector.load %arg27[%c0_188, %c112_189] : memref<8x128xf32, #tpu.memory_space<vmem>>, vector<8x16xf32>
    tpu.vector_store %arg27[%c0_188, %c112_189], %339 {strides = array<i32>} : memref<8x128xf32, #tpu.memory_space<vmem>>, vector<8x16xf32>,
    %c1_i32 = arith.constant 1 : i32
    %341 = arith.cmpi eq, %arg2, %c1_i32 : i32
    %342 = arith.extui %341 : i1 to i32
    %c0_i32_190 = arith.constant 0 : i32
    %343 = arith.cmpi ne, %342, %c0_i32_190 : i32
    scf.if %343 {
      %c0_191 = arith.constant 0 : index
      %c0_192 = arith.constant 0 : index
      %344 = vector.load %arg26[%c0_191, %c0_192] : memref<8x8xf32, #tpu.memory_space<vmem>>, vector<8x8xf32>
      %cst_193 = arith.constant 1.000000e+00 : f32
      %345 = vector.broadcast %cst_193 : f32 to vector<8x8xf32>
      %346 = arith.divf %345, %344 : vector<8x8xf32>
      %c0_194 = arith.constant 0 : index
      %c0_195 = arith.constant 0 : index
      %347 = vector.load %arg27[%c0_194, %c0_195] : memref<8x128xf32, #tpu.memory_space<vmem>>, vector<8x16xf32>
      %348 = vector.extract_strided_slice %346 {offsets = [0, 0], sizes = [8, 1], strides = [1, 1]} : vector<8x8xf32> to vector<8x1xf32>
      %349 = vector.broadcast %348 : vector<8x1xf32> to vector<8x16xf32>
      %350 = arith.mulf %347, %349 : vector<8x16xf32>
      %c0_196 = arith.constant 0 : index
      %c0_197 = arith.constant 0 : index
      %351 = vector.load %arg27[%c0_196, %c0_197] : memref<8x128xf32, #tpu.memory_space<vmem>>, vector<8x16xf32>
      tpu.vector_store %arg27[%c0_196, %c0_197], %350 {strides = array<i32>} : memref<8x128xf32, #tpu.memory_space<vmem>>, vector<8x16xf32>,
      %c0_198 = arith.constant 0 : index
      %c16_199 = arith.constant 16 : index
      %352 = vector.load %arg27[%c0_198, %c16_199] : memref<8x128xf32, #tpu.memory_space<vmem>>, vector<8x16xf32>
      %353 = vector.extract_strided_slice %346 {offsets = [0, 1], sizes = [8, 1], strides = [1, 1]} : vector<8x8xf32> to vector<8x1xf32>
      %354 = vector.broadcast %353 : vector<8x1xf32> to vector<8x16xf32>
      %355 = arith.mulf %352, %354 : vector<8x16xf32>
      %c0_200 = arith.constant 0 : index
      %c16_201 = arith.constant 16 : index
      %356 = vector.load %arg27[%c0_200, %c16_201] : memref<8x128xf32, #tpu.memory_space<vmem>>, vector<8x16xf32>
      tpu.vector_store %arg27[%c0_200, %c16_201], %355 {strides = array<i32>} : memref<8x128xf32, #tpu.memory_space<vmem>>, vector<8x16xf32>,
      %c0_202 = arith.constant 0 : index
      %c32_203 = arith.constant 32 : index
      %357 = vector.load %arg27[%c0_202, %c32_203] : memref<8x128xf32, #tpu.memory_space<vmem>>, vector<8x16xf32>
      %358 = vector.extract_strided_slice %346 {offsets = [0, 2], sizes = [8, 1], strides = [1, 1]} : vector<8x8xf32> to vector<8x1xf32>
      %359 = vector.broadcast %358 : vector<8x1xf32> to vector<8x16xf32>
      %360 = arith.mulf %357, %359 : vector<8x16xf32>
      %c0_204 = arith.constant 0 : index
      %c32_205 = arith.constant 32 : index
      %361 = vector.load %arg27[%c0_204, %c32_205] : memref<8x128xf32, #tpu.memory_space<vmem>>, vector<8x16xf32>
      tpu.vector_store %arg27[%c0_204, %c32_205], %360 {strides = array<i32>} : memref<8x128xf32, #tpu.memory_space<vmem>>, vector<8x16xf32>,
      %c0_206 = arith.constant 0 : index
      %c48_207 = arith.constant 48 : index
      %362 = vector.load %arg27[%c0_206, %c48_207] : memref<8x128xf32, #tpu.memory_space<vmem>>, vector<8x16xf32>
      %363 = vector.extract_strided_slice %346 {offsets = [0, 3], sizes = [8, 1], strides = [1, 1]} : vector<8x8xf32> to vector<8x1xf32>
      %364 = vector.broadcast %363 : vector<8x1xf32> to vector<8x16xf32>
      %365 = arith.mulf %362, %364 : vector<8x16xf32>
      %c0_208 = arith.constant 0 : index
      %c48_209 = arith.constant 48 : index
      %366 = vector.load %arg27[%c0_208, %c48_209] : memref<8x128xf32, #tpu.memory_space<vmem>>, vector<8x16xf32>
      tpu.vector_store %arg27[%c0_208, %c48_209], %365 {strides = array<i32>} : memref<8x128xf32, #tpu.memory_space<vmem>>, vector<8x16xf32>,
      %c0_210 = arith.constant 0 : index
      %c64_211 = arith.constant 64 : index
      %367 = vector.load %arg27[%c0_210, %c64_211] : memref<8x128xf32, #tpu.memory_space<vmem>>, vector<8x16xf32>
      %368 = vector.extract_strided_slice %346 {offsets = [0, 4], sizes = [8, 1], strides = [1, 1]} : vector<8x8xf32> to vector<8x1xf32>
      %369 = vector.broadcast %368 : vector<8x1xf32> to vector<8x16xf32>
      %370 = arith.mulf %367, %369 : vector<8x16xf32>
      %c0_212 = arith.constant 0 : index
      %c64_213 = arith.constant 64 : index
      %371 = vector.load %arg27[%c0_212, %c64_213] : memref<8x128xf32, #tpu.memory_space<vmem>>, vector<8x16xf32>
      tpu.vector_store %arg27[%c0_212, %c64_213], %370 {strides = array<i32>} : memref<8x128xf32, #tpu.memory_space<vmem>>, vector<8x16xf32>,
      %c0_214 = arith.constant 0 : index
      %c80_215 = arith.constant 80 : index
      %372 = vector.load %arg27[%c0_214, %c80_215] : memref<8x128xf32, #tpu.memory_space<vmem>>, vector<8x16xf32>
      %373 = vector.extract_strided_slice %346 {offsets = [0, 5], sizes = [8, 1], strides = [1, 1]} : vector<8x8xf32> to vector<8x1xf32>
      %374 = vector.broadcast %373 : vector<8x1xf32> to vector<8x16xf32>
      %375 = arith.mulf %372, %374 : vector<8x16xf32>
      %c0_216 = arith.constant 0 : index
      %c80_217 = arith.constant 80 : index
      %376 = vector.load %arg27[%c0_216, %c80_217] : memref<8x128xf32, #tpu.memory_space<vmem>>, vector<8x16xf32>
      tpu.vector_store %arg27[%c0_216, %c80_217], %375 {strides = array<i32>} : memref<8x128xf32, #tpu.memory_space<vmem>>, vector<8x16xf32>,
      %c0_218 = arith.constant 0 : index
      %c96_219 = arith.constant 96 : index
      %377 = vector.load %arg27[%c0_218, %c96_219] : memref<8x128xf32, #tpu.memory_space<vmem>>, vector<8x16xf32>
      %378 = vector.extract_strided_slice %346 {offsets = [0, 6], sizes = [8, 1], strides = [1, 1]} : vector<8x8xf32> to vector<8x1xf32>
      %379 = vector.broadcast %378 : vector<8x1xf32> to vector<8x16xf32>
      %380 = arith.mulf %377, %379 : vector<8x16xf32>
      %c0_220 = arith.constant 0 : index
      %c96_221 = arith.constant 96 : index
      %381 = vector.load %arg27[%c0_220, %c96_221] : memref<8x128xf32, #tpu.memory_space<vmem>>, vector<8x16xf32>
      tpu.vector_store %arg27[%c0_220, %c96_221], %380 {strides = array<i32>} : memref<8x128xf32, #tpu.memory_space<vmem>>, vector<8x16xf32>,
      %c0_222 = arith.constant 0 : index
      %c112_223 = arith.constant 112 : index
      %382 = vector.load %arg27[%c0_222, %c112_223] : memref<8x128xf32, #tpu.memory_space<vmem>>, vector<8x16xf32>
      %383 = vector.extract_strided_slice %346 {offsets = [0, 7], sizes = [8, 1], strides = [1, 1]} : vector<8x8xf32> to vector<8x1xf32>
      %384 = vector.broadcast %383 : vector<8x1xf32> to vector<8x16xf32>
      %385 = arith.mulf %382, %384 : vector<8x16xf32>
      %c0_224 = arith.constant 0 : index
      %c112_225 = arith.constant 112 : index
      %386 = vector.load %arg27[%c0_224, %c112_225] : memref<8x128xf32, #tpu.memory_space<vmem>>, vector<8x16xf32>
      tpu.vector_store %arg27[%c0_224, %c112_225], %385 {strides = array<i32>} : memref<8x128xf32, #tpu.memory_space<vmem>>, vector<8x16xf32>,
      %c0_226 = arith.constant 0 : index
      %c0_227 = arith.constant 0 : index
      %387 = vector.load %arg27[%c0_226, %c0_227] : memref<8x128xf32, #tpu.memory_space<vmem>>, vector<8x128xf32>
      %388 = arith.truncf %387 : vector<8x128xf32> to vector<8x128xbf16>
      %c0_228 = arith.constant 0 : index
      %c0_229 = arith.constant 0 : index
      %389 = vector.load %arg11[%c0_228, %c0_229] : memref<128x128xbf16, #tpu.memory_space<vmem>>, vector<128x128xbf16>
      %cst_230 = arith.constant dense<0.000000e+00> : vector<8x128xf32>
      %390 = tpu.matmul %388, %389, %cst_230 {dimension_numbers = #tpu.dot_dimension_numbers<[1], [0], [0], [1], [0, 0, 1, 1], [], []>} : vector<8x128xbf16>, vector<128x128xbf16>, vector<8x128xf32> -> vector<8x128xf32>
      %c0_231 = arith.constant 0 : index
      %c0_232 = arith.constant 0 : index
      %391 = vector.load %arg12[%c0_231, %c0_232] : memref<1x128xf32, #tpu.memory_space<vmem>>, vector<1x128xf32>
      %392 = vector.broadcast %391 : vector<1x128xf32> to vector<8x128xf32>
      %393 = arith.addf %390, %392 : vector<8x128xf32>
      %c0_233 = arith.constant 0 : index
      %c0_234 = arith.constant 0 : index
      %c0_235 = arith.constant 0 : index
      %394 = vector.load %arg3[%c0_233, %c0_234, %c0_235] : memref<1x8x128xf32, #tpu.memory_space<vmem>>, vector<1x8x128xf32>
      %395 = vector.shape_cast %394 : vector<1x8x128xf32> to vector<8x128xf32>
      %c0_236 = arith.constant 0 : index
      %c0_237 = arith.constant 0 : index
      %c0_238 = arith.constant 0 : index
      %396 = vector.load %arg5[%c0_236, %c0_237, %c0_238] : memref<1x8x128xf32, #tpu.memory_space<vmem>>, vector<1x8x128xf32>
      %397 = vector.shape_cast %396 : vector<1x8x128xf32> to vector<8x128xf32>
      %398 = arith.addf %395, %397 : vector<8x128xf32>
      %399 = arith.addf %398, %393 : vector<8x128xf32>
      %c0_239 = arith.constant 0 : index
      %c0_240 = arith.constant 0 : index
      %400 = vector.load %arg15[%c0_239, %c0_240] : memref<1x128xf32, #tpu.memory_space<vmem>>, vector<1x128xf32>
      %c0_241 = arith.constant 0 : index
      %c0_242 = arith.constant 0 : index
      %401 = vector.load %arg16[%c0_241, %c0_242] : memref<1x128xf32, #tpu.memory_space<vmem>>, vector<1x128xf32>
      %cst_243 = arith.constant dense<0.000000e+00> : vector<8xf32>
      %402 = vector.multi_reduction <add>, %399, %cst_243 [1] : vector<8x128xf32> to vector<8xf32>
      %403 = vector.shape_cast %402 : vector<8xf32> to vector<8x1xf32>
      %cst_244 = arith.constant 1.280000e+02 : f32
      %404 = vector.broadcast %cst_244 : f32 to vector<8x1xf32>
      %405 = arith.divf %403, %404 : vector<8x1xf32>
      %406 = vector.broadcast %405 : vector<8x1xf32> to vector<8x128xf32>
      %407 = arith.subf %399, %406 : vector<8x128xf32>
      %408 = arith.mulf %407, %407 : vector<8x128xf32>
      %cst_245 = arith.constant dense<0.000000e+00> : vector<8xf32>
      %409 = vector.multi_reduction <add>, %408, %cst_245 [1] : vector<8x128xf32> to vector<8xf32>
      %410 = vector.shape_cast %409 : vector<8xf32> to vector<8x1xf32>
      %cst_246 = arith.constant 1.280000e+02 : f32
      %411 = vector.broadcast %cst_246 : f32 to vector<8x1xf32>
      %412 = arith.divf %410, %411 : vector<8x1xf32>
      %413 = vector.broadcast %405 : vector<8x1xf32> to vector<8x128xf32>
      %414 = arith.subf %399, %413 : vector<8x128xf32>
      %cst_247 = arith.constant 9.99999974E-6 : f32
      %415 = vector.broadcast %cst_247 : f32 to vector<8x1xf32>
      %416 = arith.addf %412, %415 : vector<8x1xf32>
      %417 = math.rsqrt %416 : vector<8x1xf32>
      %418 = vector.broadcast %417 : vector<8x1xf32> to vector<8x128xf32>
      %419 = arith.mulf %414, %418 : vector<8x128xf32>
      %420 = vector.broadcast %400 : vector<1x128xf32> to vector<8x128xf32>
      %421 = arith.mulf %419, %420 : vector<8x128xf32>
      %422 = vector.broadcast %401 : vector<1x128xf32> to vector<8x128xf32>
      %423 = arith.addf %421, %422 : vector<8x128xf32>
      %424 = arith.truncf %423 : vector<8x128xf32> to vector<8x128xbf16>
      %c0_248 = arith.constant 0 : index
      %c0_249 = arith.constant 0 : index
      %425 = vector.load %arg17[%c0_248, %c0_249] : memref<128x512xbf16, #tpu.memory_space<vmem>>, vector<128x512xbf16>
      %cst_250 = arith.constant dense<0.000000e+00> : vector<8x512xf32>
      %426 = tpu.matmul %424, %425, %cst_250 {dimension_numbers = #tpu.dot_dimension_numbers<[1], [0], [0], [1], [0, 0, 1, 1], [], []>} : vector<8x128xbf16>, vector<128x512xbf16>, vector<8x512xf32> -> vector<8x512xf32>
      %c0_251 = arith.constant 0 : index
      %c0_252 = arith.constant 0 : index
      %427 = vector.load %arg18[%c0_251, %c0_252] : memref<1x512xf32, #tpu.memory_space<vmem>>, vector<1x512xf32>
      %428 = vector.broadcast %427 : vector<1x512xf32> to vector<8x512xf32>
      %429 = arith.addf %426, %428 : vector<8x512xf32>
      %cst_253 = arith.constant 5.000000e-01 : f32
      %430 = vector.broadcast %cst_253 : f32 to vector<8x512xf32>
      %431 = arith.mulf %430, %429 : vector<8x512xf32>
      %cst_254 = arith.constant 0.707106769 : f32
      %432 = vector.broadcast %cst_254 : f32 to vector<8x512xf32>
      %433 = arith.mulf %429, %432 : vector<8x512xf32>
      %434 = math.erf %433 : vector<8x512xf32>
      %cst_255 = arith.constant 1.000000e+00 : f32
      %435 = vector.broadcast %cst_255 : f32 to vector<8x512xf32>
      %436 = arith.addf %435, %434 : vector<8x512xf32>
      %437 = arith.mulf %431, %436 : vector<8x512xf32>
      %438 = arith.truncf %437 : vector<8x512xf32> to vector<8x512xbf16>
      %c0_256 = arith.constant 0 : index
      %c0_257 = arith.constant 0 : index
      %439 = vector.load %arg19[%c0_256, %c0_257] : memref<512x128xbf16, #tpu.memory_space<vmem>>, vector<512x128xbf16>
      %cst_258 = arith.constant dense<0.000000e+00> : vector<8x128xf32>
      %440 = tpu.matmul %438, %439, %cst_258 {dimension_numbers = #tpu.dot_dimension_numbers<[1], [0], [0], [1], [0, 0, 1, 1], [], []>} : vector<8x512xbf16>, vector<512x128xbf16>, vector<8x128xf32> -> vector<8x128xf32>
      %c0_259 = arith.constant 0 : index
      %c0_260 = arith.constant 0 : index
      %441 = vector.load %arg20[%c0_259, %c0_260] : memref<1x128xf32, #tpu.memory_space<vmem>>, vector<1x128xf32>
      %442 = vector.broadcast %441 : vector<1x128xf32> to vector<8x128xf32>
      %443 = arith.addf %440, %442 : vector<8x128xf32>
      %444 = arith.addf %399, %443 : vector<8x128xf32>
      %c0_261 = arith.constant 0 : index
      %c0_262 = arith.constant 0 : index
      %c0_263 = arith.constant 0 : index
      %445 = vector.load %arg23[%c0_261, %c0_262, %c0_263] : memref<1x8x128xf32, #tpu.memory_space<vmem>>, vector<1x8x128xf32>
      %446 = vector.shape_cast %445 : vector<1x8x128xf32> to vector<8x128xf32>
      %447 = vector.shape_cast %444 : vector<8x128xf32> to vector<1x8x128xf32>
      tpu.vector_store %arg23[%c0_261, %c0_262, %c0_263], %447 {strides = array<i32>} : memref<1x8x128xf32, #tpu.memory_space<vmem>>, vector<1x8x128xf32>,
    } else {
    }
    return
  }
  func.func @transform_0(%arg0: i32, %arg1: i32, %arg2: i32) -> (i32, i32, i32) {
    %c0_i32 = arith.constant 0 : i32
    %c0_i32_0 = arith.constant 0 : i32
    return %arg0, %arg1, %c0_i32 : i32, i32, i32
  }
  func.func @transform_1(%arg0: i32, %arg1: i32, %arg2: i32) -> (i32, i32, i32) {
    %c0_i32 = arith.constant 0 : i32
    %c0_i32_0 = arith.constant 0 : i32
    return %arg0, %arg2, %c0_i32 : i32, i32, i32
  }
  func.func @transform_2(%arg0: i32, %arg1: i32, %arg2: i32) -> (i32, i32, i32) {
    %c0_i32 = arith.constant 0 : i32
    %c0_i32_0 = arith.constant 0 : i32
    return %arg0, %arg1, %c0_i32 : i32, i32, i32
  }
  func.func @transform_3(%arg0: i32, %arg1: i32, %arg2: i32) -> (i32, i32, i32) {
    %c0_i32 = arith.constant 0 : i32
    %c0_i32_0 = arith.constant 0 : i32
    return %arg0, %arg2, %c0_i32 : i32, i32, i32
  }
  func.func @transform_4(%arg0: i32, %arg1: i32, %arg2: i32) -> (i32, i32, i32, i32) {
    %c0_i32 = arith.constant 0 : i32
    %c0_i32_0 = arith.constant 0 : i32
    return %arg0, %arg1, %arg2, %c0_i32 : i32, i32, i32, i32
  }
  func.func @transform_5(%arg0: i32, %arg1: i32, %arg2: i32) -> (i32, i32) {
    %c0_i32 = arith.constant 0 : i32
    %c0_i32_0 = arith.constant 0 : i32
    %c0_i32_1 = arith.constant 0 : i32
    return %c0_i32, %c0_i32_0 : i32, i32
  }
  func.func @transform_6(%arg0: i32, %arg1: i32, %arg2: i32) -> (i32, i32) {
    %c0_i32 = arith.constant 0 : i32
    %c0_i32_0 = arith.constant 0 : i32
    %c0_i32_1 = arith.constant 0 : i32
    return %c0_i32, %c0_i32_0 : i32, i32
  }
  func.func @transform_7(%arg0: i32, %arg1: i32, %arg2: i32) -> (i32, i32) {
    %c0_i32 = arith.constant 0 : i32
    %c0_i32_0 = arith.constant 0 : i32
    %c0_i32_1 = arith.constant 0 : i32
    return %c0_i32, %c0_i32_0 : i32, i32
  }
  func.func @transform_8(%arg0: i32, %arg1: i32, %arg2: i32) -> (i32, i32) {
    %c0_i32 = arith.constant 0 : i32
    %c0_i32_0 = arith.constant 0 : i32
    %c0_i32_1 = arith.constant 0 : i32
    return %c0_i32, %c0_i32_0 : i32, i32
  }
  func.func @transform_9(%arg0: i32, %arg1: i32, %arg2: i32) -> (i32, i32) {
    %c0_i32 = arith.constant 0 : i32
    %c0_i32_0 = arith.constant 0 : i32
    %c0_i32_1 = arith.constant 0 : i32
    return %c0_i32, %c0_i32_0 : i32, i32
  }
  func.func @transform_10(%arg0: i32, %arg1: i32, %arg2: i32) -> (i32, i32) {
    %c0_i32 = arith.constant 0 : i32
    %c0_i32_0 = arith.constant 0 : i32
    %c0_i32_1 = arith.constant 0 : i32
    return %c0_i32, %c0_i32_0 : i32, i32
  }
  func.func @transform_11(%arg0: i32, %arg1: i32, %arg2: i32) -> (i32, i32) {
    %c0_i32 = arith.constant 0 : i32
    %c0_i32_0 = arith.constant 0 : i32
    %c0_i32_1 = arith.constant 0 : i32
    return %c0_i32, %c0_i32_0 : i32, i32
  }
  func.func @transform_12(%arg0: i32, %arg1: i32, %arg2: i32) -> (i32, i32) {
    %c0_i32 = arith.constant 0 : i32
    %c0_i32_0 = arith.constant 0 : i32
    %c0_i32_1 = arith.constant 0 : i32
    return %c0_i32, %c0_i32_0 : i32, i32
  }
  func.func @transform_13(%arg0: i32, %arg1: i32, %arg2: i32) -> (i32, i32) {
    %c0_i32 = arith.constant 0 : i32
    %c0_i32_0 = arith.constant 0 : i32
    %c0_i32_1 = arith.constant 0 : i32
    return %c0_i32, %c0_i32_0 : i32, i32
  }
  func.func @transform_14(%arg0: i32, %arg1: i32, %arg2: i32) -> (i32, i32) {
    %c0_i32 = arith.constant 0 : i32
    %c0_i32_0 = arith.constant 0 : i32
    %c0_i32_1 = arith.constant 0 : i32
    return %c0_i32, %c0_i32_0 : i32, i32
  }
  func.func @transform_15(%arg0: i32, %arg1: i32, %arg2: i32) -> (i32, i32) {
    %c0_i32 = arith.constant 0 : i32
    %c0_i32_0 = arith.constant 0 : i32
    %c0_i32_1 = arith.constant 0 : i32
    return %c0_i32, %c0_i32_0 : i32, i32
  }
  func.func @transform_16(%arg0: i32, %arg1: i32, %arg2: i32) -> (i32, i32) {
    %c0_i32 = arith.constant 0 : i32
    %c0_i32_0 = arith.constant 0 : i32
    %c0_i32_1 = arith.constant 0 : i32
    return %c0_i32, %c0_i32_0 : i32, i32
  }
  func.func @transform_17(%arg0: i32, %arg1: i32, %arg2: i32) -> (i32, i32) {
    %c0_i32 = arith.constant 0 : i32
    %c0_i32_0 = arith.constant 0 : i32
    %c0_i32_1 = arith.constant 0 : i32
    return %c0_i32, %c0_i32_0 : i32, i32
  }
  func.func @transform_18(%arg0: i32, %arg1: i32, %arg2: i32) -> (i32, i32) {
    %c0_i32 = arith.constant 0 : i32
    %c0_i32_0 = arith.constant 0 : i32
    %c0_i32_1 = arith.constant 0 : i32
    return %c0_i32, %c0_i32_0 : i32, i32
  }
  func.func @transform_19(%arg0: i32, %arg1: i32, %arg2: i32) -> (i32, i32) {
    %c0_i32 = arith.constant 0 : i32
    %c0_i32_0 = arith.constant 0 : i32
    %c0_i32_1 = arith.constant 0 : i32
    return %c0_i32, %c0_i32_0 : i32, i32
  }
  func.func @transform_20(%arg0: i32, %arg1: i32, %arg2: i32) -> (i32, i32, i32) {
    %c0_i32 = arith.constant 0 : i32
    %c0_i32_0 = arith.constant 0 : i32
    return %arg0, %arg1, %c0_i32 : i32, i32, i32
  }
}

</mosaic_0001>

<llo_original>
// kernel: tpu_custom_call.1
$region0: #{tpu_custom_call.1}
  #allocation0 [shape = 'u32[]', space=smem, size = 0x4, offset = 0x4, fixed_abs, tag = 'smem constant byte address 0x4 - core index']
  #allocation1 [shape = 'u32[72,128]{1,0:T(1,128)}', space=vmem, size = 0x9000, scoped, tag = 'internal scratch']
  #allocation2 [shape = 'f32[8,128]{1,0:T(8,128)}', space=vmem, size = 0x1000, scoped, tag = 'scratch operand']
  #allocation3 [shape = 'f32[8,8]{1,0:T(8,128)}', space=vmem, size = 0x1000, scoped, tag = 'scratch operand']
  #allocation4 [shape = 'f32[8,8]{1,0:T(8,128)}', space=vmem, size = 0x1000, scoped, tag = 'scratch operand']
  #allocation5 [shape = 'f32[8,128]{1,0:T(8,128)}', space=vmem, size = 0x1000, scoped, tag = 'scratch operand']
  %s0 = inlined_call_operand.hbm [shape: f32[2,16,128], index: 0, kind: input, shape index: {}]
  %s1 = inlined_call_operand.hbm [shape: f32[2,16,128], index: 1, kind: input, shape index: {}]
  %s2 = inlined_call_operand.hbm [shape: f32[2,16,128], index: 2, kind: input, shape index: {}]
  %s3 = inlined_call_operand.hbm [shape: f32[2,16,128], index: 3, kind: input, shape index: {}]
  %s4 = inlined_call_operand.hbm [shape: bf16[2,16,16,128], index: 4, kind: input, shape index: {}]
  %s5 = inlined_call_operand.hbm [shape: bf16[128,128], index: 5, kind: input, shape index: {}]
  %s6 = inlined_call_operand.hbm [shape: bf16[128,128], index: 6, kind: input, shape index: {}]
  %s7 = inlined_call_operand.hbm [shape: bf16[128,128], index: 7, kind: input, shape index: {}]
  %s8 = inlined_call_operand.hbm [shape: bf16[128,128], index: 8, kind: input, shape index: {}]
  %s9 = inlined_call_operand.vmem [shape: f32[1,128], index: 9, kind: input, shape index: {}]
  %s10 = inlined_call_operand.vmem [shape: f32[1,128], index: 10, kind: input, shape index: {}]
  %s11 = inlined_call_operand.vmem [shape: f32[1,128], index: 11, kind: input, shape index: {}]
  %s12 = inlined_call_operand.vmem [shape: f32[1,128], index: 12, kind: input, shape index: {}]
  %s13 = inlined_call_operand.vmem [shape: f32[1,128], index: 13, kind: input, shape index: {}]
  %s14 = inlined_call_operand.hbm [shape: bf16[128,512], index: 14, kind: input, shape index: {}]
  %s15 = inlined_call_operand.vmem [shape: f32[1,512], index: 15, kind: input, shape index: {}]
  %s16 = inlined_call_operand.hbm [shape: bf16[512,128], index: 16, kind: input, shape index: {}]
  %s17 = inlined_call_operand.vmem [shape: f32[1,128], index: 17, kind: input, shape index: {}]
  %s18 = inlined_call_operand.vmem [shape: f32[1,128], index: 18, kind: input, shape index: {}]
  %s19 = inlined_call_operand.vmem [shape: f32[1,128], index: 19, kind: input, shape index: {}]
  %s20 = inlined_call_operand.hbm [shape: f32[2,16,128], index: 20, kind: output, shape index: {}]
  %s21 = sld [smem:[#allocation0]]
  $region165: #{tpu_custom_call.1} parent=0
    _
  %s23 = ssub.s32 1, %s21
  %s24 = scalar_select 0, %s23, %s21
  $region1: #{tpu_custom_call.1} parent=0
    #allocation6 [shape = 'u8[8192]{0}', space=vmem, size = 0x2000, scoped, tag = 'input window, operand 0']
    #allocation7 [shape = 's32[2]{0}', space=sflag, size = 0x8, scoped, tag = 'scoped memory for tpu_custom_call.1']
    #allocation8 [shape = 's32[2]{0}', space=sflag, size = 0x8, scoped, tag = 'scoped memory for tpu_custom_call.1']
    #allocation9 [shape = 'u8[8192]{0}', space=vmem, size = 0x2000, scoped, tag = 'input window, operand 1']
    #allocation10 [shape = 's32[2]{0}', space=sflag, size = 0x8, scoped, tag = 'scoped memory for tpu_custom_call.1']
    #allocation11 [shape = 'u8[8192]{0}', space=vmem, size = 0x2000, scoped, tag = 'input window, operand 2']
    #allocation12 [shape = 'u8[8192]{0}', space=vmem, size = 0x2000, scoped, tag = 'input window, operand 3']
    #allocation13 [shape = 's32[2]{0}', space=sflag, size = 0x8, scoped, tag = 'scoped memory for tpu_custom_call.1']
    #allocation14 [shape = 'u8[32768]{0}', space=vmem, size = 0x8000, scoped, tag = 'input window, operand 4']
    #allocation15 [shape = 'u8[32768]{0}', space=vmem, size = 0x8000, scoped, tag = 'input window, operand 5, single buffered']
    #allocation16 [shape = 's32[1]{0}', space=sflag, size = 0x4, scoped, tag = 'scoped memory for tpu_custom_call.1']
    #allocation17 [shape = 'u8[32768]{0}', space=vmem, size = 0x8000, scoped, tag = 'input window, operand 6, single buffered']
    #allocation18 [shape = 'u8[32768]{0}', space=vmem, size = 0x8000, scoped, tag = 'input window, operand 7, single buffered']
    #allocation19 [shape = 's32[1]{0}', space=sflag, size = 0x4, scoped, tag = 'scoped memory for tpu_custom_call.1']
    #allocation20 [shape = 'u8[32768]{0}', space=vmem, size = 0x8000, scoped, tag = 'input window, operand 8, single buffered']
    #allocation21 [shape = 'u8[131072]{0}', space=vmem, size = 0x20000, scoped, tag = 'input window, operand 14, single buffered']
    #allocation22 [shape = 's32[1]{0}', space=sflag, size = 0x4, scoped, tag = 'scoped memory for tpu_custom_call.1']
    #allocation23 [shape = 'u8[131072]{0}', space=vmem, size = 0x20000, scoped, tag = 'input window, operand 16, single buffered']
    #allocation24 [shape = 'u8[8192]{0}', space=vmem, size = 0x2000, scoped, tag = 'output window, operand 0']
    %25 = vsyncpa [#allocation7], 0
    %s26 = scalar_lea.sflag [#allocation7], 1
    %27 = vsyncpa %s26, 0
    %28 = vsyncpa [#allocation10], 0
    %s29 = scalar_lea.sflag [#allocation10], 1
    %30 = vsyncpa %s29, 0
    %31 = vsyncpa [#allocation13], 0
    %s32 = scalar_lea.sflag [#allocation13], 1
    %33 = vsyncpa %s32, 0
    %34 = vsyncpa [#allocation16], 0
    %35 = vsyncpa [#allocation19], 0
    %36 = vsyncpa [#allocation22], 0
    %37 = vsyncpa [#allocation8], 0
    %s38 = scalar_lea.sflag [#allocation8], 1
    %39 = vsyncpa %s38, 0
    loop: start=0, step=1, limit=10
    $region2: #{tpu_custom_call.1} parent=1 // loop_pre_header
      _
    $region3: #{tpu_custom_call.1} parent=1 // loop_header
      %s41 = sphi 0, %s45
      %p42 = scmp.ge.s32.totalorder %s41, 10
      %s48 = sphi 0, %s67
      %s49 = sphi 0, %s63
      %s50 = sphi 0, %s59
      %s51 = sphi 0, %s48
      %s52 = sphi 0, %s49
      %s53 = sphi 0, %s50
      %s54 = sphi 0, %s51
      %s55 = sphi 0, %s52
      %s56 = sphi 0, %s53
      %s72 = sphi 0, %s74
      %s75 = sphi 0, %s72
      %s76 = sphi 0, %s75
      %s92 = sphi 0, %s76
      %s100 = sphi 0, %s102
      %s103 = sphi 0, %s100
      %s104 = sphi 0, %s103
      %s120 = sphi 0, %s104
      %s128 = sphi 0, %s130
      %s131 = sphi 0, %s128
      %s132 = sphi 0, %s131
      %s148 = sphi 0, %s132
      %s156 = sphi 0, %s158
      %s159 = sphi 0, %s156
      %s160 = sphi 0, %s159
      %s176 = sphi 0, %s160
      %s186 = sphi 0, %s188
      %s189 = sphi 0, %s186
      %s190 = sphi 0, %s189
      %s206 = sphi 0, %s190
      %s210 = sphi 0, %s210
      %s212 = sphi 0, %s210
      %s213 = sphi 0, %s212
      %s227 = sphi 0, %s213
      %s231 = sphi 0, %s231
      %s233 = sphi 0, %s231
      %s234 = sphi 0, %s233
      %s248 = sphi 0, %s234
      %s252 = sphi 0, %s252
      %s254 = sphi 0, %s252
      %s255 = sphi 0, %s254
      %s269 = sphi 0, %s255
      %s273 = sphi 0, %s273
      %s275 = sphi 0, %s273
      %s276 = sphi 0, %s275
      %s290 = sphi 0, %s276
      %s294 = sphi 0, %s294
      %s296 = sphi 0, %s294
      %s297 = sphi 0, %s296
      %s311 = sphi 0, %s297
      %s315 = sphi 0, %s315
      %s317 = sphi 0, %s315
      %s318 = sphi 0, %s317
      %s332 = sphi 0, %s318
      %s336 = sphi 0, %s336
      %s338 = sphi 0, %s336
      %s339 = sphi 0, %s338
      %s353 = sphi 0, %s339
      %s357 = sphi 0, %s357
      %s359 = sphi 0, %s357
      %s360 = sphi 0, %s359
      %s374 = sphi 0, %s360
      %s378 = sphi 0, %s378
      %s380 = sphi 0, %s378
      %s381 = sphi 0, %s380
      %s395 = sphi 0, %s381
      %s399 = sphi 0, %s399
      %s401 = sphi 0, %s399
      %s402 = sphi 0, %s401
      %s416 = sphi 0, %s402
      %s420 = sphi 0, %s420
      %s422 = sphi 0, %s420
      %s423 = sphi 0, %s422
      %s437 = sphi 0, %s423
      %s441 = sphi 0, %s441
      %s443 = sphi 0, %s441
      %s444 = sphi 0, %s443
      %s458 = sphi 0, %s444
      %s462 = sphi 0, %s462
      %s464 = sphi 0, %s462
      %s465 = sphi 0, %s464
      %s479 = sphi 0, %s465
      %s483 = sphi 0, %s483
      %s485 = sphi 0, %s483
      %s486 = sphi 0, %s485
      %s500 = sphi 0, %s486
      %s504 = sphi 0, %s504
      %s506 = sphi 0, %s504
      %s507 = sphi 0, %s506
      %s521 = sphi 0, %s507
      %s529 = sphi 0, %s531
      %s532 = sphi 0, %s529
      %s533 = sphi 0, %s532
      %s549 = sphi 0, %s533
    $region4: #{tpu_custom_call.1} parent=1 // loop_header_branch
      %44 = sbr.rel (%p42) target = $region8
    $region5: #{tpu_custom_call.1} parent=1 // loop_body
      %s46 = ssub.s32 %s41, 1
      %s47 = ssub.s32 %s41, 2
      %s57 = sadd.s32 1, %s50
      %p58 = scmp.ge.s32.totalorder %s57, 2
      %s59 = scalar_select %p58, 0, %s57
      %s60 = sadd.s32 1, %s49
      %s61 = scalar_select %p58, %s60, %s49
      %p62 = scmp.ge.s32.totalorder %s61, 2
      %s63 = scalar_select %p62, 0, %s61
      %s64 = sadd.s32 1, %s48
      %s65 = scalar_select %p62, %s64, %s48
      %p66 = scmp.ge.s32.totalorder %s65, 2
      %s67 = scalar_select %p66, 0, %s65
      %s68 = ssub.s32 %s48, %s67
      %s69 = ssub.s32 %s49, %s63
      %s70 = sor.u32 %s68, %s69
      %p71 = scmp.eq.s32.totalorder %s70, 0
      %s73 = sadd.s32 %s72, 1
      %s74 = scalar_select %p71, %s72, %s73
      %p77 = pneg %p71
      %p78 = scmp.eq.s32.totalorder %s41, 7
      %p79 = por %p77, %p78
      %p80 = scmp.ne.s32.totalorder %s72, %s75
      %p81 = scmp.eq.s32.totalorder %s41, 0
      %p82 = por %p80, %p81
      %p83 = scmp.ne.s32.totalorder %s72, %s75
      %p84 = scmp.eq.s32.totalorder %s46, 7
      %p85 = por %p83, %p84
      %p86 = scmp.ne.s32.totalorder %s75, %s76
      %p87 = scmp.eq.s32.totalorder %s46, 0
      %p88 = por %p86, %p87
      %p89 = scmp.ne.s32.totalorder %s75, %s76
      %p90 = scmp.eq.s32.totalorder %s47, 7
      %p91 = por %p89, %p90
      %p93 = scmp.ne.s32.totalorder %s76, %s92
      %p94 = scmp.eq.s32.totalorder %s47, 0
      %p95 = por %p93, %p94
      %s96 = ssub.s32 %s48, %s67
      %s97 = ssub.s32 %s50, %s59
      %s98 = sor.u32 %s96, %s97
      %p99 = scmp.eq.s32.totalorder %s98, 0
      %s101 = sadd.s32 %s100, 1
      %s102 = scalar_select %p99, %s100, %s101
      %p105 = pneg %p99
      %p106 = scmp.eq.s32.totalorder %s41, 7
      %p107 = por %p105, %p106
      %p108 = scmp.ne.s32.totalorder %s100, %s103
      %p109 = scmp.eq.s32.totalorder %s41, 0
      %p110 = por %p108, %p109
      %p111 = scmp.ne.s32.totalorder %s100, %s103
      %p112 = scmp.eq.s32.totalorder %s46, 7
      %p113 = por %p111, %p112
      %p114 = scmp.ne.s32.totalorder %s103, %s104
      %p115 = scmp.eq.s32.totalorder %s46, 0
      %p116 = por %p114, %p115
      %p117 = scmp.ne.s32.totalorder %s103, %s104
      %p118 = scmp.eq.s32.totalorder %s47, 7
      %p119 = por %p117, %p118
      %p121 = scmp.ne.s32.totalorder %s104, %s120
      %p122 = scmp.eq.s32.totalorder %s47, 0
      %p123 = por %p121, %p122
      %s124 = ssub.s32 %s48, %s67
      %s125 = ssub.s32 %s49, %s63
      %s126 = sor.u32 %s124, %s125
      %p127 = scmp.eq.s32.totalorder %s126, 0
      %s129 = sadd.s32 %s128, 1
      %s130 = scalar_select %p127, %s128, %s129
      %p133 = pneg %p127
      %p134 = scmp.eq.s32.totalorder %s41, 7
      %p135 = por %p133, %p134
      %p136 = scmp.ne.s32.totalorder %s128, %s131
      %p137 = scmp.eq.s32.totalorder %s41, 0
      %p138 = por %p136, %p137
      %p139 = scmp.ne.s32.totalorder %s128, %s131
      %p140 = scmp.eq.s32.totalorder %s46, 7
      %p141 = por %p139, %p140
      %p142 = scmp.ne.s32.totalorder %s131, %s132
      %p143 = scmp.eq.s32.totalorder %s46, 0
      %p144 = por %p142, %p143
      %p145 = scmp.ne.s32.totalorder %s131, %s132
      %p146 = scmp.eq.s32.totalorder %s47, 7
      %p147 = por %p145, %p146
      %p149 = scmp.ne.s32.totalorder %s132, %s148
      %p150 = scmp.eq.s32.totalorder %s47, 0
      %p151 = por %p149, %p150
      %s152 = ssub.s32 %s48, %s67
      %s153 = ssub.s32 %s50, %s59
      %s154 = sor.u32 %s152, %s153
      %p155 = scmp.eq.s32.totalorder %s154, 0
      %s157 = sadd.s32 %s156, 1
      %s158 = scalar_select %p155, %s156, %s157
      %p161 = pneg %p155
      %p162 = scmp.eq.s32.totalorder %s41, 7
      %p163 = por %p161, %p162
      %p164 = scmp.ne.s32.totalorder %s156, %s159
      %p165 = scmp.eq.s32.totalorder %s41, 0
      %p166 = por %p164, %p165
      %p167 = scmp.ne.s32.totalorder %s156, %s159
      %p168 = scmp.eq.s32.totalorder %s46, 7
      %p169 = por %p167, %p168
      %p170 = scmp.ne.s32.totalorder %s159, %s160
      %p171 = scmp.eq.s32.totalorder %s46, 0
      %p172 = por %p170, %p171
      %p173 = scmp.ne.s32.totalorder %s159, %s160
      %p174 = scmp.eq.s32.totalorder %s47, 7
      %p175 = por %p173, %p174
      %p177 = scmp.ne.s32.totalorder %s160, %s176
      %p178 = scmp.eq.s32.totalorder %s47, 0
      %p179 = por %p177, %p178
      %s180 = ssub.s32 %s48, %s67
      %s181 = ssub.s32 %s49, %s63
      %s182 = sor.u32 %s180, %s181
      %s183 = ssub.s32 %s50, %s59
      %s184 = sor.u32 %s182, %s183
      %p185 = scmp.eq.s32.totalorder %s184, 0
      %s187 = sadd.s32 %s186, 1
      %s188 = scalar_select %p185, %s186, %s187
      %p191 = pneg %p185
      %p192 = scmp.eq.s32.totalorder %s41, 7
      %p193 = por %p191, %p192
      %p194 = scmp.ne.s32.totalorder %s186, %s189
      %p195 = scmp.eq.s32.totalorder %s41, 0
      %p196 = por %p194, %p195
      %p197 = scmp.ne.s32.totalorder %s186, %s189
      %p198 = scmp.eq.s32.totalorder %s46, 7
      %p199 = por %p197, %p198
      %p200 = scmp.ne.s32.totalorder %s189, %s190
      %p201 = scmp.eq.s32.totalorder %s46, 0
      %p202 = por %p200, %p201
      %p203 = scmp.ne.s32.totalorder %s189, %s190
      %p204 = scmp.eq.s32.totalorder %s47, 7
      %p205 = por %p203, %p204
      %p207 = scmp.ne.s32.totalorder %s190, %s206
      %p208 = scmp.eq.s32.totalorder %s47, 0
      %p209 = por %p207, %p208
      %s211 = sadd.s32 %s210, 1
      %p214 = scmp.eq.s32.totalorder %s41, 7
      %p215 = scmp.ne.s32.totalorder %s210, %s212
      %p216 = scmp.eq.s32.totalorder %s41, 0
      %p217 = por %p215, %p216
      %p218 = scmp.ne.s32.totalorder %s210, %s212
      %p219 = scmp.eq.s32.totalorder %s46, 7
      %p220 = por %p218, %p219
      %p221 = scmp.ne.s32.totalorder %s212, %s213
      %p222 = scmp.eq.s32.totalorder %s46, 0
      %p223 = por %p221, %p222
      %p224 = scmp.ne.s32.totalorder %s212, %s213
      %p225 = scmp.eq.s32.totalorder %s47, 7
      %p226 = por %p224, %p225
      %p228 = scmp.ne.s32.totalorder %s213, %s227
      %p229 = scmp.eq.s32.totalorder %s47, 0
      %p230 = por %p228, %p229
      %s232 = sadd.s32 %s231, 1
      %p235 = scmp.eq.s32.totalorder %s41, 7
      %p236 = scmp.ne.s32.totalorder %s231, %s233
      %p237 = scmp.eq.s32.totalorder %s41, 0
      %p238 = por %p236, %p237
      %p239 = scmp.ne.s32.totalorder %s231, %s233
      %p240 = scmp.eq.s32.totalorder %s46, 7
      %p241 = por %p239, %p240
      %p242 = scmp.ne.s32.totalorder %s233, %s234
      %p243 = scmp.eq.s32.totalorder %s46, 0
      %p244 = por %p242, %p243
      %p245 = scmp.ne.s32.totalorder %s233, %s234
      %p246 = scmp.eq.s32.totalorder %s47, 7
      %p247 = por %p245, %p246
      %p249 = scmp.ne.s32.totalorder %s234, %s248
      %p250 = scmp.eq.s32.totalorder %s47, 0
      %p251 = por %p249, %p250
      %s253 = sadd.s32 %s252, 1
      %p256 = scmp.eq.s32.totalorder %s41, 7
      %p257 = scmp.ne.s32.totalorder %s252, %s254
      %p258 = scmp.eq.s32.totalorder %s41, 0
      %p259 = por %p257, %p258
      %p260 = scmp.ne.s32.totalorder %s252, %s254
      %p261 = scmp.eq.s32.totalorder %s46, 7
      %p262 = por %p260, %p261
      %p263 = scmp.ne.s32.totalorder %s254, %s255
      %p264 = scmp.eq.s32.totalorder %s46, 0
      %p265 = por %p263, %p264
      %p266 = scmp.ne.s32.totalorder %s254, %s255
      %p267 = scmp.eq.s32.totalorder %s47, 7
      %p268 = por %p266, %p267
      %p270 = scmp.ne.s32.totalorder %s255, %s269
      %p271 = scmp.eq.s32.totalorder %s47, 0
      %p272 = por %p270, %p271
      %s274 = sadd.s32 %s273, 1
      %p277 = scmp.eq.s32.totalorder %s41, 7
      %p278 = scmp.ne.s32.totalorder %s273, %s275
      %p279 = scmp.eq.s32.totalorder %s41, 0
      %p280 = por %p278, %p279
      %p281 = scmp.ne.s32.totalorder %s273, %s275
      %p282 = scmp.eq.s32.totalorder %s46, 7
      %p283 = por %p281, %p282
      %p284 = scmp.ne.s32.totalorder %s275, %s276
      %p285 = scmp.eq.s32.totalorder %s46, 0
      %p286 = por %p284, %p285
      %p287 = scmp.ne.s32.totalorder %s275, %s276
      %p288 = scmp.eq.s32.totalorder %s47, 7
      %p289 = por %p287, %p288
      %p291 = scmp.ne.s32.totalorder %s276, %s290
      %p292 = scmp.eq.s32.totalorder %s47, 0
      %p293 = por %p291, %p292
      %s295 = sadd.s32 %s294, 1
      %p298 = scmp.eq.s32.totalorder %s41, 7
      %p299 = scmp.ne.s32.totalorder %s294, %s296
      %p300 = scmp.eq.s32.totalorder %s41, 0
      %p301 = por %p299, %p300
      %p302 = scmp.ne.s32.totalorder %s294, %s296
      %p303 = scmp.eq.s32.totalorder %s46, 7
      %p304 = por %p302, %p303
      %p305 = scmp.ne.s32.totalorder %s296, %s297
      %p306 = scmp.eq.s32.totalorder %s46, 0
      %p307 = por %p305, %p306
      %p308 = scmp.ne.s32.totalorder %s296, %s297
      %p309 = scmp.eq.s32.totalorder %s47, 7
      %p310 = por %p308, %p309
      %p312 = scmp.ne.s32.totalorder %s297, %s311
      %p313 = scmp.eq.s32.totalorder %s47, 0
      %p314 = por %p312, %p313
      %s316 = sadd.s32 %s315, 1
      %p319 = scmp.eq.s32.totalorder %s41, 7
      %p320 = scmp.ne.s32.totalorder %s315, %s317
      %p321 = scmp.eq.s32.totalorder %s41, 0
      %p322 = por %p320, %p321
      %p323 = scmp.ne.s32.totalorder %s315, %s317
      %p324 = scmp.eq.s32.totalorder %s46, 7
      %p325 = por %p323, %p324
      %p326 = scmp.ne.s32.totalorder %s317, %s318
      %p327 = scmp.eq.s32.totalorder %s46, 0
      %p328 = por %p326, %p327
      %p329 = scmp.ne.s32.totalorder %s317, %s318
      %p330 = scmp.eq.s32.totalorder %s47, 7
      %p331 = por %p329, %p330
      %p333 = scmp.ne.s32.totalorder %s318, %s332
      %p334 = scmp.eq.s32.totalorder %s47, 0
      %p335 = por %p333, %p334
      %s337 = sadd.s32 %s336, 1
      %p340 = scmp.eq.s32.totalorder %s41, 7
      %p341 = scmp.ne.s32.totalorder %s336, %s338
      %p342 = scmp.eq.s32.totalorder %s41, 0
      %p343 = por %p341, %p342
      %p344 = scmp.ne.s32.totalorder %s336, %s338
      %p345 = scmp.eq.s32.totalorder %s46, 7
      %p346 = por %p344, %p345
      %p347 = scmp.ne.s32.totalorder %s338, %s339
      %p348 = scmp.eq.s32.totalorder %s46, 0
      %p349 = por %p347, %p348
      %p350 = scmp.ne.s32.totalorder %s338, %s339
      %p351 = scmp.eq.s32.totalorder %s47, 7
      %p352 = por %p350, %p351
      %p354 = scmp.ne.s32.totalorder %s339, %s353
      %p355 = scmp.eq.s32.totalorder %s47, 0
      %p356 = por %p354, %p355
      %s358 = sadd.s32 %s357, 1
      %p361 = scmp.eq.s32.totalorder %s41, 7
      %p362 = scmp.ne.s32.totalorder %s357, %s359
      %p363 = scmp.eq.s32.totalorder %s41, 0
      %p364 = por %p362, %p363
      %p365 = scmp.ne.s32.totalorder %s357, %s359
      %p366 = scmp.eq.s32.totalorder %s46, 7
      %p367 = por %p365, %p366
      %p368 = scmp.ne.s32.totalorder %s359, %s360
      %p369 = scmp.eq.s32.totalorder %s46, 0
      %p370 = por %p368, %p369
      %p371 = scmp.ne.s32.totalorder %s359, %s360
      %p372 = scmp.eq.s32.totalorder %s47, 7
      %p373 = por %p371, %p372
      %p375 = scmp.ne.s32.totalorder %s360, %s374
      %p376 = scmp.eq.s32.totalorder %s47, 0
      %p377 = por %p375, %p376
      %s379 = sadd.s32 %s378, 1
      %p382 = scmp.eq.s32.totalorder %s41, 7
      %p383 = scmp.ne.s32.totalorder %s378, %s380
      %p384 = scmp.eq.s32.totalorder %s41, 0
      %p385 = por %p383, %p384
      %p386 = scmp.ne.s32.totalorder %s378, %s380
      %p387 = scmp.eq.s32.totalorder %s46, 7
      %p388 = por %p386, %p387
      %p389 = scmp.ne.s32.totalorder %s380, %s381
      %p390 = scmp.eq.s32.totalorder %s46, 0
      %p391 = por %p389, %p390
      %p392 = scmp.ne.s32.totalorder %s380, %s381
      %p393 = scmp.eq.s32.totalorder %s47, 7
      %p394 = por %p392, %p393
      %p396 = scmp.ne.s32.totalorder %s381, %s395
      %p397 = scmp.eq.s32.totalorder %s47, 0
      %p398 = por %p396, %p397
      %s400 = sadd.s32 %s399, 1
      %p403 = scmp.eq.s32.totalorder %s41, 7
      %p404 = scmp.ne.s32.totalorder %s399, %s401
      %p405 = scmp.eq.s32.totalorder %s41, 0
      %p406 = por %p404, %p405
      %p407 = scmp.ne.s32.totalorder %s399, %s401
      %p408 = scmp.eq.s32.totalorder %s46, 7
      %p409 = por %p407, %p408
      %p410 = scmp.ne.s32.totalorder %s401, %s402
      %p411 = scmp.eq.s32.totalorder %s46, 0
      %p412 = por %p410, %p411
      %p413 = scmp.ne.s32.totalorder %s401, %s402
      %p414 = scmp.eq.s32.totalorder %s47, 7
      %p415 = por %p413, %p414
      %p417 = scmp.ne.s32.totalorder %s402, %s416
      %p418 = scmp.eq.s32.totalorder %s47, 0
      %p419 = por %p417, %p418
      %s421 = sadd.s32 %s420, 1
      %p424 = scmp.eq.s32.totalorder %s41, 7
      %p425 = scmp.ne.s32.totalorder %s420, %s422
      %p426 = scmp.eq.s32.totalorder %s41, 0
      %p427 = por %p425, %p426
      %p428 = scmp.ne.s32.totalorder %s420, %s422
      %p429 = scmp.eq.s32.totalorder %s46, 7
      %p430 = por %p428, %p429
      %p431 = scmp.ne.s32.totalorder %s422, %s423
      %p432 = scmp.eq.s32.totalorder %s46, 0
      %p433 = por %p431, %p432
      %p434 = scmp.ne.s32.totalorder %s422, %s423
      %p435 = scmp.eq.s32.totalorder %s47, 7
      %p436 = por %p434, %p435
      %p438 = scmp.ne.s32.totalorder %s423, %s437
      %p439 = scmp.eq.s32.totalorder %s47, 0
      %p440 = por %p438, %p439
      %s442 = sadd.s32 %s441, 1
      %p445 = scmp.eq.s32.totalorder %s41, 7
      %p446 = scmp.ne.s32.totalorder %s441, %s443
      %p447 = scmp.eq.s32.totalorder %s41, 0
      %p448 = por %p446, %p447
      %p449 = scmp.ne.s32.totalorder %s441, %s443
      %p450 = scmp.eq.s32.totalorder %s46, 7
      %p451 = por %p449, %p450
      %p452 = scmp.ne.s32.totalorder %s443, %s444
      %p453 = scmp.eq.s32.totalorder %s46, 0
      %p454 = por %p452, %p453
      %p455 = scmp.ne.s32.totalorder %s443, %s444
      %p456 = scmp.eq.s32.totalorder %s47, 7
      %p457 = por %p455, %p456
      %p459 = scmp.ne.s32.totalorder %s444, %s458
      %p460 = scmp.eq.s32.totalorder %s47, 0
      %p461 = por %p459, %p460
      %s463 = sadd.s32 %s462, 1
      %p466 = scmp.eq.s32.totalorder %s41, 7
      %p467 = scmp.ne.s32.totalorder %s462, %s464
      %p468 = scmp.eq.s32.totalorder %s41, 0
      %p469 = por %p467, %p468
      %p470 = scmp.ne.s32.totalorder %s462, %s464
      %p471 = scmp.eq.s32.totalorder %s46, 7
      %p472 = por %p470, %p471
      %p473 = scmp.ne.s32.totalorder %s464, %s465
      %p474 = scmp.eq.s32.totalorder %s46, 0
      %p475 = por %p473, %p474
      %p476 = scmp.ne.s32.totalorder %s464, %s465
      %p477 = scmp.eq.s32.totalorder %s47, 7
      %p478 = por %p476, %p477
      %p480 = scmp.ne.s32.totalorder %s465, %s479
      %p481 = scmp.eq.s32.totalorder %s47, 0
      %p482 = por %p480, %p481
      %s484 = sadd.s32 %s483, 1
      %p487 = scmp.eq.s32.totalorder %s41, 7
      %p488 = scmp.ne.s32.totalorder %s483, %s485
      %p489 = scmp.eq.s32.totalorder %s41, 0
      %p490 = por %p488, %p489
      %p491 = scmp.ne.s32.totalorder %s483, %s485
      %p492 = scmp.eq.s32.totalorder %s46, 7
      %p493 = por %p491, %p492
      %p494 = scmp.ne.s32.totalorder %s485, %s486
      %p495 = scmp.eq.s32.totalorder %s46, 0
      %p496 = por %p494, %p495
      %p497 = scmp.ne.s32.totalorder %s485, %s486
      %p498 = scmp.eq.s32.totalorder %s47, 7
      %p499 = por %p497, %p498
      %p501 = scmp.ne.s32.totalorder %s486, %s500
      %p502 = scmp.eq.s32.totalorder %s47, 0
      %p503 = por %p501, %p502
      %s505 = sadd.s32 %s504, 1
      %p508 = scmp.eq.s32.totalorder %s41, 7
      %p509 = scmp.ne.s32.totalorder %s504, %s506
      %p510 = scmp.eq.s32.totalorder %s41, 0
      %p511 = por %p509, %p510
      %p512 = scmp.ne.s32.totalorder %s504, %s506
      %p513 = scmp.eq.s32.totalorder %s46, 7
      %p514 = por %p512, %p513
      %p515 = scmp.ne.s32.totalorder %s506, %s507
      %p516 = scmp.eq.s32.totalorder %s46, 0
      %p517 = por %p515, %p516
      %p518 = scmp.ne.s32.totalorder %s506, %s507
      %p519 = scmp.eq.s32.totalorder %s47, 7
      %p520 = por %p518, %p519
      %p522 = scmp.ne.s32.totalorder %s507, %s521
      %p523 = scmp.eq.s32.totalorder %s47, 0
      %p524 = por %p522, %p523
      %s525 = ssub.s32 %s48, %s67
      %s526 = ssub.s32 %s49, %s63
      %s527 = sor.u32 %s525, %s526
      %p528 = scmp.eq.s32.totalorder %s527, 0
      %s530 = sadd.s32 %s529, 1
      %s531 = scalar_select %p528, %s529, %s530
      %p534 = pneg %p528
      %p535 = scmp.eq.s32.totalorder %s41, 7
      %p536 = por %p534, %p535
      %p537 = scmp.ne.s32.totalorder %s529, %s532
      %p538 = scmp.eq.s32.totalorder %s41, 0
      %p539 = por %p537, %p538
      %p540 = scmp.ne.s32.totalorder %s529, %s532
      %p541 = scmp.eq.s32.totalorder %s46, 7
      %p542 = por %p540, %p541
      %p543 = scmp.ne.s32.totalorder %s532, %s533
      %p544 = scmp.eq.s32.totalorder %s46, 0
      %p545 = por %p543, %p544
      %p546 = scmp.ne.s32.totalorder %s532, %s533
      %p547 = scmp.eq.s32.totalorder %s47, 7
      %p548 = por %p546, %p547
      %p550 = scmp.ne.s32.totalorder %s533, %s549
      %p551 = scmp.eq.s32.totalorder %s47, 0
      %p552 = por %p550, %p551
      %p553 = scmp.le.s32.totalorder 1, %s41
      %p554 = scmp.lt.s32.totalorder %s41, 9
      %p555 = pnand %p553, %p554
      %p556 = pneg %p555
      // Predicated region
      $region9: #{tpu_custom_call.1} parent=5 // pred_check
        _
      $region10: #{tpu_custom_call.1} parent=5 // pred_check_branch
        %558 = sbr.rel (%p555) target = $region12
      $region11: #{tpu_custom_call.1} parent=5 // pred_region
        %s559 = ssub.s32 %s41, 1
        // Predicated region
        $region13: #{tpu_custom_call.1} parent=11 // pred_check
          %p560 = pneg %p223
        $region14: #{tpu_custom_call.1} parent=11 // pred_check_branch
          %562 = sbr.rel (%p560) target = $region16
        $region15: #{tpu_custom_call.1} parent=11 // pred_region
          %564 = vsyncadd [#allocation16], 0
          %s565 = sshll.u32 %s5, 4
          %s566 = int_to_ptr.hbm [resolvable:$true] %s565
          %s567 = sshll.u32 [#allocation15], 4
          %s568 = int_to_ptr.vmem [resolvable:$true] %s567
          %573 = dma.hbm_to_vmem [thread:$0]  %s566, 1024, %s568, [#allocation16], 64, 64, 4
        $region16: #{tpu_custom_call.1} parent=11 // pred_fallthru
          _
        // Predicated region
        $region17: #{tpu_custom_call.1} parent=11 // pred_check
          %p574 = pneg %p244
        $region18: #{tpu_custom_call.1} parent=11 // pred_check_branch
          %576 = sbr.rel (%p574) target = $region20
        $region19: #{tpu_custom_call.1} parent=11 // pred_region
          %578 = vsyncadd [#allocation16], 0
          %s579 = sshll.u32 %s6, 4
          %s580 = int_to_ptr.hbm [resolvable:$true] %s579
          %s581 = sshll.u32 [#allocation17], 4
          %s582 = int_to_ptr.vmem [resolvable:$true] %s581
          %587 = dma.hbm_to_vmem [thread:$0]  %s580, 1024, %s582, [#allocation16], 64, 64, 4
        $region20: #{tpu_custom_call.1} parent=11 // pred_fallthru
          _
        // Predicated region
        $region21: #{tpu_custom_call.1} parent=11 // pred_check
          %p588 = pneg %p265
        $region22: #{tpu_custom_call.1} parent=11 // pred_check_branch
          %590 = sbr.rel (%p588) target = $region24
        $region23: #{tpu_custom_call.1} parent=11 // pred_region
          %592 = vsyncadd [#allocation19], 0
          %s593 = sshll.u32 %s7, 4
          %s594 = int_to_ptr.hbm [resolvable:$true] %s593
          %s595 = sshll.u32 [#allocation18], 4
          %s596 = int_to_ptr.vmem [resolvable:$true] %s595
          %601 = dma.hbm_to_vmem [thread:$0]  %s594, 1024, %s596, [#allocation19], 64, 64, 4
        $region24: #{tpu_custom_call.1} parent=11 // pred_fallthru
          _
        // Predicated region
        $region25: #{tpu_custom_call.1} parent=11 // pred_check
          %p602 = pneg %p286
        $region26: #{tpu_custom_call.1} parent=11 // pred_check_branch
          %604 = sbr.rel (%p602) target = $region28
        $region27: #{tpu_custom_call.1} parent=11 // pred_region
          %606 = vsyncadd [#allocation19], 0
          %s607 = sshll.u32 %s8, 4
          %s608 = int_to_ptr.hbm [resolvable:$true] %s607
          %s609 = sshll.u32 [#allocation20], 4
          %s610 = int_to_ptr.vmem [resolvable:$true] %s609
          %615 = dma.hbm_to_vmem [thread:$0]  %s608, 1024, %s610, [#allocation19], 64, 64, 4
        $region28: #{tpu_custom_call.1} parent=11 // pred_fallthru
          _
        // Predicated region
        $region29: #{tpu_custom_call.1} parent=11 // pred_check
          %p616 = pneg %p307
        $region30: #{tpu_custom_call.1} parent=11 // pred_check_branch
          %618 = sbr.rel (%p616) target = $region32
        $region31: #{tpu_custom_call.1} parent=11 // pred_region
          _
        $region32: #{tpu_custom_call.1} parent=11 // pred_fallthru
          _
        // Predicated region
        $region33: #{tpu_custom_call.1} parent=11 // pred_check
          %p619 = pneg %p328
        $region34: #{tpu_custom_call.1} parent=11 // pred_check_branch
          %621 = sbr.rel (%p619) target = $region36
        $region35: #{tpu_custom_call.1} parent=11 // pred_region
          _
        $region36: #{tpu_custom_call.1} parent=11 // pred_fallthru
          _
        // Predicated region
        $region37: #{tpu_custom_call.1} parent=11 // pred_check
          %p622 = pneg %p349
        $region38: #{tpu_custom_call.1} parent=11 // pred_check_branch
          %624 = sbr.rel (%p622) target = $region40
        $region39: #{tpu_custom_call.1} parent=11 // pred_region
          _
        $region40: #{tpu_custom_call.1} parent=11 // pred_fallthru
          _
        // Predicated region
        $region41: #{tpu_custom_call.1} parent=11 // pred_check
          %p625 = pneg %p370
        $region42: #{tpu_custom_call.1} parent=11 // pred_check_branch
          %627 = sbr.rel (%p625) target = $region44
        $region43: #{tpu_custom_call.1} parent=11 // pred_region
          _
        $region44: #{tpu_custom_call.1} parent=11 // pred_fallthru
          _
        // Predicated region
        $region45: #{tpu_custom_call.1} parent=11 // pred_check
          %p628 = pneg %p391
        $region46: #{tpu_custom_call.1} parent=11 // pred_check_branch
          %630 = sbr.rel (%p628) target = $region48
        $region47: #{tpu_custom_call.1} parent=11 // pred_region
          _
        $region48: #{tpu_custom_call.1} parent=11 // pred_fallthru
          _
        // Predicated region
        $region49: #{tpu_custom_call.1} parent=11 // pred_check
          %p631 = pneg %p412
        $region50: #{tpu_custom_call.1} parent=11 // pred_check_branch
          %633 = sbr.rel (%p631) target = $region52
        $region51: #{tpu_custom_call.1} parent=11 // pred_region
          %635 = vsyncadd [#allocation22], 0
          %s636 = sshll.u32 %s14, 4
          %s637 = int_to_ptr.hbm [resolvable:$true] %s636
          %s638 = sshll.u32 [#allocation21], 4
          %s639 = int_to_ptr.vmem [resolvable:$true] %s638
          %644 = dma.hbm_to_vmem [thread:$0]  %s637, 4096, %s639, [#allocation22], 256, 256, 16
        $region52: #{tpu_custom_call.1} parent=11 // pred_fallthru
          _
        // Predicated region
        $region53: #{tpu_custom_call.1} parent=11 // pred_check
          %p645 = pneg %p433
        $region54: #{tpu_custom_call.1} parent=11 // pred_check_branch
          %647 = sbr.rel (%p645) target = $region56
        $region55: #{tpu_custom_call.1} parent=11 // pred_region
          _
        $region56: #{tpu_custom_call.1} parent=11 // pred_fallthru
          _
        // Predicated region
        $region57: #{tpu_custom_call.1} parent=11 // pred_check
          %p648 = pneg %p454
        $region58: #{tpu_custom_call.1} parent=11 // pred_check_branch
          %650 = sbr.rel (%p648) target = $region60
        $region59: #{tpu_custom_call.1} parent=11 // pred_region
          %652 = vsyncadd [#allocation22], 0
          %s653 = sshll.u32 %s16, 4
          %s654 = int_to_ptr.hbm [resolvable:$true] %s653
          %s655 = sshll.u32 [#allocation23], 4
          %s656 = int_to_ptr.vmem [resolvable:$true] %s655
          %661 = dma.hbm_to_vmem [thread:$0]  %s654, 4096, %s656, [#allocation22], 64, 64, 4
        $region60: #{tpu_custom_call.1} parent=11 // pred_fallthru
          _
        // Predicated region
        $region61: #{tpu_custom_call.1} parent=11 // pred_check
          %p662 = pneg %p475
        $region62: #{tpu_custom_call.1} parent=11 // pred_check_branch
          %664 = sbr.rel (%p662) target = $region64
        $region63: #{tpu_custom_call.1} parent=11 // pred_region
          _
        $region64: #{tpu_custom_call.1} parent=11 // pred_fallthru
          _
        // Predicated region
        $region65: #{tpu_custom_call.1} parent=11 // pred_check
          %p665 = pneg %p496
        $region66: #{tpu_custom_call.1} parent=11 // pred_check_branch
          %667 = sbr.rel (%p665) target = $region68
        $region67: #{tpu_custom_call.1} parent=11 // pred_region
          _
        $region68: #{tpu_custom_call.1} parent=11 // pred_fallthru
          _
        // Predicated region
        $region69: #{tpu_custom_call.1} parent=11 // pred_check
          %p668 = pneg %p517
        $region70: #{tpu_custom_call.1} parent=11 // pred_check_branch
          %670 = sbr.rel (%p668) target = $region72
        $region71: #{tpu_custom_call.1} parent=11 // pred_region
          _
        $region72: #{tpu_custom_call.1} parent=11 // pred_fallthru
          _
      $region12: #{tpu_custom_call.1} parent=5 // pred_fallthru
        _
      %p671 = scmp.lt.s32.totalorder %s41, 8
      // Predicated region
      $region73: #{tpu_custom_call.1} parent=5 // pred_check
        %p672 = pneg %p671
      $region74: #{tpu_custom_call.1} parent=5 // pred_check_branch
        %674 = sbr.rel (%p672) target = $region76
      $region75: #{tpu_custom_call.1} parent=5 // pred_region
        // Predicated region
        $region77: #{tpu_custom_call.1} parent=75 // pred_check
          %p675 = pneg %p82
        $region78: #{tpu_custom_call.1} parent=75 // pred_check_branch
          %677 = sbr.rel (%p675) target = $region80
        $region79: #{tpu_custom_call.1} parent=75 // pred_region
          %s678 = sand.u32 %s72, 1
          %s679 = scalar_lea.sflag [#allocation7], %s678
          %s680 = sand.u32 %s72, 1
          %s681 = smul.addr %s680, 8
          %s682 = scalar_lea.vmem [#allocation6], %s681
          %684 = vsyncadd %s679, 0
          %s685 = smul.addr %s48, 2
          %s686 = sadd.s32 %s49, %s685
          %s687 = smul.addr %s686, 8
          %s688 = scalar_lea.hbm %s0, %s687
          %s690 = sshll.u32 %s688, 4
          %s691 = int_to_ptr.hbm [resolvable:$true] %s690
          %s692 = sshll.u32 %s682, 4
          %s693 = int_to_ptr.vmem [resolvable:$true] %s692
          %695 = dma.hbm_to_vmem [thread:$0]  %s691, 128, %s693, %s679
        $region80: #{tpu_custom_call.1} parent=75 // pred_fallthru
          _
        // Predicated region
        $region81: #{tpu_custom_call.1} parent=75 // pred_check
          %p696 = pneg %p110
        $region82: #{tpu_custom_call.1} parent=75 // pred_check_branch
          %698 = sbr.rel (%p696) target = $region84
        $region83: #{tpu_custom_call.1} parent=75 // pred_region
          %s699 = sand.u32 %s41, 1
          %s700 = scalar_lea.sflag [#allocation10], %s699
          %s701 = sand.u32 %s100, 1
          %s702 = smul.addr %s701, 8
          %s703 = scalar_lea.vmem [#allocation9], %s702
          %705 = vsyncadd %s700, 0
          %s706 = smul.addr %s48, 2
          %s707 = sadd.s32 %s50, %s706
          %s708 = smul.addr %s707, 8
          %s709 = scalar_lea.hbm %s1, %s708
          %s711 = sshll.u32 %s709, 4
          %s712 = int_to_ptr.hbm [resolvable:$true] %s711
          %s713 = sshll.u32 %s703, 4
          %s714 = int_to_ptr.vmem [resolvable:$true] %s713
          %716 = dma.hbm_to_vmem [thread:$0]  %s712, 128, %s714, %s700
        $region84: #{tpu_custom_call.1} parent=75 // pred_fallthru
          _
        // Predicated region
        $region85: #{tpu_custom_call.1} parent=75 // pred_check
          %p717 = pneg %p138
        $region86: #{tpu_custom_call.1} parent=75 // pred_check_branch
          %719 = sbr.rel (%p717) target = $region88
        $region87: #{tpu_custom_call.1} parent=75 // pred_region
          %s720 = sand.u32 %s41, 1
          %s721 = scalar_lea.sflag [#allocation10], %s720
          %s722 = sand.u32 %s128, 1
          %s723 = smul.addr %s722, 8
          %s724 = scalar_lea.vmem [#allocation11], %s723
          %726 = vsyncadd %s721, 0
          %s727 = smul.addr %s48, 2
          %s728 = sadd.s32 %s49, %s727
          %s729 = smul.addr %s728, 8
          %s730 = scalar_lea.hbm %s2, %s729
          %s732 = sshll.u32 %s730, 4
          %s733 = int_to_ptr.hbm [resolvable:$true] %s732
          %s734 = sshll.u32 %s724, 4
          %s735 = int_to_ptr.vmem [resolvable:$true] %s734
          %737 = dma.hbm_to_vmem [thread:$0]  %s733, 128, %s735, %s721
        $region88: #{tpu_custom_call.1} parent=75 // pred_fallthru
          _
        // Predicated region
        $region89: #{tpu_custom_call.1} parent=75 // pred_check
          %p738 = pneg %p166
        $region90: #{tpu_custom_call.1} parent=75 // pred_check_branch
          %740 = sbr.rel (%p738) target = $region92
        $region91: #{tpu_custom_call.1} parent=75 // pred_region
          %s741 = sand.u32 %s41, 1
          %s742 = scalar_lea.sflag [#allocation13], %s741
          %s743 = sand.u32 %s156, 1
          %s744 = smul.addr %s743, 8
          %s745 = scalar_lea.vmem [#allocation12], %s744
          %747 = vsyncadd %s742, 0
          %s748 = smul.addr %s48, 2
          %s749 = sadd.s32 %s50, %s748
          %s750 = smul.addr %s749, 8
          %s751 = scalar_lea.hbm %s3, %s750
          %s753 = sshll.u32 %s751, 4
          %s754 = int_to_ptr.hbm [resolvable:$true] %s753
          %s755 = sshll.u32 %s745, 4
          %s756 = int_to_ptr.vmem [resolvable:$true] %s755
          %758 = dma.hbm_to_vmem [thread:$0]  %s754, 128, %s756, %s742
        $region92: #{tpu_custom_call.1} parent=75 // pred_fallthru
          _
        // Predicated region
        $region93: #{tpu_custom_call.1} parent=75 // pred_check
          %p759 = pneg %p196
        $region94: #{tpu_custom_call.1} parent=75 // pred_check_branch
          %761 = sbr.rel (%p759) target = $region96
        $region95: #{tpu_custom_call.1} parent=75 // pred_region
          %s762 = sand.u32 %s41, 1
          %s763 = scalar_lea.sflag [#allocation13], %s762
          %s764 = sand.u32 %s186, 1
          %s765 = smul.addr %s764, 32
          %s766 = scalar_lea.vmem [#allocation14], %s765
          %s767 = smul.u32 8, %s49
          %769 = vsyncadd %s763, 0
          %s770 = smul.addr %s767, 2
          %s771 = sadd.s32 %s50, %s770
          %s772 = smul.addr %s48, 32
          %s773 = sadd.s32 %s771, %s772
          %s774 = smul.addr %s773, 4
          %s775 = scalar_lea.hbm %s4, %s774
          %s776 = sshll.u32 %s775, 4
          %s777 = int_to_ptr.hbm [resolvable:$true] %s776
          %s778 = sshll.u32 %s766, 4
          %s779 = int_to_ptr.vmem [resolvable:$true] %s778
          %784 = dma.hbm_to_vmem [thread:$0]  %s777, 512, %s779, %s763, 128, 64, 4
        $region96: #{tpu_custom_call.1} parent=75 // pred_fallthru
          _
      $region76: #{tpu_custom_call.1} parent=5 // pred_fallthru
        _
      %p785 = scmp.le.s32.totalorder 1, %s41
      %p786 = scmp.lt.s32.totalorder %s41, 9
      %p787 = pnand %p785, %p786
      %p788 = pneg %p787
      // Predicated region
      $region97: #{tpu_custom_call.1} parent=5 // pred_check
        _
      $region98: #{tpu_custom_call.1} parent=5 // pred_check_branch
        %790 = sbr.rel (%p787) target = $region100
      $region99: #{tpu_custom_call.1} parent=5 // pred_region
        %s791 = ssub.s32 %s41, 1
        %s792 = sand.u32 %s75, 1
        %s793 = scalar_lea.sflag [#allocation7], %s792
        %s794 = sand.u32 %s75, 1
        %s795 = smul.addr %s794, 8
        %s796 = scalar_lea.vmem [#allocation6], %s795
        // Predicated region
        $region101: #{tpu_custom_call.1} parent=99 // pred_check
          %p797 = pneg %p88
        $region102: #{tpu_custom_call.1} parent=99 // pred_check_branch
          %799 = sbr.rel (%p797) target = $region104
        $region103: #{tpu_custom_call.1} parent=99 // pred_region
          %801 = dma.done %s793, 128
        $region104: #{tpu_custom_call.1} parent=99 // pred_fallthru
          _
        %s802 = sand.u32 %s46, 1
        %s803 = scalar_lea.sflag [#allocation10], %s802
        %s804 = sand.u32 %s103, 1
        %s805 = smul.addr %s804, 8
        %s806 = scalar_lea.vmem [#allocation9], %s805
        // Predicated region
        $region105: #{tpu_custom_call.1} parent=99 // pred_check
          %p807 = pneg %p116
        $region106: #{tpu_custom_call.1} parent=99 // pred_check_branch
          %809 = sbr.rel (%p807) target = $region108
        $region107: #{tpu_custom_call.1} parent=99 // pred_region
          %811 = dma.done %s803, 128
        $region108: #{tpu_custom_call.1} parent=99 // pred_fallthru
          _
        %s812 = sand.u32 %s46, 1
        %s813 = scalar_lea.sflag [#allocation10], %s812
        %s814 = sand.u32 %s131, 1
        %s815 = smul.addr %s814, 8
        %s816 = scalar_lea.vmem [#allocation11], %s815
        // Predicated region
        $region109: #{tpu_custom_call.1} parent=99 // pred_check
          %p817 = pneg %p144
        $region110: #{tpu_custom_call.1} parent=99 // pred_check_branch
          %819 = sbr.rel (%p817) target = $region112
        $region111: #{tpu_custom_call.1} parent=99 // pred_region
          %821 = dma.done %s813, 128
        $region112: #{tpu_custom_call.1} parent=99 // pred_fallthru
          _
        %s822 = sand.u32 %s46, 1
        %s823 = scalar_lea.sflag [#allocation13], %s822
        %s824 = sand.u32 %s159, 1
        %s825 = smul.addr %s824, 8
        %s826 = scalar_lea.vmem [#allocation12], %s825
        // Predicated region
        $region113: #{tpu_custom_call.1} parent=99 // pred_check
          %p827 = pneg %p172
        $region114: #{tpu_custom_call.1} parent=99 // pred_check_branch
          %829 = sbr.rel (%p827) target = $region116
        $region115: #{tpu_custom_call.1} parent=99 // pred_region
          %831 = dma.done %s823, 128
        $region116: #{tpu_custom_call.1} parent=99 // pred_fallthru
          _
        %s832 = sand.u32 %s46, 1
        %s833 = scalar_lea.sflag [#allocation13], %s832
        %s834 = sand.u32 %s189, 1
        %s835 = smul.addr %s834, 32
        %s836 = scalar_lea.vmem [#allocation14], %s835
        // Predicated region
        $region117: #{tpu_custom_call.1} parent=99 // pred_check
          %p837 = pneg %p202
        $region118: #{tpu_custom_call.1} parent=99 // pred_check_branch
          %839 = sbr.rel (%p837) target = $region120
        $region119: #{tpu_custom_call.1} parent=99 // pred_region
          %841 = dma.done %s833, 512
        $region120: #{tpu_custom_call.1} parent=99 // pred_fallthru
          _
        // Predicated region
        $region121: #{tpu_custom_call.1} parent=99 // pred_check
          %p842 = pneg %p223
        $region122: #{tpu_custom_call.1} parent=99 // pred_check_branch
          %844 = sbr.rel (%p842) target = $region124
        $region123: #{tpu_custom_call.1} parent=99 // pred_region
          %846 = dma.done [#allocation16], 1024
        $region124: #{tpu_custom_call.1} parent=99 // pred_fallthru
          _
        // Predicated region
        $region125: #{tpu_custom_call.1} parent=99 // pred_check
          %p847 = pneg %p244
        $region126: #{tpu_custom_call.1} parent=99 // pred_check_branch
          %849 = sbr.rel (%p847) target = $region128
        $region127: #{tpu_custom_call.1} parent=99 // pred_region
          %851 = dma.done [#allocation16], 1024
        $region128: #{tpu_custom_call.1} parent=99 // pred_fallthru
          _
        // Predicated region
        $region129: #{tpu_custom_call.1} parent=99 // pred_check
          %p852 = pneg %p265
        $region130: #{tpu_custom_call.1} parent=99 // pred_check_branch
          %854 = sbr.rel (%p852) target = $region132
        $region131: #{tpu_custom_call.1} parent=99 // pred_region
          %856 = dma.done [#allocation19], 1024
        $region132: #{tpu_custom_call.1} parent=99 // pred_fallthru
          _
        // Predicated region
        $region133: #{tpu_custom_call.1} parent=99 // pred_check
          %p857 = pneg %p286
        $region134: #{tpu_custom_call.1} parent=99 // pred_check_branch
          %859 = sbr.rel (%p857) target = $region136
        $region135: #{tpu_custom_call.1} parent=99 // pred_region
          %861 = dma.done [#allocation19], 1024
        $region136: #{tpu_custom_call.1} parent=99 // pred_fallthru
          _
        // Predicated region
        $region137: #{tpu_custom_call.1} parent=99 // pred_check
          %p862 = pneg %p412
        $region138: #{tpu_custom_call.1} parent=99 // pred_check_branch
          %864 = sbr.rel (%p862) target = $region140
        $region139: #{tpu_custom_call.1} parent=99 // pred_region
          %866 = dma.done [#allocation22], 4096
        $region140: #{tpu_custom_call.1} parent=99 // pred_fallthru
          _
        // Predicated region
        $region141: #{tpu_custom_call.1} parent=99 // pred_check
          %p867 = pneg %p454
        $region142: #{tpu_custom_call.1} parent=99 // pred_check_branch
          %869 = sbr.rel (%p867) target = $region144
        $region143: #{tpu_custom_call.1} parent=99 // pred_region
          %871 = dma.done [#allocation22], 4096
        $region144: #{tpu_custom_call.1} parent=99 // pred_fallthru
          _
        %s872 = sand.u32 %s75, 1
        %s873 = scalar_lea.sflag [#allocation7], %s872
        %s874 = sand.u32 %s75, 1
        %s875 = smul.addr %s874, 8
        %s876 = scalar_lea.vmem [#allocation6], %s875
        %p877 = pneg %p88
        %p878 = pneg %p85
        %s879 = sand.u32 %s46, 1
        %s880 = scalar_lea.sflag [#allocation10], %s879
        %s881 = sand.u32 %s103, 1
        %s882 = smul.addr %s881, 8
        %s883 = scalar_lea.vmem [#allocation9], %s882
        %p884 = pneg %p116
        %p885 = pneg %p113
        %s886 = sand.u32 %s46, 1
        %s887 = scalar_lea.sflag [#allocation10], %s886
        %s888 = sand.u32 %s131, 1
        %s889 = smul.addr %s888, 8
        %s890 = scalar_lea.vmem [#allocation11], %s889
        %p891 = pneg %p144
        %p892 = pneg %p141
        %s893 = sand.u32 %s46, 1
        %s894 = scalar_lea.sflag [#allocation13], %s893
        %s895 = sand.u32 %s159, 1
        %s896 = smul.addr %s895, 8
        %s897 = scalar_lea.vmem [#allocation12], %s896
        %p898 = pneg %p172
        %p899 = pneg %p169
        %s900 = sand.u32 %s46, 1
        %s901 = scalar_lea.sflag [#allocation13], %s900
        %s902 = sand.u32 %s189, 1
        %s903 = smul.addr %s902, 32
        %s904 = scalar_lea.vmem [#allocation14], %s903
        %p905 = pneg %p202
        %p906 = pneg %p199
        %p907 = pneg %p223
        %p908 = pneg %p220
        %p909 = pneg %p244
        %p910 = pneg %p241
        %p911 = pneg %p265
        %p912 = pneg %p262
        %p913 = pneg %p286
        %p914 = pneg %p283
        %p915 = pneg %p307
        %p916 = pneg %p304
        %p917 = pneg %p328
        %p918 = pneg %p325
        %p919 = pneg %p349
        %p920 = pneg %p346
        %p921 = pneg %p370
        %p922 = pneg %p367
        %p923 = pneg %p391
        %p924 = pneg %p388
        %p925 = pneg %p412
        %p926 = pneg %p409
        %p927 = pneg %p433
        %p928 = pneg %p430
        %p929 = pneg %p454
        %p930 = pneg %p451
        %p931 = pneg %p475
        %p932 = pneg %p472
        %p933 = pneg %p496
        %p934 = pneg %p493
        %p935 = pneg %p517
        %p936 = pneg %p514
        %p937 = pneg %p545
        %p938 = pneg %p542
        %s939 = sand.u32 %s532, 1
        %s940 = scalar_lea.sflag [#allocation8], %s939
        %s941 = sand.u32 %s532, 1
        %s942 = smul.addr %s941, 8
        %s943 = scalar_lea.vmem [#allocation24], %s942
        %s944 = smul.u32 8, %s52
        %p946 = scmp.eq.s32.totalorder %s53, 0
        // Predicated region
        $region145: #{tpu_custom_call.1} parent=99 // pred_check
          %p947 = pneg %p946
        $region146: #{tpu_custom_call.1} parent=99 // pred_check_branch
          %949 = sbr.rel (%p947) target = $region148
        $region147: #{tpu_custom_call.1} parent=99 // pred_region
          %v950 = vld [vmem:[%s796] sm:$0xff]
          %v951 = vld [vmem:[%s816] sm:$0xff]
          %v952 = vadd.f32 %v950, %v951
          %v953 = vld [vmem:[%s10] sm:$0x1]
          %v954 = vld [vmem:[%s11] sm:$0x1]
          %955 = vadd.xlane.f32.xlu0 %v952
          %v956 = vpop.xlane.xlu0 %955
          %v957 = vrcp.pop 128.0
          %v958 = vmul.f32 128.0, %v957
          %v959 = vsub.f32 1.0, %v958
          %v960 = vmul.f32 %v957, %v959
          %v961 = vadd.f32 %v957, %v960
          %vm962 = vweird.f32 %v957
          %v963 = vsel %vm962, %v957, %v961
          %v964 = vmul.f32 %v956, %v963
          %v965 = vsub.f32 %v952, %v964
          %v966 = vmul.f32 %v965, %v965
          %967 = vadd.xlane.f32.xlu0 %v966
          %v968 = vpop.xlane.xlu0 %967
          %v969 = vmul.f32 %v968, %v963
          %v970 = vadd.f32 %v969, 1e-05
          %v971 = vrsqrt.pop %v970
          %v972 = vmul.f32 %v971, %v970
          %v973 = vmul.f32 %v972, %v971
          %v974 = vmul.f32 0.5, %v973
          %v975 = vsub.f32 1.5, %v974
          %v976 = vmul.f32 %v971, %v975
          %vm977 = vweird.f32 %v970
          %vm978 = vweird.f32 %v971
          %vm979 = vmor %vm977, %vm978
          %v980 = vsel %vm979, %v971, %v976
          %v981 = vmul.f32 %v965, %v980
          %v983 = vperm.slane %v953, 0
          %v985 = vmul.f32 %v981, %v983
          %v987 = vperm.slane %v954, 0
          %v989 = vadd.f32 %v985, %v987
          %v990 = vpack.c.bf16 %v989, %v989
          %v991 = vld [vmem:[#allocation15] sm:$0xf]
          %v992 = vld [vmem:[#allocation15 + $0x4] sm:$0xf]
          %v993 = vld [vmem:[#allocation15 + $0x8] sm:$0xf]
          %v994 = vld [vmem:[#allocation15 + $0xc] sm:$0xf]
          %v995 = vld [vmem:[#allocation15 + $0x10] sm:$0xf]
          %v996 = vld [vmem:[#allocation15 + $0x14] sm:$0xf]
          %v997 = vld [vmem:[#allocation15 + $0x18] sm:$0xf]
          %v998 = vld [vmem:[#allocation15 + $0x1c] sm:$0xf]
          %v999 = vld [vmem:[#allocation15 + $0x20] sm:$0xf]
          %v1000 = vld [vmem:[#allocation15 + $0x24] sm:$0xf]
          %v1001 = vld [vmem:[#allocation15 + $0x28] sm:$0xf]
          %v1002 = vld [vmem:[#allocation15 + $0x2c] sm:$0xf]
          %v1003 = vld [vmem:[#allocation15 + $0x30] sm:$0xf]
          %v1004 = vld [vmem:[#allocation15 + $0x34] sm:$0xf]
          %v1005 = vld [vmem:[#allocation15 + $0x38] sm:$0xf]
          %v1006 = vld [vmem:[#allocation15 + $0x3c] sm:$0xf]
          %v1023 = vunpack.c.l.b16 %v991
          %v1024 = vunpack.c.l.b16 %v992
          %v1025 = vunpack.c.l.b16 %v993
          %v1026 = vunpack.c.l.b16 %v994
          %v1027 = vunpack.c.l.b16 %v995
          %v1028 = vunpack.c.l.b16 %v996
          %v1029 = vunpack.c.l.b16 %v997
          %v1030 = vunpack.c.l.b16 %v998
          %v1031 = vunpack.c.l.b16 %v999
          %v1032 = vunpack.c.l.b16 %v1000
          %v1033 = vunpack.c.l.b16 %v1001
          %v1034 = vunpack.c.l.b16 %v1002
          %v1035 = vunpack.c.l.b16 %v1003
          %v1036 = vunpack.c.l.b16 %v1004
          %v1037 = vunpack.c.l.b16 %v1005
          %v1038 = vunpack.c.l.b16 %v1006
          %v1039 = vpack.c.b16 %v1024, %v1023
          %v1040 = vpack.c.b16 %v1026, %v1025
          %v1041 = vpack.c.b16 %v1028, %v1027
          %v1042 = vpack.c.b16 %v1030, %v1029
          %v1043 = vpack.c.b16 %v1032, %v1031
          %v1044 = vpack.c.b16 %v1034, %v1033
          %v1045 = vpack.c.b16 %v1036, %v1035
          %v1046 = vpack.c.b16 %v1038, %v1037
          %1055 = vmatpush.bf16.msra.mxu0 %v1046
          %1056 = vmatpush.bf16.msra.mxu0 %v1045
          %1057 = vmatpush.bf16.msra.mxu0 %v1044
          %1058 = vmatpush.bf16.msra.mxu0 %v1043
          %1059 = vmatpush.bf16.msra.mxu0 %v1042
          %1060 = vmatpush.bf16.msra.mxu0 %v1041
          %1061 = vmatpush.bf16.msra.mxu0 %v1040
          %1062 = vmatpush.bf16.msra.mxu0 %v1039
          %1063 = vmatmul.bf16.gmra.mxu0 %v990
          %v1064 = vpop.f32.mrf.mxu0
          %v1065 = vadd.f32 0.0, %v1064
          %v1066 = vpop.f32.mrf.mxu0
          %1067 = vdwg.mxu0
          %v1068 = vmul.f32 %v1065, 0.25
          %1069 = vst [vmem:[#allocation2] sm:$0xff] %v1068
          %vm1070 = vcmask 64512
          %1071 = vst.msk [vmem:[#allocation3] sm:$0xff] %vm1070, -inf
          %1072 = vst.msk [vmem:[#allocation4] sm:$0xff] %vm1070, 0.0
          %1073 = vst [vmem:[#allocation5] sm:$0xff] 0.0
        $region148: #{tpu_custom_call.1} parent=99 // pred_fallthru
          _
        %v1074 = vld [vmem:[%s806] sm:$0xff]
        %v1075 = vld [vmem:[%s826] sm:$0xff]
        %v1076 = vadd.f32 %v1074, %v1075
        %v1077 = vld [vmem:[%s10] sm:$0x1]
        %v1078 = vld [vmem:[%s11] sm:$0x1]
        %1079 = vadd.xlane.f32.xlu0 %v1076
        %v1080 = vpop.xlane.xlu0 %1079
        %v1081 = vrcp.pop 128.0
        %v1082 = vmul.f32 128.0, %v1081
        %v1083 = vsub.f32 1.0, %v1082
        %v1084 = vmul.f32 %v1081, %v1083
        %v1085 = vadd.f32 %v1081, %v1084
        %vm1086 = vweird.f32 %v1081
        %v1087 = vsel %vm1086, %v1081, %v1085
        %v1088 = vmul.f32 %v1080, %v1087
        %v1089 = vsub.f32 %v1076, %v1088
        %v1090 = vmul.f32 %v1089, %v1089
        %1091 = vadd.xlane.f32.xlu0 %v1090
        %v1092 = vpop.xlane.xlu0 %1091
        %v1093 = vmul.f32 %v1092, %v1087
        %v1094 = vadd.f32 %v1093, 1e-05
        %v1095 = vrsqrt.pop %v1094
        %v1096 = vmul.f32 %v1095, %v1094
        %v1097 = vmul.f32 %v1096, %v1095
        %v1098 = vmul.f32 0.5, %v1097
        %v1099 = vsub.f32 1.5, %v1098
        %v1100 = vmul.f32 %v1095, %v1099
        %vm1101 = vweird.f32 %v1094
        %vm1102 = vweird.f32 %v1095
        %vm1103 = vmor %vm1101, %vm1102
        %v1104 = vsel %vm1103, %v1095, %v1100
        %v1105 = vmul.f32 %v1089, %v1104
        %v1107 = vperm.slane %v1077, 0
        %v1109 = vmul.f32 %v1105, %v1107
        %v1111 = vperm.slane %v1078, 0
        %v1113 = vadd.f32 %v1109, %v1111
        %v1114 = vpack.c.bf16 %v1113, %v1113
        %v1115 = vld [vmem:[#allocation17] sm:$0xf]
        %v1116 = vld [vmem:[#allocation17 + $0x4] sm:$0xf]
        %v1117 = vld [vmem:[#allocation17 + $0x8] sm:$0xf]
        %v1118 = vld [vmem:[#allocation17 + $0xc] sm:$0xf]
        %v1119 = vld [vmem:[#allocation17 + $0x10] sm:$0xf]
        %v1120 = vld [vmem:[#allocation17 + $0x14] sm:$0xf]
        %v1121 = vld [vmem:[#allocation17 + $0x18] sm:$0xf]
        %v1122 = vld [vmem:[#allocation17 + $0x1c] sm:$0xf]
        %v1123 = vld [vmem:[#allocation17 + $0x20] sm:$0xf]
        %v1124 = vld [vmem:[#allocation17 + $0x24] sm:$0xf]
        %v1125 = vld [vmem:[#allocation17 + $0x28] sm:$0xf]
        %v1126 = vld [vmem:[#allocation17 + $0x2c] sm:$0xf]
        %v1127 = vld [vmem:[#allocation17 + $0x30] sm:$0xf]
        %v1128 = vld [vmem:[#allocation17 + $0x34] sm:$0xf]
        %v1129 = vld [vmem:[#allocation17 + $0x38] sm:$0xf]
        %v1130 = vld [vmem:[#allocation17 + $0x3c] sm:$0xf]
        %v1147 = vunpack.c.l.b16 %v1115
        %v1148 = vunpack.c.l.b16 %v1116
        %v1149 = vunpack.c.l.b16 %v1117
        %v1150 = vunpack.c.l.b16 %v1118
        %v1151 = vunpack.c.l.b16 %v1119
        %v1152 = vunpack.c.l.b16 %v1120
        %v1153 = vunpack.c.l.b16 %v1121
        %v1154 = vunpack.c.l.b16 %v1122
        %v1155 = vunpack.c.l.b16 %v1123
        %v1156 = vunpack.c.l.b16 %v1124
        %v1157 = vunpack.c.l.b16 %v1125
        %v1158 = vunpack.c.l.b16 %v1126
        %v1159 = vunpack.c.l.b16 %v1127
        %v1160 = vunpack.c.l.b16 %v1128
        %v1161 = vunpack.c.l.b16 %v1129
        %v1162 = vunpack.c.l.b16 %v1130
        %v1163 = vpack.c.b16 %v1148, %v1147
        %v1164 = vpack.c.b16 %v1150, %v1149
        %v1165 = vpack.c.b16 %v1152, %v1151
        %v1166 = vpack.c.b16 %v1154, %v1153
        %v1167 = vpack.c.b16 %v1156, %v1155
        %v1168 = vpack.c.b16 %v1158, %v1157
        %v1169 = vpack.c.b16 %v1160, %v1159
        %v1170 = vpack.c.b16 %v1162, %v1161
        %1179 = vmatpush.bf16.msra.mxu0 %v1170
        %1180 = vmatpush.bf16.msra.mxu0 %v1169
        %1181 = vmatpush.bf16.msra.mxu0 %v1168
        %1182 = vmatpush.bf16.msra.mxu0 %v1167
        %1183 = vmatpush.bf16.msra.mxu0 %v1166
        %1184 = vmatpush.bf16.msra.mxu0 %v1165
        %1185 = vmatpush.bf16.msra.mxu0 %v1164
        %1186 = vmatpush.bf16.msra.mxu0 %v1163
        %1187 = vmatmul.bf16.gmra.mxu0 %v1114
        %v1188 = vpop.f32.mrf.mxu0
        %v1189 = vadd.f32 0.0, %v1188
        %v1190 = vpop.f32.mrf.mxu0
        %1191 = vdwg.mxu0
        %v1192 = vld [vmem:[#allocation18] sm:$0xf]
        %v1193 = vld [vmem:[#allocation18 + $0x4] sm:$0xf]
        %v1194 = vld [vmem:[#allocation18 + $0x8] sm:$0xf]
        %v1195 = vld [vmem:[#allocation18 + $0xc] sm:$0xf]
        %v1196 = vld [vmem:[#allocation18 + $0x10] sm:$0xf]
        %v1197 = vld [vmem:[#allocation18 + $0x14] sm:$0xf]
        %v1198 = vld [vmem:[#allocation18 + $0x18] sm:$0xf]
        %v1199 = vld [vmem:[#allocation18 + $0x1c] sm:$0xf]
        %v1200 = vld [vmem:[#allocation18 + $0x20] sm:$0xf]
        %v1201 = vld [vmem:[#allocation18 + $0x24] sm:$0xf]
        %v1202 = vld [vmem:[#allocation18 + $0x28] sm:$0xf]
        %v1203 = vld [vmem:[#allocation18 + $0x2c] sm:$0xf]
        %v1204 = vld [vmem:[#allocation18 + $0x30] sm:$0xf]
        %v1205 = vld [vmem:[#allocation18 + $0x34] sm:$0xf]
        %v1206 = vld [vmem:[#allocation18 + $0x38] sm:$0xf]
        %v1207 = vld [vmem:[#allocation18 + $0x3c] sm:$0xf]
        %v1224 = vunpack.c.l.b16 %v1192
        %v1225 = vunpack.c.l.b16 %v1193
        %v1226 = vunpack.c.l.b16 %v1194
        %v1227 = vunpack.c.l.b16 %v1195
        %v1228 = vunpack.c.l.b16 %v1196
        %v1229 = vunpack.c.l.b16 %v1197
        %v1230 = vunpack.c.l.b16 %v1198
        %v1231 = vunpack.c.l.b16 %v1199
        %v1232 = vunpack.c.l.b16 %v1200
        %v1233 = vunpack.c.l.b16 %v1201
        %v1234 = vunpack.c.l.b16 %v1202
        %v1235 = vunpack.c.l.b16 %v1203
        %v1236 = vunpack.c.l.b16 %v1204
        %v1237 = vunpack.c.l.b16 %v1205
        %v1238 = vunpack.c.l.b16 %v1206
        %v1239 = vunpack.c.l.b16 %v1207
        %v1240 = vpack.c.b16 %v1225, %v1224
        %v1241 = vpack.c.b16 %v1227, %v1226
        %v1242 = vpack.c.b16 %v1229, %v1228
        %v1243 = vpack.c.b16 %v1231, %v1230
        %v1244 = vpack.c.b16 %v1233, %v1232
        %v1245 = vpack.c.b16 %v1235, %v1234
        %v1246 = vpack.c.b16 %v1237, %v1236
        %v1247 = vpack.c.b16 %v1239, %v1238
        %1256 = vmatpush.bf16.msra.mxu0 %v1247
        %1257 = vmatpush.bf16.msra.mxu0 %v1246
        %1258 = vmatpush.bf16.msra.mxu0 %v1245
        %1259 = vmatpush.bf16.msra.mxu0 %v1244
        %1260 = vmatpush.bf16.msra.mxu0 %v1243
        %1261 = vmatpush.bf16.msra.mxu0 %v1242
        %1262 = vmatpush.bf16.msra.mxu0 %v1241
        %1263 = vmatpush.bf16.msra.mxu0 %v1240
        %1264 = vmatmul.bf16.gmra.mxu0 %v1114
        %v1265 = vpop.f32.mrf.mxu0
        %v1266 = vadd.f32 0.0, %v1265
        %v1267 = vpop.f32.mrf.mxu0
        %1268 = vdwg.mxu0
        %v1269 = vld [vmem:[#allocation2] sm:$0xff]
        %v1270 = vld [vmem:[%s836] sm:$0xf]
        %v1271 = vld [vmem:[%s836 + $0x4] sm:$0xf]
        %v1272 = vld [vmem:[%s836 + $0x8] sm:$0xf]
        %v1273 = vld [vmem:[%s836 + $0xc] sm:$0xf]
        %v1274 = vld [vmem:[%s836 + $0x10] sm:$0xf]
        %v1275 = vld [vmem:[%s836 + $0x14] sm:$0xf]
        %v1276 = vld [vmem:[%s836 + $0x18] sm:$0xf]
        %v1277 = vld [vmem:[%s836 + $0x1c] sm:$0xf]
        %v1278 = vunpack.c.l.bf16 %v1270
        %v1279 = vunpack.c.l.bf16 %v1271
        %v1280 = vunpack.c.l.bf16 %v1272
        %v1281 = vunpack.c.l.bf16 %v1273
        %v1282 = vunpack.c.l.bf16 %v1274
        %v1283 = vunpack.c.l.bf16 %v1275
        %v1284 = vunpack.c.l.bf16 %v1276
        %v1285 = vunpack.c.l.bf16 %v1277
        %v1287 = vrot.slane %v1269, 1
        %v1288 = vrot.slane %v1269, 2
        %v1289 = vrot.slane %v1269, 3
        %v1290 = vrot.slane %v1269, 4
        %v1291 = vrot.slane %v1269, 5
        %v1292 = vrot.slane %v1269, 6
        %v1293 = vrot.slane %v1269, 7
        %v1294 = vperm.slane %v1269, 0
        %v1295 = vperm.slane %v1287, 0
        %v1296 = vperm.slane %v1288, 0
        %v1297 = vperm.slane %v1289, 0
        %v1298 = vperm.slane %v1290, 0
        %v1299 = vperm.slane %v1291, 0
        %v1300 = vperm.slane %v1292, 0
        %v1301 = vperm.slane %v1293, 0
        %v1310 = vmul.f32 %v1278, %v1294
        %v1311 = vmul.f32 %v1279, %v1295
        %v1312 = vmul.f32 %v1280, %v1296
        %v1313 = vmul.f32 %v1281, %v1297
        %v1314 = vmul.f32 %v1282, %v1298
        %v1315 = vmul.f32 %v1283, %v1299
        %v1316 = vmul.f32 %v1284, %v1300
        %v1317 = vmul.f32 %v1285, %v1301
        %vm1318 = vcmask 130048
        %v1319 = vsel %vm1318, %v1310, 0.0
        %1320 = vadd.xlane.f32.xlu0 %v1319
        %v1321 = vpop.xlane.xlu0 %1320
        %v1322 = vsel %vm1318, %v1311, 0.0
        %1323 = vadd.xlane.f32.xlu0 %v1322
        %v1324 = vpop.xlane.xlu0 %1323
        %v1325 = vsel %vm1318, %v1312, 0.0
        %1326 = vadd.xlane.f32.xlu0 %v1325
        %v1327 = vpop.xlane.xlu0 %1326
        %v1328 = vsel %vm1318, %v1313, 0.0
        %1329 = vadd.xlane.f32.xlu0 %v1328
        %v1330 = vpop.xlane.xlu0 %1329
        %v1331 = vsel %vm1318, %v1314, 0.0
        %1332 = vadd.xlane.f32.xlu0 %v1331
        %v1333 = vpop.xlane.xlu0 %1332
        %v1334 = vsel %vm1318, %v1315, 0.0
        %1335 = vadd.xlane.f32.xlu0 %v1334
        %v1336 = vpop.xlane.xlu0 %1335
        %v1337 = vsel %vm1318, %v1316, 0.0
        %1338 = vadd.xlane.f32.xlu0 %v1337
        %v1339 = vpop.xlane.xlu0 %1338
        %v1340 = vsel %vm1318, %v1317, 0.0
        %1341 = vadd.xlane.f32.xlu0 %v1340
        %v1342 = vpop.xlane.xlu0 %1341
        %v1343 = vpack.c.bf16 %v1269, %v1269
        %v1344 = vpack.c.bf16 %v1189, %v1189
        %v1353 = vlaneseq
        %v1354 = vand.u32 %v1353, 127
        %v1355 = vperm.slane %v1321, %v1354
        %v1356 = vperm.slane %v1324, %v1354
        %v1357 = vperm.slane %v1327, %v1354
        %v1358 = vperm.slane %v1330, %v1354
        %v1359 = vperm.slane %v1333, %v1354
        %v1360 = vperm.slane %v1336, %v1354
        %v1361 = vperm.slane %v1339, %v1354
        %v1362 = vperm.slane %v1342, %v1354
        %vm1363 = vcmask 1041409
        %v1364 = vsel %vm1363, %v1356, %v1355
        %vm1365 = vcmask 1042434
        %v1366 = vsel %vm1365, %v1357, %v1364
        %vm1367 = vcmask 1043459
        %v1368 = vsel %vm1367, %v1358, %v1366
        %vm1369 = vcmask 1044484
        %v1370 = vsel %vm1369, %v1359, %v1368
        %vm1371 = vcmask 1045509
        %v1372 = vsel %vm1371, %v1360, %v1370
        %vm1373 = vcmask 1046534
        %v1374 = vsel %vm1373, %v1361, %v1372
        %vm1375 = vcmask 1047559
        %v1376 = vsel %vm1375, %v1362, %v1374
        %v1379 = vsel %vm1318, %v1343, 0
        %v1382 = vsel %vm1318, %v1344, 0
        %1384 = vmatpush.bf16.xpose.msra.mxu0 0
        %1385 = vmatpush.bf16.xpose.msra.mxu0 0
        %1386 = vmatpush.bf16.xpose.msra.mxu0 0
        %1387 = vmatpush.bf16.xpose.msra.mxu0 0
        %1388 = vmatpush.bf16.xpose.msra.mxu0 0
        %1389 = vmatpush.bf16.xpose.msra.mxu0 0
        %1390 = vmatpush.bf16.xpose.msra.mxu0 0
        %1391 = vmatpush.bf16.xpose.msra.mxu0 %v1382
        %1392 = vmatmul.bf16.gmra.mxu0 %v1379
        %v1393 = vpop.f32.mrf.mxu0
        %v1394 = vadd.f32 %v1376, %v1393
        %v1395 = vpop.f32.mrf.mxu0
        %1396 = vdwg.mxu0
        %v1397 = vld [vmem:[#allocation3] sm:$0xff]
        %vm1398 = vcmask 64512
        %v1399 = vsel %vm1398, %v1394, -inf
        %1400 = vmax.xlane.f32.xlu0 %v1399
        %v1401 = vpop.xlane.xlu0 %1400
        %v1402 = vmax.f32 %v1397, %v1401
        %v1403 = vsub.f32 %v1397, %v1402
        %v1404 = vmul.f32 %v1403, 1.442695
        %v1405 = vpow.pop %v1404
        %1407 = vset.pattern.permute.xlu0 0
        %1408 = vperm.xlu0 %1407, %v1402
        %v1409 = vpop.permute.xlu0 %1408
        %v1411 = vsub.f32 %v1394, %v1409
        %v1412 = vmul.f32 %v1411, 1.442695
        %v1413 = vpow.pop %v1412
        %v1414 = vld [vmem:[#allocation4] sm:$0xff]
        %v1415 = vmul.f32 %v1405, %v1414
        %v1416 = vsel %vm1398, %v1413, 0.0
        %1417 = vadd.xlane.f32.xlu0 %v1416
        %v1418 = vpop.xlane.xlu0 %1417
        %v1419 = vadd.f32 %v1415, %v1418
        %vm1420 = vcmask 7168
        %1421 = vst.msk [vmem:[#allocation4] sm:$0xff] %vm1420, %v1419
        %1422 = vst.msk [vmem:[#allocation3] sm:$0xff] %vm1420, %v1402
        %v1423 = vld [vmem:[#allocation5] sm:$0xff]
        %1425 = vset.pattern.permute.xlu0 0
        %1426 = vperm.xlu0 %1425, %v1405
        %v1427 = vpop.permute.xlu0 %1426
        %v1429 = vmul.f32 %v1427, %v1423
        %v1430 = vpack.c.bf16 %v1413, %v1413
        %v1431 = vpack.c.bf16 %v1266, %v1266
        %v1433 = vsel %vm1398, %v1430, 0
        %vm1435 = vcmask 1043456
        %v1437 = vsel %vm1435, %v1431, 0
        %1439 = vmatpush.bf16.msra.mxu0 0
        %1440 = vmatpush.bf16.msra.mxu0 0
        %1441 = vmatpush.bf16.msra.mxu0 0
        %1442 = vmatpush.bf16.msra.mxu0 0
        %1443 = vmatpush.bf16.msra.mxu0 0
        %1444 = vmatpush.bf16.msra.mxu0 0
        %1445 = vmatpush.bf16.msra.mxu0 0
        %1446 = vmatpush.bf16.msra.mxu0 %v1437
        %1447 = vmatmul.bf16.gmra.mxu0 %v1433
        %v1448 = vpop.f32.mrf.mxu0
        %v1449 = vadd.f32 0.0, %v1448
        %v1450 = vpop.f32.mrf.mxu0
        %1451 = vdwg.mxu0
        %v1452 = vadd.f32 %v1429, %v1449
        %1453 = vst.msk [vmem:[#allocation5] sm:$0xff] %vm1318, %v1452
        %v1454 = vld [vmem:[#allocation2] sm:$0xff]
        %v1455 = vld [vmem:[%s836] sm:$0xf]
        %v1456 = vld [vmem:[%s836 + $0x4] sm:$0xf]
        %v1457 = vld [vmem:[%s836 + $0x8] sm:$0xf]
        %v1458 = vld [vmem:[%s836 + $0xc] sm:$0xf]
        %v1459 = vld [vmem:[%s836 + $0x10] sm:$0xf]
        %v1460 = vld [vmem:[%s836 + $0x14] sm:$0xf]
        %v1461 = vld [vmem:[%s836 + $0x18] sm:$0xf]
        %v1462 = vld [vmem:[%s836 + $0x1c] sm:$0xf]
        %v1463 = vunpack.c.l.bf16 %v1455
        %v1464 = vunpack.c.l.bf16 %v1456
        %v1465 = vunpack.c.l.bf16 %v1457
        %v1466 = vunpack.c.l.bf16 %v1458
        %v1467 = vunpack.c.l.bf16 %v1459
        %v1468 = vunpack.c.l.bf16 %v1460
        %v1469 = vunpack.c.l.bf16 %v1461
        %v1470 = vunpack.c.l.bf16 %v1462
        %v1472 = vrot.slane %v1454, 1
        %v1473 = vrot.slane %v1454, 2
        %v1474 = vrot.slane %v1454, 3
        %v1475 = vrot.slane %v1454, 4
        %v1476 = vrot.slane %v1454, 5
        %v1477 = vrot.slane %v1454, 6
        %v1478 = vrot.slane %v1454, 7
        %v1479 = vperm.slane %v1454, 0
        %v1480 = vperm.slane %v1472, 0
        %v1481 = vperm.slane %v1473, 0
        %v1482 = vperm.slane %v1474, 0
        %v1483 = vperm.slane %v1475, 0
        %v1484 = vperm.slane %v1476, 0
        %v1485 = vperm.slane %v1477, 0
        %v1486 = vperm.slane %v1478, 0
        %v1495 = vmul.f32 %v1463, %v1479
        %v1496 = vmul.f32 %v1464, %v1480
        %v1497 = vmul.f32 %v1465, %v1481
        %v1498 = vmul.f32 %v1466, %v1482
        %v1499 = vmul.f32 %v1467, %v1483
        %v1500 = vmul.f32 %v1468, %v1484
        %v1501 = vmul.f32 %v1469, %v1485
        %v1502 = vmul.f32 %v1470, %v1486
        %1511 = vrot.lane.b32.xlu0 %v1495, 112
        %v1512 = vpop.permute.xlu0 %1511
        %1513 = vrot.lane.b32.xlu0 %v1496, 112
        %v1514 = vpop.permute.xlu0 %1513
        %1515 = vrot.lane.b32.xlu0 %v1497, 112
        %v1516 = vpop.permute.xlu0 %1515
        %1517 = vrot.lane.b32.xlu0 %v1498, 112
        %v1518 = vpop.permute.xlu0 %1517
        %1519 = vrot.lane.b32.xlu0 %v1499, 112
        %v1520 = vpop.permute.xlu0 %1519
        %1521 = vrot.lane.b32.xlu0 %v1500, 112
        %v1522 = vpop.permute.xlu0 %1521
        %1523 = vrot.lane.b32.xlu0 %v1501, 112
        %v1524 = vpop.permute.xlu0 %1523
        %1525 = vrot.lane.b32.xlu0 %v1502, 112
        %v1526 = vpop.permute.xlu0 %1525
        %v1535 = vsel %vm1318, %v1512, 0.0
        %1536 = vadd.xlane.f32.xlu0 %v1535
        %v1537 = vpop.xlane.xlu0 %1536
        %v1538 = vsel %vm1318, %v1514, 0.0
        %1539 = vadd.xlane.f32.xlu0 %v1538
        %v1540 = vpop.xlane.xlu0 %1539
        %v1541 = vsel %vm1318, %v1516, 0.0
        %1542 = vadd.xlane.f32.xlu0 %v1541
        %v1543 = vpop.xlane.xlu0 %1542
        %v1544 = vsel %vm1318, %v1518, 0.0
        %1545 = vadd.xlane.f32.xlu0 %v1544
        %v1546 = vpop.xlane.xlu0 %1545
        %v1547 = vsel %vm1318, %v1520, 0.0
        %1548 = vadd.xlane.f32.xlu0 %v1547
        %v1549 = vpop.xlane.xlu0 %1548
        %v1550 = vsel %vm1318, %v1522, 0.0
        %1551 = vadd.xlane.f32.xlu0 %v1550
        %v1552 = vpop.xlane.xlu0 %1551
        %v1553 = vsel %vm1318, %v1524, 0.0
        %1554 = vadd.xlane.f32.xlu0 %v1553
        %v1555 = vpop.xlane.xlu0 %1554
        %v1556 = vsel %vm1318, %v1526, 0.0
        %1557 = vadd.xlane.f32.xlu0 %v1556
        %v1558 = vpop.xlane.xlu0 %1557
        %v1559 = vpack.c.bf16 %v1454, %v1454
        %1561 = vrot.lane.b32.xlu0 %v1559, 112
        %v1562 = vpop.permute.xlu0 %1561
        %1564 = vrot.lane.b32.xlu0 %v1344, 112
        %v1565 = vpop.permute.xlu0 %1564
        %v1574 = vperm.slane %v1537, %v1354
        %v1575 = vperm.slane %v1540, %v1354
        %v1576 = vperm.slane %v1543, %v1354
        %v1577 = vperm.slane %v1546, %v1354
        %v1578 = vperm.slane %v1549, %v1354
        %v1579 = vperm.slane %v1552, %v1354
        %v1580 = vperm.slane %v1555, %v1354
        %v1581 = vperm.slane %v1558, %v1354
        %v1582 = vsel %vm1363, %v1575, %v1574
        %v1583 = vsel %vm1365, %v1576, %v1582
        %v1584 = vsel %vm1367, %v1577, %v1583
        %v1585 = vsel %vm1369, %v1578, %v1584
        %v1586 = vsel %vm1371, %v1579, %v1585
        %v1587 = vsel %vm1373, %v1580, %v1586
        %v1588 = vsel %vm1375, %v1581, %v1587
        %v1591 = vsel %vm1318, %v1562, 0
        %v1594 = vsel %vm1318, %v1565, 0
        %1596 = vmatpush.bf16.xpose.msra.mxu0 0
        %1597 = vmatpush.bf16.xpose.msra.mxu0 0
        %1598 = vmatpush.bf16.xpose.msra.mxu0 0
        %1599 = vmatpush.bf16.xpose.msra.mxu0 0
        %1600 = vmatpush.bf16.xpose.msra.mxu0 0
        %1601 = vmatpush.bf16.xpose.msra.mxu0 0
        %1602 = vmatpush.bf16.xpose.msra.mxu0 0
        %1603 = vmatpush.bf16.xpose.msra.mxu0 %v1594
        %1604 = vmatmul.bf16.gmra.mxu0 %v1591
        %v1605 = vpop.f32.mrf.mxu0
        %v1606 = vadd.f32 %v1588, %v1605
        %v1607 = vpop.f32.mrf.mxu0
        %1608 = vdwg.mxu0
        %v1609 = vld [vmem:[#allocation3] sm:$0xff]
        %v1610 = vsel %vm1398, %v1606, -inf
        %1611 = vmax.xlane.f32.xlu0 %v1610
        %v1612 = vpop.xlane.xlu0 %1611
        %v1613 = vmax.f32 %v1609, %v1612
        %v1614 = vsub.f32 %v1609, %v1613
        %v1615 = vmul.f32 %v1614, 1.442695
        %v1616 = vpow.pop %v1615
        %1618 = vset.pattern.permute.xlu0 1
        %1619 = vperm.xlu0 %1618, %v1613
        %v1620 = vpop.permute.xlu0 %1619
        %v1622 = vsub.f32 %v1606, %v1620
        %v1623 = vmul.f32 %v1622, 1.442695
        %v1624 = vpow.pop %v1623
        %v1625 = vld [vmem:[#allocation4] sm:$0xff]
        %v1626 = vmul.f32 %v1616, %v1625
        %v1627 = vsel %vm1398, %v1624, 0.0
        %1628 = vadd.xlane.f32.xlu0 %v1627
        %v1629 = vpop.xlane.xlu0 %1628
        %v1630 = vadd.f32 %v1626, %v1629
        %vm1631 = vcmask 15368
        %1632 = vst.msk [vmem:[#allocation4] sm:$0xff] %vm1631, %v1630
        %1633 = vst.msk [vmem:[#allocation3] sm:$0xff] %vm1631, %v1613
        %v1634 = vld [vmem:[#allocation5] sm:$0xff]
        %1636 = vset.pattern.permute.xlu0 1
        %1637 = vperm.xlu0 %1636, %v1616
        %v1638 = vpop.permute.xlu0 %1637
        %v1640 = vmul.f32 %v1638, %v1634
        %v1641 = vpack.c.bf16 %v1624, %v1624
        %1643 = vrot.lane.b32.xlu0 %v1431, 112
        %v1644 = vpop.permute.xlu0 %1643
        %v1646 = vsel %vm1398, %v1641, 0
        %v1649 = vsel %vm1435, %v1644, 0
        %1651 = vmatpush.bf16.msra.mxu0 0
        %1652 = vmatpush.bf16.msra.mxu0 0
        %1653 = vmatpush.bf16.msra.mxu0 0
        %1654 = vmatpush.bf16.msra.mxu0 0
        %1655 = vmatpush.bf16.msra.mxu0 0
        %1656 = vmatpush.bf16.msra.mxu0 0
        %1657 = vmatpush.bf16.msra.mxu0 0
        %1658 = vmatpush.bf16.msra.mxu0 %v1649
        %1659 = vmatmul.bf16.gmra.mxu0 %v1646
        %v1660 = vpop.f32.mrf.mxu0
        %v1661 = vadd.f32 0.0, %v1660
        %v1662 = vpop.f32.mrf.mxu0
        %1663 = vdwg.mxu0
        %1665 = vrot.lane.b32.xlu0 %v1661, 16
        %v1666 = vpop.permute.xlu0 %1665
        %v1668 = vadd.f32 %v1640, %v1666
        %vm1669 = vcmask 261248
        %1670 = vst.msk [vmem:[#allocation5] sm:$0xff] %vm1669, %v1668
        %v1671 = vld [vmem:[#allocation2] sm:$0xff]
        %v1672 = vld [vmem:[%s836] sm:$0xf]
        %v1673 = vld [vmem:[%s836 + $0x4] sm:$0xf]
        %v1674 = vld [vmem:[%s836 + $0x8] sm:$0xf]
        %v1675 = vld [vmem:[%s836 + $0xc] sm:$0xf]
        %v1676 = vld [vmem:[%s836 + $0x10] sm:$0xf]
        %v1677 = vld [vmem:[%s836 + $0x14] sm:$0xf]
        %v1678 = vld [vmem:[%s836 + $0x18] sm:$0xf]
        %v1679 = vld [vmem:[%s836 + $0x1c] sm:$0xf]
        %v1680 = vunpack.c.l.bf16 %v1672
        %v1681 = vunpack.c.l.bf16 %v1673
        %v1682 = vunpack.c.l.bf16 %v1674
        %v1683 = vunpack.c.l.bf16 %v1675
        %v1684 = vunpack.c.l.bf16 %v1676
        %v1685 = vunpack.c.l.bf16 %v1677
        %v1686 = vunpack.c.l.bf16 %v1678
        %v1687 = vunpack.c.l.bf16 %v1679
        %v1689 = vrot.slane %v1671, 1
        %v1690 = vrot.slane %v1671, 2
        %v1691 = vrot.slane %v1671, 3
        %v1692 = vrot.slane %v1671, 4
        %v1693 = vrot.slane %v1671, 5
        %v1694 = vrot.slane %v1671, 6
        %v1695 = vrot.slane %v1671, 7
        %v1696 = vperm.slane %v1671, 0
        %v1697 = vperm.slane %v1689, 0
        %v1698 = vperm.slane %v1690, 0
        %v1699 = vperm.slane %v1691, 0
        %v1700 = vperm.slane %v1692, 0
        %v1701 = vperm.slane %v1693, 0
        %v1702 = vperm.slane %v1694, 0
        %v1703 = vperm.slane %v1695, 0
        %v1712 = vmul.f32 %v1680, %v1696
        %v1713 = vmul.f32 %v1681, %v1697
        %v1714 = vmul.f32 %v1682, %v1698
        %v1715 = vmul.f32 %v1683, %v1699
        %v1716 = vmul.f32 %v1684, %v1700
        %v1717 = vmul.f32 %v1685, %v1701
        %v1718 = vmul.f32 %v1686, %v1702
        %v1719 = vmul.f32 %v1687, %v1703
        %1728 = vrot.lane.b32.xlu0 %v1712, 96
        %v1729 = vpop.permute.xlu0 %1728
        %1730 = vrot.lane.b32.xlu0 %v1713, 96
        %v1731 = vpop.permute.xlu0 %1730
        %1732 = vrot.lane.b32.xlu0 %v1714, 96
        %v1733 = vpop.permute.xlu0 %1732
        %1734 = vrot.lane.b32.xlu0 %v1715, 96
        %v1735 = vpop.permute.xlu0 %1734
        %1736 = vrot.lane.b32.xlu0 %v1716, 96
        %v1737 = vpop.permute.xlu0 %1736
        %1738 = vrot.lane.b32.xlu0 %v1717, 96
        %v1739 = vpop.permute.xlu0 %1738
        %1740 = vrot.lane.b32.xlu0 %v1718, 96
        %v1741 = vpop.permute.xlu0 %1740
        %1742 = vrot.lane.b32.xlu0 %v1719, 96
        %v1743 = vpop.permute.xlu0 %1742
        %v1752 = vsel %vm1318, %v1729, 0.0
        %1753 = vadd.xlane.f32.xlu0 %v1752
        %v1754 = vpop.xlane.xlu0 %1753
        %v1755 = vsel %vm1318, %v1731, 0.0
        %1756 = vadd.xlane.f32.xlu0 %v1755
        %v1757 = vpop.xlane.xlu0 %1756
        %v1758 = vsel %vm1318, %v1733, 0.0
        %1759 = vadd.xlane.f32.xlu0 %v1758
        %v1760 = vpop.xlane.xlu0 %1759
        %v1761 = vsel %vm1318, %v1735, 0.0
        %1762 = vadd.xlane.f32.xlu0 %v1761
        %v1763 = vpop.xlane.xlu0 %1762
        %v1764 = vsel %vm1318, %v1737, 0.0
        %1765 = vadd.xlane.f32.xlu0 %v1764
        %v1766 = vpop.xlane.xlu0 %1765
        %v1767 = vsel %vm1318, %v1739, 0.0
        %1768 = vadd.xlane.f32.xlu0 %v1767
        %v1769 = vpop.xlane.xlu0 %1768
        %v1770 = vsel %vm1318, %v1741, 0.0
        %1771 = vadd.xlane.f32.xlu0 %v1770
        %v1772 = vpop.xlane.xlu0 %1771
        %v1773 = vsel %vm1318, %v1743, 0.0
        %1774 = vadd.xlane.f32.xlu0 %v1773
        %v1775 = vpop.xlane.xlu0 %1774
        %v1776 = vpack.c.bf16 %v1671, %v1671
        %1778 = vrot.lane.b32.xlu0 %v1776, 96
        %v1779 = vpop.permute.xlu0 %1778
        %1780 = vrot.lane.b32.xlu0 %v1344, 96
        %v1781 = vpop.permute.xlu0 %1780
        %v1790 = vperm.slane %v1754, %v1354
        %v1791 = vperm.slane %v1757, %v1354
        %v1792 = vperm.slane %v1760, %v1354
        %v1793 = vperm.slane %v1763, %v1354
        %v1794 = vperm.slane %v1766, %v1354
        %v1795 = vperm.slane %v1769, %v1354
        %v1796 = vperm.slane %v1772, %v1354
        %v1797 = vperm.slane %v1775, %v1354
        %v1798 = vsel %vm1363, %v1791, %v1790
        %v1799 = vsel %vm1365, %v1792, %v1798
        %v1800 = vsel %vm1367, %v1793, %v1799
        %v1801 = vsel %vm1369, %v1794, %v1800
        %v1802 = vsel %vm1371, %v1795, %v1801
        %v1803 = vsel %vm1373, %v1796, %v1802
        %v1804 = vsel %vm1375, %v1797, %v1803
        %v1807 = vsel %vm1318, %v1779, 0
        %v1810 = vsel %vm1318, %v1781, 0
        %1812 = vmatpush.bf16.xpose.msra.mxu0 0
        %1813 = vmatpush.bf16.xpose.msra.mxu0 0
        %1814 = vmatpush.bf16.xpose.msra.mxu0 0
        %1815 = vmatpush.bf16.xpose.msra.mxu0 0
        %1816 = vmatpush.bf16.xpose.msra.mxu0 0
        %1817 = vmatpush.bf16.xpose.msra.mxu0 0
        %1818 = vmatpush.bf16.xpose.msra.mxu0 0
        %1819 = vmatpush.bf16.xpose.msra.mxu0 %v1810
        %1820 = vmatmul.bf16.gmra.mxu0 %v1807
        %v1821 = vpop.f32.mrf.mxu0
        %v1822 = vadd.f32 %v1804, %v1821
        %v1823 = vpop.f32.mrf.mxu0
        %1824 = vdwg.mxu0
        %v1825 = vld [vmem:[#allocation3] sm:$0xff]
        %v1826 = vsel %vm1398, %v1822, -inf
        %1827 = vmax.xlane.f32.xlu0 %v1826
        %v1828 = vpop.xlane.xlu0 %1827
        %v1829 = vmax.f32 %v1825, %v1828
        %v1830 = vsub.f32 %v1825, %v1829
        %v1831 = vmul.f32 %v1830, 1.442695
        %v1832 = vpow.pop %v1831
        %1834 = vset.pattern.permute.xlu0 2
        %1835 = vperm.xlu0 %1834, %v1829
        %v1836 = vpop.permute.xlu0 %1835
        %v1838 = vsub.f32 %v1822, %v1836
        %v1839 = vmul.f32 %v1838, 1.442695
        %v1840 = vpow.pop %v1839
        %v1841 = vld [vmem:[#allocation4] sm:$0xff]
        %v1842 = vmul.f32 %v1832, %v1841
        %v1843 = vsel %vm1398, %v1840, 0.0
        %1844 = vadd.xlane.f32.xlu0 %v1843
        %v1845 = vpop.xlane.xlu0 %1844
        %v1846 = vadd.f32 %v1842, %v1845
        %vm1847 = vcmask 23568
        %1848 = vst.msk [vmem:[#allocation4] sm:$0xff] %vm1847, %v1846
        %1849 = vst.msk [vmem:[#allocation3] sm:$0xff] %vm1847, %v1829
        %v1850 = vld [vmem:[#allocation5] sm:$0xff]
        %1852 = vset.pattern.permute.xlu0 2
        %1853 = vperm.xlu0 %1852, %v1832
        %v1854 = vpop.permute.xlu0 %1853
        %v1856 = vmul.f32 %v1854, %v1850
        %v1857 = vpack.c.bf16 %v1840, %v1840
        %1858 = vrot.lane.b32.xlu0 %v1431, 96
        %v1859 = vpop.permute.xlu0 %1858
        %v1861 = vsel %vm1398, %v1857, 0
        %v1864 = vsel %vm1435, %v1859, 0
        %1866 = vmatpush.bf16.msra.mxu0 0
        %1867 = vmatpush.bf16.msra.mxu0 0
        %1868 = vmatpush.bf16.msra.mxu0 0
        %1869 = vmatpush.bf16.msra.mxu0 0
        %1870 = vmatpush.bf16.msra.mxu0 0
        %1871 = vmatpush.bf16.msra.mxu0 0
        %1872 = vmatpush.bf16.msra.mxu0 0
        %1873 = vmatpush.bf16.msra.mxu0 %v1864
        %1874 = vmatmul.bf16.gmra.mxu0 %v1861
        %v1875 = vpop.f32.mrf.mxu0
        %v1876 = vadd.f32 0.0, %v1875
        %v1877 = vpop.f32.mrf.mxu0
        %1878 = vdwg.mxu0
        %1880 = vrot.lane.b32.xlu0 %v1876, 32
        %v1881 = vpop.permute.xlu0 %1880
        %v1883 = vadd.f32 %v1856, %v1881
        %vm1884 = vcmask 392448
        %1885 = vst.msk [vmem:[#allocation5] sm:$0xff] %vm1884, %v1883
        %v1886 = vld [vmem:[#allocation2] sm:$0xff]
        %v1887 = vld [vmem:[%s836] sm:$0xf]
        %v1888 = vld [vmem:[%s836 + $0x4] sm:$0xf]
        %v1889 = vld [vmem:[%s836 + $0x8] sm:$0xf]
        %v1890 = vld [vmem:[%s836 + $0xc] sm:$0xf]
        %v1891 = vld [vmem:[%s836 + $0x10] sm:$0xf]
        %v1892 = vld [vmem:[%s836 + $0x14] sm:$0xf]
        %v1893 = vld [vmem:[%s836 + $0x18] sm:$0xf]
        %v1894 = vld [vmem:[%s836 + $0x1c] sm:$0xf]
        %v1895 = vunpack.c.l.bf16 %v1887
        %v1896 = vunpack.c.l.bf16 %v1888
        %v1897 = vunpack.c.l.bf16 %v1889
        %v1898 = vunpack.c.l.bf16 %v1890
        %v1899 = vunpack.c.l.bf16 %v1891
        %v1900 = vunpack.c.l.bf16 %v1892
        %v1901 = vunpack.c.l.bf16 %v1893
        %v1902 = vunpack.c.l.bf16 %v1894
        %v1904 = vrot.slane %v1886, 1
        %v1905 = vrot.slane %v1886, 2
        %v1906 = vrot.slane %v1886, 3
        %v1907 = vrot.slane %v1886, 4
        %v1908 = vrot.slane %v1886, 5
        %v1909 = vrot.slane %v1886, 6
        %v1910 = vrot.slane %v1886, 7
        %v1911 = vperm.slane %v1886, 0
        %v1912 = vperm.slane %v1904, 0
        %v1913 = vperm.slane %v1905, 0
        %v1914 = vperm.slane %v1906, 0
        %v1915 = vperm.slane %v1907, 0
        %v1916 = vperm.slane %v1908, 0
        %v1917 = vperm.slane %v1909, 0
        %v1918 = vperm.slane %v1910, 0
        %v1927 = vmul.f32 %v1895, %v1911
        %v1928 = vmul.f32 %v1896, %v1912
        %v1929 = vmul.f32 %v1897, %v1913
        %v1930 = vmul.f32 %v1898, %v1914
        %v1931 = vmul.f32 %v1899, %v1915
        %v1932 = vmul.f32 %v1900, %v1916
        %v1933 = vmul.f32 %v1901, %v1917
        %v1934 = vmul.f32 %v1902, %v1918
        %1943 = vrot.lane.b32.xlu0 %v1927, 80
        %v1944 = vpop.permute.xlu0 %1943
        %1945 = vrot.lane.b32.xlu0 %v1928, 80
        %v1946 = vpop.permute.xlu0 %1945
        %1947 = vrot.lane.b32.xlu0 %v1929, 80
        %v1948 = vpop.permute.xlu0 %1947
        %1949 = vrot.lane.b32.xlu0 %v1930, 80
        %v1950 = vpop.permute.xlu0 %1949
        %1951 = vrot.lane.b32.xlu0 %v1931, 80
        %v1952 = vpop.permute.xlu0 %1951
        %1953 = vrot.lane.b32.xlu0 %v1932, 80
        %v1954 = vpop.permute.xlu0 %1953
        %1955 = vrot.lane.b32.xlu0 %v1933, 80
        %v1956 = vpop.permute.xlu0 %1955
        %1957 = vrot.lane.b32.xlu0 %v1934, 80
        %v1958 = vpop.permute.xlu0 %1957
        %v1967 = vsel %vm1318, %v1944, 0.0
        %1968 = vadd.xlane.f32.xlu0 %v1967
        %v1969 = vpop.xlane.xlu0 %1968
        %v1970 = vsel %vm1318, %v1946, 0.0
        %1971 = vadd.xlane.f32.xlu0 %v1970
        %v1972 = vpop.xlane.xlu0 %1971
        %v1973 = vsel %vm1318, %v1948, 0.0
        %1974 = vadd.xlane.f32.xlu0 %v1973
        %v1975 = vpop.xlane.xlu0 %1974
        %v1976 = vsel %vm1318, %v1950, 0.0
        %1977 = vadd.xlane.f32.xlu0 %v1976
        %v1978 = vpop.xlane.xlu0 %1977
        %v1979 = vsel %vm1318, %v1952, 0.0
        %1980 = vadd.xlane.f32.xlu0 %v1979
        %v1981 = vpop.xlane.xlu0 %1980
        %v1982 = vsel %vm1318, %v1954, 0.0
        %1983 = vadd.xlane.f32.xlu0 %v1982
        %v1984 = vpop.xlane.xlu0 %1983
        %v1985 = vsel %vm1318, %v1956, 0.0
        %1986 = vadd.xlane.f32.xlu0 %v1985
        %v1987 = vpop.xlane.xlu0 %1986
        %v1988 = vsel %vm1318, %v1958, 0.0
        %1989 = vadd.xlane.f32.xlu0 %v1988
        %v1990 = vpop.xlane.xlu0 %1989
        %v1991 = vpack.c.bf16 %v1886, %v1886
        %1993 = vrot.lane.b32.xlu0 %v1991, 80
        %v1994 = vpop.permute.xlu0 %1993
        %1995 = vrot.lane.b32.xlu0 %v1344, 80
        %v1996 = vpop.permute.xlu0 %1995
        %v2005 = vperm.slane %v1969, %v1354
        %v2006 = vperm.slane %v1972, %v1354
        %v2007 = vperm.slane %v1975, %v1354
        %v2008 = vperm.slane %v1978, %v1354
        %v2009 = vperm.slane %v1981, %v1354
        %v2010 = vperm.slane %v1984, %v1354
        %v2011 = vperm.slane %v1987, %v1354
        %v2012 = vperm.slane %v1990, %v1354
        %v2013 = vsel %vm1363, %v2006, %v2005
        %v2014 = vsel %vm1365, %v2007, %v2013
        %v2015 = vsel %vm1367, %v2008, %v2014
        %v2016 = vsel %vm1369, %v2009, %v2015
        %v2017 = vsel %vm1371, %v2010, %v2016
        %v2018 = vsel %vm1373, %v2011, %v2017
        %v2019 = vsel %vm1375, %v2012, %v2018
        %v2022 = vsel %vm1318, %v1994, 0
        %v2025 = vsel %vm1318, %v1996, 0
        %2027 = vmatpush.bf16.xpose.msra.mxu0 0
        %2028 = vmatpush.bf16.xpose.msra.mxu0 0
        %2029 = vmatpush.bf16.xpose.msra.mxu0 0
        %2030 = vmatpush.bf16.xpose.msra.mxu0 0
        %2031 = vmatpush.bf16.xpose.msra.mxu0 0
        %2032 = vmatpush.bf16.xpose.msra.mxu0 0
        %2033 = vmatpush.bf16.xpose.msra.mxu0 0
        %2034 = vmatpush.bf16.xpose.msra.mxu0 %v2025
        %2035 = vmatmul.bf16.gmra.mxu0 %v2022
        %v2036 = vpop.f32.mrf.mxu0
        %v2037 = vadd.f32 %v2019, %v2036
        %v2038 = vpop.f32.mrf.mxu0
        %2039 = vdwg.mxu0
        %v2040 = vld [vmem:[#allocation3] sm:$0xff]
        %v2041 = vsel %vm1398, %v2037, -inf
        %2042 = vmax.xlane.f32.xlu0 %v2041
        %v2043 = vpop.xlane.xlu0 %2042
        %v2044 = vmax.f32 %v2040, %v2043
        %v2045 = vsub.f32 %v2040, %v2044
        %v2046 = vmul.f32 %v2045, 1.442695
        %v2047 = vpow.pop %v2046
        %2049 = vset.pattern.permute.xlu0 3
        %2050 = vperm.xlu0 %2049, %v2044
        %v2051 = vpop.permute.xlu0 %2050
        %v2053 = vsub.f32 %v2037, %v2051
        %v2054 = vmul.f32 %v2053, 1.442695
        %v2055 = vpow.pop %v2054
        %v2056 = vld [vmem:[#allocation4] sm:$0xff]
        %v2057 = vmul.f32 %v2047, %v2056
        %v2058 = vsel %vm1398, %v2055, 0.0
        %2059 = vadd.xlane.f32.xlu0 %v2058
        %v2060 = vpop.xlane.xlu0 %2059
        %v2061 = vadd.f32 %v2057, %v2060
        %vm2062 = vcmask 31768
        %2063 = vst.msk [vmem:[#allocation4] sm:$0xff] %vm2062, %v2061
        %2064 = vst.msk [vmem:[#allocation3] sm:$0xff] %vm2062, %v2044
        %v2065 = vld [vmem:[#allocation5] sm:$0xff]
        %2067 = vset.pattern.permute.xlu0 3
        %2068 = vperm.xlu0 %2067, %v2047
        %v2069 = vpop.permute.xlu0 %2068
        %v2071 = vmul.f32 %v2069, %v2065
        %v2072 = vpack.c.bf16 %v2055, %v2055
        %2073 = vrot.lane.b32.xlu0 %v1431, 80
        %v2074 = vpop.permute.xlu0 %2073
        %v2076 = vsel %vm1398, %v2072, 0
        %v2079 = vsel %vm1435, %v2074, 0
        %2081 = vmatpush.bf16.msra.mxu0 0
        %2082 = vmatpush.bf16.msra.mxu0 0
        %2083 = vmatpush.bf16.msra.mxu0 0
        %2084 = vmatpush.bf16.msra.mxu0 0
        %2085 = vmatpush.bf16.msra.mxu0 0
        %2086 = vmatpush.bf16.msra.mxu0 0
        %2087 = vmatpush.bf16.msra.mxu0 0
        %2088 = vmatpush.bf16.msra.mxu0 %v2079
        %2089 = vmatmul.bf16.gmra.mxu0 %v2076
        %v2090 = vpop.f32.mrf.mxu0
        %v2091 = vadd.f32 0.0, %v2090
        %v2092 = vpop.f32.mrf.mxu0
        %2093 = vdwg.mxu0
        %2095 = vrot.lane.b32.xlu0 %v2091, 48
        %v2096 = vpop.permute.xlu0 %2095
        %v2098 = vadd.f32 %v2071, %v2096
        %vm2099 = vcmask 523648
        %2100 = vst.msk [vmem:[#allocation5] sm:$0xff] %vm2099, %v2098
        %v2101 = vld [vmem:[#allocation2] sm:$0xff]
        %v2102 = vld [vmem:[%s836] sm:$0xf]
        %v2103 = vld [vmem:[%s836 + $0x4] sm:$0xf]
        %v2104 = vld [vmem:[%s836 + $0x8] sm:$0xf]
        %v2105 = vld [vmem:[%s836 + $0xc] sm:$0xf]
        %v2106 = vld [vmem:[%s836 + $0x10] sm:$0xf]
        %v2107 = vld [vmem:[%s836 + $0x14] sm:$0xf]
        %v2108 = vld [vmem:[%s836 + $0x18] sm:$0xf]
        %v2109 = vld [vmem:[%s836 + $0x1c] sm:$0xf]
        %v2110 = vunpack.c.l.bf16 %v2102
        %v2111 = vunpack.c.l.bf16 %v2103
        %v2112 = vunpack.c.l.bf16 %v2104
        %v2113 = vunpack.c.l.bf16 %v2105
        %v2114 = vunpack.c.l.bf16 %v2106
        %v2115 = vunpack.c.l.bf16 %v2107
        %v2116 = vunpack.c.l.bf16 %v2108
        %v2117 = vunpack.c.l.bf16 %v2109
        %v2119 = vrot.slane %v2101, 1
        %v2120 = vrot.slane %v2101, 2
        %v2121 = vrot.slane %v2101, 3
        %v2122 = vrot.slane %v2101, 4
        %v2123 = vrot.slane %v2101, 5
        %v2124 = vrot.slane %v2101, 6
        %v2125 = vrot.slane %v2101, 7
        %v2126 = vperm.slane %v2101, 0
        %v2127 = vperm.slane %v2119, 0
        %v2128 = vperm.slane %v2120, 0
        %v2129 = vperm.slane %v2121, 0
        %v2130 = vperm.slane %v2122, 0
        %v2131 = vperm.slane %v2123, 0
        %v2132 = vperm.slane %v2124, 0
        %v2133 = vperm.slane %v2125, 0
        %v2142 = vmul.f32 %v2110, %v2126
        %v2143 = vmul.f32 %v2111, %v2127
        %v2144 = vmul.f32 %v2112, %v2128
        %v2145 = vmul.f32 %v2113, %v2129
        %v2146 = vmul.f32 %v2114, %v2130
        %v2147 = vmul.f32 %v2115, %v2131
        %v2148 = vmul.f32 %v2116, %v2132
        %v2149 = vmul.f32 %v2117, %v2133
        %2158 = vrot.lane.b32.xlu0 %v2142, 64
        %v2159 = vpop.permute.xlu0 %2158
        %2160 = vrot.lane.b32.xlu0 %v2143, 64
        %v2161 = vpop.permute.xlu0 %2160
        %2162 = vrot.lane.b32.xlu0 %v2144, 64
        %v2163 = vpop.permute.xlu0 %2162
        %2164 = vrot.lane.b32.xlu0 %v2145, 64
        %v2165 = vpop.permute.xlu0 %2164
        %2166 = vrot.lane.b32.xlu0 %v2146, 64
        %v2167 = vpop.permute.xlu0 %2166
        %2168 = vrot.lane.b32.xlu0 %v2147, 64
        %v2169 = vpop.permute.xlu0 %2168
        %2170 = vrot.lane.b32.xlu0 %v2148, 64
        %v2171 = vpop.permute.xlu0 %2170
        %2172 = vrot.lane.b32.xlu0 %v2149, 64
        %v2173 = vpop.permute.xlu0 %2172
        %v2182 = vsel %vm1318, %v2159, 0.0
        %2183 = vadd.xlane.f32.xlu0 %v2182
        %v2184 = vpop.xlane.xlu0 %2183
        %v2185 = vsel %vm1318, %v2161, 0.0
        %2186 = vadd.xlane.f32.xlu0 %v2185
        %v2187 = vpop.xlane.xlu0 %2186
        %v2188 = vsel %vm1318, %v2163, 0.0
        %2189 = vadd.xlane.f32.xlu0 %v2188
        %v2190 = vpop.xlane.xlu0 %2189
        %v2191 = vsel %vm1318, %v2165, 0.0
        %2192 = vadd.xlane.f32.xlu0 %v2191
        %v2193 = vpop.xlane.xlu0 %2192
        %v2194 = vsel %vm1318, %v2167, 0.0
        %2195 = vadd.xlane.f32.xlu0 %v2194
        %v2196 = vpop.xlane.xlu0 %2195
        %v2197 = vsel %vm1318, %v2169, 0.0
        %2198 = vadd.xlane.f32.xlu0 %v2197
        %v2199 = vpop.xlane.xlu0 %2198
        %v2200 = vsel %vm1318, %v2171, 0.0
        %2201 = vadd.xlane.f32.xlu0 %v2200
        %v2202 = vpop.xlane.xlu0 %2201
        %v2203 = vsel %vm1318, %v2173, 0.0
        %2204 = vadd.xlane.f32.xlu0 %v2203
        %v2205 = vpop.xlane.xlu0 %2204
        %v2206 = vpack.c.bf16 %v2101, %v2101
        %2208 = vrot.lane.b32.xlu0 %v2206, 64
        %v2209 = vpop.permute.xlu0 %2208
        %2210 = vrot.lane.b32.xlu0 %v1344, 64
        %v2211 = vpop.permute.xlu0 %2210
        %v2220 = vperm.slane %v2184, %v1354
        %v2221 = vperm.slane %v2187, %v1354
        %v2222 = vperm.slane %v2190, %v1354
        %v2223 = vperm.slane %v2193, %v1354
        %v2224 = vperm.slane %v2196, %v1354
        %v2225 = vperm.slane %v2199, %v1354
        %v2226 = vperm.slane %v2202, %v1354
        %v2227 = vperm.slane %v2205, %v1354
        %v2228 = vsel %vm1363, %v2221, %v2220
        %v2229 = vsel %vm1365, %v2222, %v2228
        %v2230 = vsel %vm1367, %v2223, %v2229
        %v2231 = vsel %vm1369, %v2224, %v2230
        %v2232 = vsel %vm1371, %v2225, %v2231
        %v2233 = vsel %vm1373, %v2226, %v2232
        %v2234 = vsel %vm1375, %v2227, %v2233
        %v2237 = vsel %vm1318, %v2209, 0
        %v2240 = vsel %vm1318, %v2211, 0
        %2242 = vmatpush.bf16.xpose.msra.mxu0 0
        %2243 = vmatpush.bf16.xpose.msra.mxu0 0
        %2244 = vmatpush.bf16.xpose.msra.mxu0 0
        %2245 = vmatpush.bf16.xpose.msra.mxu0 0
        %2246 = vmatpush.bf16.xpose.msra.mxu0 0
        %2247 = vmatpush.bf16.xpose.msra.mxu0 0
        %2248 = vmatpush.bf16.xpose.msra.mxu0 0
        %2249 = vmatpush.bf16.xpose.msra.mxu0 %v2240
        %2250 = vmatmul.bf16.gmra.mxu0 %v2237
        %v2251 = vpop.f32.mrf.mxu0
        %v2252 = vadd.f32 %v2234, %v2251
        %v2253 = vpop.f32.mrf.mxu0
        %2254 = vdwg.mxu0
        %v2255 = vld [vmem:[#allocation3] sm:$0xff]
        %v2256 = vsel %vm1398, %v2252, -inf
        %2257 = vmax.xlane.f32.xlu0 %v2256
        %v2258 = vpop.xlane.xlu0 %2257
        %v2259 = vmax.f32 %v2255, %v2258
        %v2260 = vsub.f32 %v2255, %v2259
        %v2261 = vmul.f32 %v2260, 1.442695
        %v2262 = vpow.pop %v2261
        %2264 = vset.pattern.permute.xlu0 4
        %2265 = vperm.xlu0 %2264, %v2259
        %v2266 = vpop.permute.xlu0 %2265
        %v2268 = vsub.f32 %v2252, %v2266
        %v2269 = vmul.f32 %v2268, 1.442695
        %v2270 = vpow.pop %v2269
        %v2271 = vld [vmem:[#allocation4] sm:$0xff]
        %v2272 = vmul.f32 %v2262, %v2271
        %v2273 = vsel %vm1398, %v2270, 0.0
        %2274 = vadd.xlane.f32.xlu0 %v2273
        %v2275 = vpop.xlane.xlu0 %2274
        %v2276 = vadd.f32 %v2272, %v2275
        %vm2277 = vcmask 39968
        %2278 = vst.msk [vmem:[#allocation4] sm:$0xff] %vm2277, %v2276
        %2279 = vst.msk [vmem:[#allocation3] sm:$0xff] %vm2277, %v2259
        %v2280 = vld [vmem:[#allocation5] sm:$0xff]
        %2282 = vset.pattern.permute.xlu0 4
        %2283 = vperm.xlu0 %2282, %v2262
        %v2284 = vpop.permute.xlu0 %2283
        %v2286 = vmul.f32 %v2284, %v2280
        %v2287 = vpack.c.bf16 %v2270, %v2270
        %2288 = vrot.lane.b32.xlu0 %v1431, 64
        %v2289 = vpop.permute.xlu0 %2288
        %v2291 = vsel %vm1398, %v2287, 0
        %v2294 = vsel %vm1435, %v2289, 0
        %2296 = vmatpush.bf16.msra.mxu0 0
        %2297 = vmatpush.bf16.msra.mxu0 0
        %2298 = vmatpush.bf16.msra.mxu0 0
        %2299 = vmatpush.bf16.msra.mxu0 0
        %2300 = vmatpush.bf16.msra.mxu0 0
        %2301 = vmatpush.bf16.msra.mxu0 0
        %2302 = vmatpush.bf16.msra.mxu0 0
        %2303 = vmatpush.bf16.msra.mxu0 %v2294
        %2304 = vmatmul.bf16.gmra.mxu0 %v2291
        %v2305 = vpop.f32.mrf.mxu0
        %v2306 = vadd.f32 0.0, %v2305
        %v2307 = vpop.f32.mrf.mxu0
        %2308 = vdwg.mxu0
        %2310 = vrot.lane.b32.xlu0 %v2306, 64
        %v2311 = vpop.permute.xlu0 %2310
        %v2313 = vadd.f32 %v2286, %v2311
        %vm2314 = vcmask 654848
        %2315 = vst.msk [vmem:[#allocation5] sm:$0xff] %vm2314, %v2313
        %v2316 = vld [vmem:[#allocation2] sm:$0xff]
        %v2317 = vld [vmem:[%s836] sm:$0xf]
        %v2318 = vld [vmem:[%s836 + $0x4] sm:$0xf]
        %v2319 = vld [vmem:[%s836 + $0x8] sm:$0xf]
        %v2320 = vld [vmem:[%s836 + $0xc] sm:$0xf]
        %v2321 = vld [vmem:[%s836 + $0x10] sm:$0xf]
        %v2322 = vld [vmem:[%s836 + $0x14] sm:$0xf]
        %v2323 = vld [vmem:[%s836 + $0x18] sm:$0xf]
        %v2324 = vld [vmem:[%s836 + $0x1c] sm:$0xf]
        %v2325 = vunpack.c.l.bf16 %v2317
        %v2326 = vunpack.c.l.bf16 %v2318
        %v2327 = vunpack.c.l.bf16 %v2319
        %v2328 = vunpack.c.l.bf16 %v2320
        %v2329 = vunpack.c.l.bf16 %v2321
        %v2330 = vunpack.c.l.bf16 %v2322
        %v2331 = vunpack.c.l.bf16 %v2323
        %v2332 = vunpack.c.l.bf16 %v2324
        %v2334 = vrot.slane %v2316, 1
        %v2335 = vrot.slane %v2316, 2
        %v2336 = vrot.slane %v2316, 3
        %v2337 = vrot.slane %v2316, 4
        %v2338 = vrot.slane %v2316, 5
        %v2339 = vrot.slane %v2316, 6
        %v2340 = vrot.slane %v2316, 7
        %v2341 = vperm.slane %v2316, 0
        %v2342 = vperm.slane %v2334, 0
        %v2343 = vperm.slane %v2335, 0
        %v2344 = vperm.slane %v2336, 0
        %v2345 = vperm.slane %v2337, 0
        %v2346 = vperm.slane %v2338, 0
        %v2347 = vperm.slane %v2339, 0
        %v2348 = vperm.slane %v2340, 0
        %v2357 = vmul.f32 %v2325, %v2341
        %v2358 = vmul.f32 %v2326, %v2342
        %v2359 = vmul.f32 %v2327, %v2343
        %v2360 = vmul.f32 %v2328, %v2344
        %v2361 = vmul.f32 %v2329, %v2345
        %v2362 = vmul.f32 %v2330, %v2346
        %v2363 = vmul.f32 %v2331, %v2347
        %v2364 = vmul.f32 %v2332, %v2348
        %2373 = vrot.lane.b32.xlu0 %v2357, 48
        %v2374 = vpop.permute.xlu0 %2373
        %2375 = vrot.lane.b32.xlu0 %v2358, 48
        %v2376 = vpop.permute.xlu0 %2375
        %2377 = vrot.lane.b32.xlu0 %v2359, 48
        %v2378 = vpop.permute.xlu0 %2377
        %2379 = vrot.lane.b32.xlu0 %v2360, 48
        %v2380 = vpop.permute.xlu0 %2379
        %2381 = vrot.lane.b32.xlu0 %v2361, 48
        %v2382 = vpop.permute.xlu0 %2381
        %2383 = vrot.lane.b32.xlu0 %v2362, 48
        %v2384 = vpop.permute.xlu0 %2383
        %2385 = vrot.lane.b32.xlu0 %v2363, 48
        %v2386 = vpop.permute.xlu0 %2385
        %2387 = vrot.lane.b32.xlu0 %v2364, 48
        %v2388 = vpop.permute.xlu0 %2387
        %v2397 = vsel %vm1318, %v2374, 0.0
        %2398 = vadd.xlane.f32.xlu0 %v2397
        %v2399 = vpop.xlane.xlu0 %2398
        %v2400 = vsel %vm1318, %v2376, 0.0
        %2401 = vadd.xlane.f32.xlu0 %v2400
        %v2402 = vpop.xlane.xlu0 %2401
        %v2403 = vsel %vm1318, %v2378, 0.0
        %2404 = vadd.xlane.f32.xlu0 %v2403
        %v2405 = vpop.xlane.xlu0 %2404
        %v2406 = vsel %vm1318, %v2380, 0.0
        %2407 = vadd.xlane.f32.xlu0 %v2406
        %v2408 = vpop.xlane.xlu0 %2407
        %v2409 = vsel %vm1318, %v2382, 0.0
        %2410 = vadd.xlane.f32.xlu0 %v2409
        %v2411 = vpop.xlane.xlu0 %2410
        %v2412 = vsel %vm1318, %v2384, 0.0
        %2413 = vadd.xlane.f32.xlu0 %v2412
        %v2414 = vpop.xlane.xlu0 %2413
        %v2415 = vsel %vm1318, %v2386, 0.0
        %2416 = vadd.xlane.f32.xlu0 %v2415
        %v2417 = vpop.xlane.xlu0 %2416
        %v2418 = vsel %vm1318, %v2388, 0.0
        %2419 = vadd.xlane.f32.xlu0 %v2418
        %v2420 = vpop.xlane.xlu0 %2419
        %v2421 = vpack.c.bf16 %v2316, %v2316
        %2423 = vrot.lane.b32.xlu0 %v2421, 48
        %v2424 = vpop.permute.xlu0 %2423
        %2425 = vrot.lane.b32.xlu0 %v1344, 48
        %v2426 = vpop.permute.xlu0 %2425
        %v2435 = vperm.slane %v2399, %v1354
        %v2436 = vperm.slane %v2402, %v1354
        %v2437 = vperm.slane %v2405, %v1354
        %v2438 = vperm.slane %v2408, %v1354
        %v2439 = vperm.slane %v2411, %v1354
        %v2440 = vperm.slane %v2414, %v1354
        %v2441 = vperm.slane %v2417, %v1354
        %v2442 = vperm.slane %v2420, %v1354
        %v2443 = vsel %vm1363, %v2436, %v2435
        %v2444 = vsel %vm1365, %v2437, %v2443
        %v2445 = vsel %vm1367, %v2438, %v2444
        %v2446 = vsel %vm1369, %v2439, %v2445
        %v2447 = vsel %vm1371, %v2440, %v2446
        %v2448 = vsel %vm1373, %v2441, %v2447
        %v2449 = vsel %vm1375, %v2442, %v2448
        %v2452 = vsel %vm1318, %v2424, 0
        %v2455 = vsel %vm1318, %v2426, 0
        %2457 = vmatpush.bf16.xpose.msra.mxu0 0
        %2458 = vmatpush.bf16.xpose.msra.mxu0 0
        %2459 = vmatpush.bf16.xpose.msra.mxu0 0
        %2460 = vmatpush.bf16.xpose.msra.mxu0 0
        %2461 = vmatpush.bf16.xpose.msra.mxu0 0
        %2462 = vmatpush.bf16.xpose.msra.mxu0 0
        %2463 = vmatpush.bf16.xpose.msra.mxu0 0
        %2464 = vmatpush.bf16.xpose.msra.mxu0 %v2455
        %2465 = vmatmul.bf16.gmra.mxu0 %v2452
        %v2466 = vpop.f32.mrf.mxu0
        %v2467 = vadd.f32 %v2449, %v2466
        %v2468 = vpop.f32.mrf.mxu0
        %2469 = vdwg.mxu0
        %v2470 = vld [vmem:[#allocation3] sm:$0xff]
        %v2471 = vsel %vm1398, %v2467, -inf
        %2472 = vmax.xlane.f32.xlu0 %v2471
        %v2473 = vpop.xlane.xlu0 %2472
        %v2474 = vmax.f32 %v2470, %v2473
        %v2475 = vsub.f32 %v2470, %v2474
        %v2476 = vmul.f32 %v2475, 1.442695
        %v2477 = vpow.pop %v2476
        %2479 = vset.pattern.permute.xlu0 5
        %2480 = vperm.xlu0 %2479, %v2474
        %v2481 = vpop.permute.xlu0 %2480
        %v2483 = vsub.f32 %v2467, %v2481
        %v2484 = vmul.f32 %v2483, 1.442695
        %v2485 = vpow.pop %v2484
        %v2486 = vld [vmem:[#allocation4] sm:$0xff]
        %v2487 = vmul.f32 %v2477, %v2486
        %v2488 = vsel %vm1398, %v2485, 0.0
        %2489 = vadd.xlane.f32.xlu0 %v2488
        %v2490 = vpop.xlane.xlu0 %2489
        %v2491 = vadd.f32 %v2487, %v2490
        %vm2492 = vcmask 48168
        %2493 = vst.msk [vmem:[#allocation4] sm:$0xff] %vm2492, %v2491
        %2494 = vst.msk [vmem:[#allocation3] sm:$0xff] %vm2492, %v2474
        %v2495 = vld [vmem:[#allocation5] sm:$0xff]
        %2497 = vset.pattern.permute.xlu0 5
        %2498 = vperm.xlu0 %2497, %v2477
        %v2499 = vpop.permute.xlu0 %2498
        %v2501 = vmul.f32 %v2499, %v2495
        %v2502 = vpack.c.bf16 %v2485, %v2485
        %2503 = vrot.lane.b32.xlu0 %v1431, 48
        %v2504 = vpop.permute.xlu0 %2503
        %v2506 = vsel %vm1398, %v2502, 0
        %v2509 = vsel %vm1435, %v2504, 0
        %2511 = vmatpush.bf16.msra.mxu0 0
        %2512 = vmatpush.bf16.msra.mxu0 0
        %2513 = vmatpush.bf16.msra.mxu0 0
        %2514 = vmatpush.bf16.msra.mxu0 0
        %2515 = vmatpush.bf16.msra.mxu0 0
        %2516 = vmatpush.bf16.msra.mxu0 0
        %2517 = vmatpush.bf16.msra.mxu0 0
        %2518 = vmatpush.bf16.msra.mxu0 %v2509
        %2519 = vmatmul.bf16.gmra.mxu0 %v2506
        %v2520 = vpop.f32.mrf.mxu0
        %v2521 = vadd.f32 0.0, %v2520
        %v2522 = vpop.f32.mrf.mxu0
        %2523 = vdwg.mxu0
        %2525 = vrot.lane.b32.xlu0 %v2521, 80
        %v2526 = vpop.permute.xlu0 %2525
        %v2528 = vadd.f32 %v2501, %v2526
        %vm2529 = vcmask 786048
        %2530 = vst.msk [vmem:[#allocation5] sm:$0xff] %vm2529, %v2528
        %v2531 = vld [vmem:[#allocation2] sm:$0xff]
        %v2532 = vld [vmem:[%s836] sm:$0xf]
        %v2533 = vld [vmem:[%s836 + $0x4] sm:$0xf]
        %v2534 = vld [vmem:[%s836 + $0x8] sm:$0xf]
        %v2535 = vld [vmem:[%s836 + $0xc] sm:$0xf]
        %v2536 = vld [vmem:[%s836 + $0x10] sm:$0xf]
        %v2537 = vld [vmem:[%s836 + $0x14] sm:$0xf]
        %v2538 = vld [vmem:[%s836 + $0x18] sm:$0xf]
        %v2539 = vld [vmem:[%s836 + $0x1c] sm:$0xf]
        %v2540 = vunpack.c.l.bf16 %v2532
        %v2541 = vunpack.c.l.bf16 %v2533
        %v2542 = vunpack.c.l.bf16 %v2534
        %v2543 = vunpack.c.l.bf16 %v2535
        %v2544 = vunpack.c.l.bf16 %v2536
        %v2545 = vunpack.c.l.bf16 %v2537
        %v2546 = vunpack.c.l.bf16 %v2538
        %v2547 = vunpack.c.l.bf16 %v2539
        %v2549 = vrot.slane %v2531, 1
        %v2550 = vrot.slane %v2531, 2
        %v2551 = vrot.slane %v2531, 3
        %v2552 = vrot.slane %v2531, 4
        %v2553 = vrot.slane %v2531, 5
        %v2554 = vrot.slane %v2531, 6
        %v2555 = vrot.slane %v2531, 7
        %v2556 = vperm.slane %v2531, 0
        %v2557 = vperm.slane %v2549, 0
        %v2558 = vperm.slane %v2550, 0
        %v2559 = vperm.slane %v2551, 0
        %v2560 = vperm.slane %v2552, 0
        %v2561 = vperm.slane %v2553, 0
        %v2562 = vperm.slane %v2554, 0
        %v2563 = vperm.slane %v2555, 0
        %v2572 = vmul.f32 %v2540, %v2556
        %v2573 = vmul.f32 %v2541, %v2557
        %v2574 = vmul.f32 %v2542, %v2558
        %v2575 = vmul.f32 %v2543, %v2559
        %v2576 = vmul.f32 %v2544, %v2560
        %v2577 = vmul.f32 %v2545, %v2561
        %v2578 = vmul.f32 %v2546, %v2562
        %v2579 = vmul.f32 %v2547, %v2563
        %2588 = vrot.lane.b32.xlu0 %v2572, 32
        %v2589 = vpop.permute.xlu0 %2588
        %2590 = vrot.lane.b32.xlu0 %v2573, 32
        %v2591 = vpop.permute.xlu0 %2590
        %2592 = vrot.lane.b32.xlu0 %v2574, 32
        %v2593 = vpop.permute.xlu0 %2592
        %2594 = vrot.lane.b32.xlu0 %v2575, 32
        %v2595 = vpop.permute.xlu0 %2594
        %2596 = vrot.lane.b32.xlu0 %v2576, 32
        %v2597 = vpop.permute.xlu0 %2596
        %2598 = vrot.lane.b32.xlu0 %v2577, 32
        %v2599 = vpop.permute.xlu0 %2598
        %2600 = vrot.lane.b32.xlu0 %v2578, 32
        %v2601 = vpop.permute.xlu0 %2600
        %2602 = vrot.lane.b32.xlu0 %v2579, 32
        %v2603 = vpop.permute.xlu0 %2602
        %v2612 = vsel %vm1318, %v2589, 0.0
        %2613 = vadd.xlane.f32.xlu0 %v2612
        %v2614 = vpop.xlane.xlu0 %2613
        %v2615 = vsel %vm1318, %v2591, 0.0
        %2616 = vadd.xlane.f32.xlu0 %v2615
        %v2617 = vpop.xlane.xlu0 %2616
        %v2618 = vsel %vm1318, %v2593, 0.0
        %2619 = vadd.xlane.f32.xlu0 %v2618
        %v2620 = vpop.xlane.xlu0 %2619
        %v2621 = vsel %vm1318, %v2595, 0.0
        %2622 = vadd.xlane.f32.xlu0 %v2621
        %v2623 = vpop.xlane.xlu0 %2622
        %v2624 = vsel %vm1318, %v2597, 0.0
        %2625 = vadd.xlane.f32.xlu0 %v2624
        %v2626 = vpop.xlane.xlu0 %2625
        %v2627 = vsel %vm1318, %v2599, 0.0
        %2628 = vadd.xlane.f32.xlu0 %v2627
        %v2629 = vpop.xlane.xlu0 %2628
        %v2630 = vsel %vm1318, %v2601, 0.0
        %2631 = vadd.xlane.f32.xlu0 %v2630
        %v2632 = vpop.xlane.xlu0 %2631
        %v2633 = vsel %vm1318, %v2603, 0.0
        %2634 = vadd.xlane.f32.xlu0 %v2633
        %v2635 = vpop.xlane.xlu0 %2634
        %v2636 = vpack.c.bf16 %v2531, %v2531
        %2638 = vrot.lane.b32.xlu0 %v2636, 32
        %v2639 = vpop.permute.xlu0 %2638
        %2640 = vrot.lane.b32.xlu0 %v1344, 32
        %v2641 = vpop.permute.xlu0 %2640
        %v2650 = vperm.slane %v2614, %v1354
        %v2651 = vperm.slane %v2617, %v1354
        %v2652 = vperm.slane %v2620, %v1354
        %v2653 = vperm.slane %v2623, %v1354
        %v2654 = vperm.slane %v2626, %v1354
        %v2655 = vperm.slane %v2629, %v1354
        %v2656 = vperm.slane %v2632, %v1354
        %v2657 = vperm.slane %v2635, %v1354
        %v2658 = vsel %vm1363, %v2651, %v2650
        %v2659 = vsel %vm1365, %v2652, %v2658
        %v2660 = vsel %vm1367, %v2653, %v2659
        %v2661 = vsel %vm1369, %v2654, %v2660
        %v2662 = vsel %vm1371, %v2655, %v2661
        %v2663 = vsel %vm1373, %v2656, %v2662
        %v2664 = vsel %vm1375, %v2657, %v2663
        %v2667 = vsel %vm1318, %v2639, 0
        %v2670 = vsel %vm1318, %v2641, 0
        %2672 = vmatpush.bf16.xpose.msra.mxu0 0
        %2673 = vmatpush.bf16.xpose.msra.mxu0 0
        %2674 = vmatpush.bf16.xpose.msra.mxu0 0
        %2675 = vmatpush.bf16.xpose.msra.mxu0 0
        %2676 = vmatpush.bf16.xpose.msra.mxu0 0
        %2677 = vmatpush.bf16.xpose.msra.mxu0 0
        %2678 = vmatpush.bf16.xpose.msra.mxu0 0
        %2679 = vmatpush.bf16.xpose.msra.mxu0 %v2670
        %2680 = vmatmul.bf16.gmra.mxu0 %v2667
        %v2681 = vpop.f32.mrf.mxu0
        %v2682 = vadd.f32 %v2664, %v2681
        %v2683 = vpop.f32.mrf.mxu0
        %2684 = vdwg.mxu0
        %v2685 = vld [vmem:[#allocation3] sm:$0xff]
        %v2686 = vsel %vm1398, %v2682, -inf
        %2687 = vmax.xlane.f32.xlu0 %v2686
        %v2688 = vpop.xlane.xlu0 %2687
        %v2689 = vmax.f32 %v2685, %v2688
        %v2690 = vsub.f32 %v2685, %v2689
        %v2691 = vmul.f32 %v2690, 1.442695
        %v2692 = vpow.pop %v2691
        %2694 = vset.pattern.permute.xlu0 6
        %2695 = vperm.xlu0 %2694, %v2689
        %v2696 = vpop.permute.xlu0 %2695
        %v2698 = vsub.f32 %v2682, %v2696
        %v2699 = vmul.f32 %v2698, 1.442695
        %v2700 = vpow.pop %v2699
        %v2701 = vld [vmem:[#allocation4] sm:$0xff]
        %v2702 = vmul.f32 %v2692, %v2701
        %v2703 = vsel %vm1398, %v2700, 0.0
        %2704 = vadd.xlane.f32.xlu0 %v2703
        %v2705 = vpop.xlane.xlu0 %2704
        %v2706 = vadd.f32 %v2702, %v2705
        %vm2707 = vcmask 56368
        %2708 = vst.msk [vmem:[#allocation4] sm:$0xff] %vm2707, %v2706
        %2709 = vst.msk [vmem:[#allocation3] sm:$0xff] %vm2707, %v2689
        %v2710 = vld [vmem:[#allocation5] sm:$0xff]
        %2712 = vset.pattern.permute.xlu0 6
        %2713 = vperm.xlu0 %2712, %v2692
        %v2714 = vpop.permute.xlu0 %2713
        %v2716 = vmul.f32 %v2714, %v2710
        %v2717 = vpack.c.bf16 %v2700, %v2700
        %2718 = vrot.lane.b32.xlu0 %v1431, 32
        %v2719 = vpop.permute.xlu0 %2718
        %v2721 = vsel %vm1398, %v2717, 0
        %v2724 = vsel %vm1435, %v2719, 0
        %2726 = vmatpush.bf16.msra.mxu0 0
        %2727 = vmatpush.bf16.msra.mxu0 0
        %2728 = vmatpush.bf16.msra.mxu0 0
        %2729 = vmatpush.bf16.msra.mxu0 0
        %2730 = vmatpush.bf16.msra.mxu0 0
        %2731 = vmatpush.bf16.msra.mxu0 0
        %2732 = vmatpush.bf16.msra.mxu0 0
        %2733 = vmatpush.bf16.msra.mxu0 %v2724
        %2734 = vmatmul.bf16.gmra.mxu0 %v2721
        %v2735 = vpop.f32.mrf.mxu0
        %v2736 = vadd.f32 0.0, %v2735
        %v2737 = vpop.f32.mrf.mxu0
        %2738 = vdwg.mxu0
        %2740 = vrot.lane.b32.xlu0 %v2736, 96
        %v2741 = vpop.permute.xlu0 %2740
        %v2743 = vadd.f32 %v2716, %v2741
        %vm2744 = vcmask 917248
        %2745 = vst.msk [vmem:[#allocation5] sm:$0xff] %vm2744, %v2743
        %v2746 = vld [vmem:[#allocation2] sm:$0xff]
        %v2747 = vld [vmem:[%s836] sm:$0xf]
        %v2748 = vld [vmem:[%s836 + $0x4] sm:$0xf]
        %v2749 = vld [vmem:[%s836 + $0x8] sm:$0xf]
        %v2750 = vld [vmem:[%s836 + $0xc] sm:$0xf]
        %v2751 = vld [vmem:[%s836 + $0x10] sm:$0xf]
        %v2752 = vld [vmem:[%s836 + $0x14] sm:$0xf]
        %v2753 = vld [vmem:[%s836 + $0x18] sm:$0xf]
        %v2754 = vld [vmem:[%s836 + $0x1c] sm:$0xf]
        %v2755 = vunpack.c.l.bf16 %v2747
        %v2756 = vunpack.c.l.bf16 %v2748
        %v2757 = vunpack.c.l.bf16 %v2749
        %v2758 = vunpack.c.l.bf16 %v2750
        %v2759 = vunpack.c.l.bf16 %v2751
        %v2760 = vunpack.c.l.bf16 %v2752
        %v2761 = vunpack.c.l.bf16 %v2753
        %v2762 = vunpack.c.l.bf16 %v2754
        %v2764 = vrot.slane %v2746, 1
        %v2765 = vrot.slane %v2746, 2
        %v2766 = vrot.slane %v2746, 3
        %v2767 = vrot.slane %v2746, 4
        %v2768 = vrot.slane %v2746, 5
        %v2769 = vrot.slane %v2746, 6
        %v2770 = vrot.slane %v2746, 7
        %v2771 = vperm.slane %v2746, 0
        %v2772 = vperm.slane %v2764, 0
        %v2773 = vperm.slane %v2765, 0
        %v2774 = vperm.slane %v2766, 0
        %v2775 = vperm.slane %v2767, 0
        %v2776 = vperm.slane %v2768, 0
        %v2777 = vperm.slane %v2769, 0
        %v2778 = vperm.slane %v2770, 0
        %v2787 = vmul.f32 %v2755, %v2771
        %v2788 = vmul.f32 %v2756, %v2772
        %v2789 = vmul.f32 %v2757, %v2773
        %v2790 = vmul.f32 %v2758, %v2774
        %v2791 = vmul.f32 %v2759, %v2775
        %v2792 = vmul.f32 %v2760, %v2776
        %v2793 = vmul.f32 %v2761, %v2777
        %v2794 = vmul.f32 %v2762, %v2778
        %2803 = vrot.lane.b32.xlu0 %v2787, 16
        %v2804 = vpop.permute.xlu0 %2803
        %2805 = vrot.lane.b32.xlu0 %v2788, 16
        %v2806 = vpop.permute.xlu0 %2805
        %2807 = vrot.lane.b32.xlu0 %v2789, 16
        %v2808 = vpop.permute.xlu0 %2807
        %2809 = vrot.lane.b32.xlu0 %v2790, 16
        %v2810 = vpop.permute.xlu0 %2809
        %2811 = vrot.lane.b32.xlu0 %v2791, 16
        %v2812 = vpop.permute.xlu0 %2811
        %2813 = vrot.lane.b32.xlu0 %v2792, 16
        %v2814 = vpop.permute.xlu0 %2813
        %2815 = vrot.lane.b32.xlu0 %v2793, 16
        %v2816 = vpop.permute.xlu0 %2815
        %2817 = vrot.lane.b32.xlu0 %v2794, 16
        %v2818 = vpop.permute.xlu0 %2817
        %v2827 = vsel %vm1318, %v2804, 0.0
        %2828 = vadd.xlane.f32.xlu0 %v2827
        %v2829 = vpop.xlane.xlu0 %2828
        %v2830 = vsel %vm1318, %v2806, 0.0
        %2831 = vadd.xlane.f32.xlu0 %v2830
        %v2832 = vpop.xlane.xlu0 %2831
        %v2833 = vsel %vm1318, %v2808, 0.0
        %2834 = vadd.xlane.f32.xlu0 %v2833
        %v2835 = vpop.xlane.xlu0 %2834
        %v2836 = vsel %vm1318, %v2810, 0.0
        %2837 = vadd.xlane.f32.xlu0 %v2836
        %v2838 = vpop.xlane.xlu0 %2837
        %v2839 = vsel %vm1318, %v2812, 0.0
        %2840 = vadd.xlane.f32.xlu0 %v2839
        %v2841 = vpop.xlane.xlu0 %2840
        %v2842 = vsel %vm1318, %v2814, 0.0
        %2843 = vadd.xlane.f32.xlu0 %v2842
        %v2844 = vpop.xlane.xlu0 %2843
        %v2845 = vsel %vm1318, %v2816, 0.0
        %2846 = vadd.xlane.f32.xlu0 %v2845
        %v2847 = vpop.xlane.xlu0 %2846
        %v2848 = vsel %vm1318, %v2818, 0.0
        %2849 = vadd.xlane.f32.xlu0 %v2848
        %v2850 = vpop.xlane.xlu0 %2849
        %v2851 = vpack.c.bf16 %v2746, %v2746
        %2853 = vrot.lane.b32.xlu0 %v2851, 16
        %v2854 = vpop.permute.xlu0 %2853
        %2855 = vrot.lane.b32.xlu0 %v1344, 16
        %v2856 = vpop.permute.xlu0 %2855
        %v2865 = vperm.slane %v2829, %v1354
        %v2866 = vperm.slane %v2832, %v1354
        %v2867 = vperm.slane %v2835, %v1354
        %v2868 = vperm.slane %v2838, %v1354
        %v2869 = vperm.slane %v2841, %v1354
        %v2870 = vperm.slane %v2844, %v1354
        %v2871 = vperm.slane %v2847, %v1354
        %v2872 = vperm.slane %v2850, %v1354
        %v2873 = vsel %vm1363, %v2866, %v2865
        %v2874 = vsel %vm1365, %v2867, %v2873
        %v2875 = vsel %vm1367, %v2868, %v2874
        %v2876 = vsel %vm1369, %v2869, %v2875
        %v2877 = vsel %vm1371, %v2870, %v2876
        %v2878 = vsel %vm1373, %v2871, %v2877
        %v2879 = vsel %vm1375, %v2872, %v2878
        %v2882 = vsel %vm1318, %v2854, 0
        %v2885 = vsel %vm1318, %v2856, 0
        %2887 = vmatpush.bf16.xpose.msra.mxu0 0
        %2888 = vmatpush.bf16.xpose.msra.mxu0 0
        %2889 = vmatpush.bf16.xpose.msra.mxu0 0
        %2890 = vmatpush.bf16.xpose.msra.mxu0 0
        %2891 = vmatpush.bf16.xpose.msra.mxu0 0
        %2892 = vmatpush.bf16.xpose.msra.mxu0 0
        %2893 = vmatpush.bf16.xpose.msra.mxu0 0
        %2894 = vmatpush.bf16.xpose.msra.mxu0 %v2885
        %2895 = vmatmul.bf16.gmra.mxu0 %v2882
        %v2896 = vpop.f32.mrf.mxu0
        %v2897 = vadd.f32 %v2879, %v2896
        %v2898 = vpop.f32.mrf.mxu0
        %2899 = vdwg.mxu0
        %v2900 = vld [vmem:[#allocation3] sm:$0xff]
        %v2901 = vsel %vm1398, %v2897, -inf
        %2902 = vmax.xlane.f32.xlu0 %v2901
        %v2903 = vpop.xlane.xlu0 %2902
        %v2904 = vmax.f32 %v2900, %v2903
        %v2905 = vsub.f32 %v2900, %v2904
        %v2906 = vmul.f32 %v2905, 1.442695
        %v2907 = vpow.pop %v2906
        %2909 = vset.pattern.permute.xlu0 7
        %2910 = vperm.xlu0 %2909, %v2904
        %v2911 = vpop.permute.xlu0 %2910
        %v2913 = vsub.f32 %v2897, %v2911
        %v2914 = vmul.f32 %v2913, 1.442695
        %v2915 = vpow.pop %v2914
        %v2916 = vld [vmem:[#allocation4] sm:$0xff]
        %v2917 = vmul.f32 %v2907, %v2916
        %v2918 = vsel %vm1398, %v2915, 0.0
        %2919 = vadd.xlane.f32.xlu0 %v2918
        %v2920 = vpop.xlane.xlu0 %2919
        %v2921 = vadd.f32 %v2917, %v2920
        %vm2922 = vcmask 64568
        %2923 = vst.msk [vmem:[#allocation4] sm:$0xff] %vm2922, %v2921
        %2924 = vst.msk [vmem:[#allocation3] sm:$0xff] %vm2922, %v2904
        %v2925 = vld [vmem:[#allocation5] sm:$0xff]
        %2927 = vset.pattern.permute.xlu0 7
        %2928 = vperm.xlu0 %2927, %v2907
        %v2929 = vpop.permute.xlu0 %2928
        %v2931 = vmul.f32 %v2929, %v2925
        %v2932 = vpack.c.bf16 %v2915, %v2915
        %2933 = vrot.lane.b32.xlu0 %v1431, 16
        %v2934 = vpop.permute.xlu0 %2933
        %v2936 = vsel %vm1398, %v2932, 0
        %v2939 = vsel %vm1435, %v2934, 0
        %2941 = vmatpush.bf16.msra.mxu0 0
        %2942 = vmatpush.bf16.msra.mxu0 0
        %2943 = vmatpush.bf16.msra.mxu0 0
        %2944 = vmatpush.bf16.msra.mxu0 0
        %2945 = vmatpush.bf16.msra.mxu0 0
        %2946 = vmatpush.bf16.msra.mxu0 0
        %2947 = vmatpush.bf16.msra.mxu0 0
        %2948 = vmatpush.bf16.msra.mxu0 %v2939
        %2949 = vmatmul.bf16.gmra.mxu0 %v2936
        %v2950 = vpop.f32.mrf.mxu0
        %v2951 = vadd.f32 0.0, %v2950
        %v2952 = vpop.f32.mrf.mxu0
        %2953 = vdwg.mxu0
        %2955 = vrot.lane.b32.xlu0 %v2951, 112
        %v2956 = vpop.permute.xlu0 %2955
        %v2958 = vadd.f32 %v2931, %v2956
        %vm2959 = vcmask 1048448
        %2960 = vst.msk [vmem:[#allocation5] sm:$0xff] %vm2959, %v2958
        %p2961 = scmp.eq.s32.totalorder %s53, 1
        // Predicated region
        $region149: #{tpu_custom_call.1} parent=99 // pred_check
          %p2962 = pneg %p2961
        $region150: #{tpu_custom_call.1} parent=99 // pred_check_branch
          %2964 = sbr.rel (%p2962) target = $region152
        $region151: #{tpu_custom_call.1} parent=99 // pred_region
          %v2965 = vld [vmem:[#allocation4] sm:$0xff]
          %v2966 = vrcp.pop %v2965
          %v2967 = vmul.f32 %v2965, %v2966
          %v2968 = vsub.f32 1.0, %v2967
          %v2969 = vmul.f32 %v2966, %v2968
          %v2970 = vadd.f32 %v2966, %v2969
          %vm2971 = vweird.f32 %v2965
          %vm2972 = vweird.f32 %v2966
          %vm2973 = vmor %vm2971, %vm2972
          %v2974 = vsel %vm2973, %v2966, %v2970
          %v2975 = vand.u32 2147483647, %v2965
          %vm2976 = vcmp.eq.f32.partialorder %v2975, 8.507059e+37
          %v2977 = vand.u32 %v2965, 2147483648
          %v2978 = vor.u32 1.1754944e-38, %v2977
          %v2979 = vsel %vm2976, %v2978, %v2974
          %v2980 = vmul.f32 1.0, %v2979
          %v2981 = vld [vmem:[#allocation5] sm:$0xff]
          %2983 = vset.pattern.permute.xlu0 0
          %2984 = vperm.xlu0 %2983, %v2980
          %v2985 = vpop.permute.xlu0 %2984
          %v2987 = vmul.f32 %v2981, %v2985
          %2988 = vst.msk [vmem:[#allocation5] sm:$0xff] %vm1318, %v2987
          %v2989 = vld [vmem:[#allocation5] sm:$0xff]
          %2990 = vset.pattern.permute.xlu0 1
          %2991 = vperm.xlu0 %2990, %v2980
          %v2992 = vpop.permute.xlu0 %2991
          %v2994 = vmul.f32 %v2989, %v2992
          %2995 = vst.msk [vmem:[#allocation5] sm:$0xff] %vm1669, %v2994
          %v2996 = vld [vmem:[#allocation5] sm:$0xff]
          %2997 = vset.pattern.permute.xlu0 2
          %2998 = vperm.xlu0 %2997, %v2980
          %v2999 = vpop.permute.xlu0 %2998
          %v3001 = vmul.f32 %v2996, %v2999
          %3002 = vst.msk [vmem:[#allocation5] sm:$0xff] %vm1884, %v3001
          %v3003 = vld [vmem:[#allocation5] sm:$0xff]
          %3004 = vset.pattern.permute.xlu0 3
          %3005 = vperm.xlu0 %3004, %v2980
          %v3006 = vpop.permute.xlu0 %3005
          %v3008 = vmul.f32 %v3003, %v3006
          %3009 = vst.msk [vmem:[#allocation5] sm:$0xff] %vm2099, %v3008
          %v3010 = vld [vmem:[#allocation5] sm:$0xff]
          %3011 = vset.pattern.permute.xlu0 4
          %3012 = vperm.xlu0 %3011, %v2980
          %v3013 = vpop.permute.xlu0 %3012
          %v3015 = vmul.f32 %v3010, %v3013
          %3016 = vst.msk [vmem:[#allocation5] sm:$0xff] %vm2314, %v3015
          %v3017 = vld [vmem:[#allocation5] sm:$0xff]
          %3018 = vset.pattern.permute.xlu0 5
          %3019 = vperm.xlu0 %3018, %v2980
          %v3020 = vpop.permute.xlu0 %3019
          %v3022 = vmul.f32 %v3017, %v3020
          %3023 = vst.msk [vmem:[#allocation5] sm:$0xff] %vm2529, %v3022
          %v3024 = vld [vmem:[#allocation5] sm:$0xff]
          %3025 = vset.pattern.permute.xlu0 6
          %3026 = vperm.xlu0 %3025, %v2980
          %v3027 = vpop.permute.xlu0 %3026
          %v3029 = vmul.f32 %v3024, %v3027
          %3030 = vst.msk [vmem:[#allocation5] sm:$0xff] %vm2744, %v3029
          %v3031 = vld [vmem:[#allocation5] sm:$0xff]
          %3032 = vset.pattern.permute.xlu0 7
          %3033 = vperm.xlu0 %3032, %v2980
          %v3034 = vpop.permute.xlu0 %3033
          %v3036 = vmul.f32 %v3031, %v3034
          %3037 = vst.msk [vmem:[#allocation5] sm:$0xff] %vm2959, %v3036
          %v3038 = vld [vmem:[#allocation5] sm:$0xff]
          %v3039 = vpack.c.bf16 %v3038, %v3038
          %v3040 = vld [vmem:[#allocation20] sm:$0xf]
          %v3041 = vld [vmem:[#allocation20 + $0x4] sm:$0xf]
          %v3042 = vld [vmem:[#allocation20 + $0x8] sm:$0xf]
          %v3043 = vld [vmem:[#allocation20 + $0xc] sm:$0xf]
          %v3044 = vld [vmem:[#allocation20 + $0x10] sm:$0xf]
          %v3045 = vld [vmem:[#allocation20 + $0x14] sm:$0xf]
          %v3046 = vld [vmem:[#allocation20 + $0x18] sm:$0xf]
          %v3047 = vld [vmem:[#allocation20 + $0x1c] sm:$0xf]
          %v3048 = vld [vmem:[#allocation20 + $0x20] sm:$0xf]
          %v3049 = vld [vmem:[#allocation20 + $0x24] sm:$0xf]
          %v3050 = vld [vmem:[#allocation20 + $0x28] sm:$0xf]
          %v3051 = vld [vmem:[#allocation20 + $0x2c] sm:$0xf]
          %v3052 = vld [vmem:[#allocation20 + $0x30] sm:$0xf]
          %v3053 = vld [vmem:[#allocation20 + $0x34] sm:$0xf]
          %v3054 = vld [vmem:[#allocation20 + $0x38] sm:$0xf]
          %v3055 = vld [vmem:[#allocation20 + $0x3c] sm:$0xf]
          %v3056 = vld [vmem:[%s9] sm:$0x1]
          %v3058 = vperm.slane %v3056, 0
          %v3076 = vunpack.c.l.b16 %v3040
          %v3077 = vunpack.c.l.b16 %v3041
          %v3078 = vunpack.c.l.b16 %v3042
          %v3079 = vunpack.c.l.b16 %v3043
          %v3080 = vunpack.c.l.b16 %v3044
          %v3081 = vunpack.c.l.b16 %v3045
          %v3082 = vunpack.c.l.b16 %v3046
          %v3083 = vunpack.c.l.b16 %v3047
          %v3084 = vunpack.c.l.b16 %v3048
          %v3085 = vunpack.c.l.b16 %v3049
          %v3086 = vunpack.c.l.b16 %v3050
          %v3087 = vunpack.c.l.b16 %v3051
          %v3088 = vunpack.c.l.b16 %v3052
          %v3089 = vunpack.c.l.b16 %v3053
          %v3090 = vunpack.c.l.b16 %v3054
          %v3091 = vunpack.c.l.b16 %v3055
          %v3092 = vpack.c.b16 %v3077, %v3076
          %v3093 = vpack.c.b16 %v3079, %v3078
          %v3094 = vpack.c.b16 %v3081, %v3080
          %v3095 = vpack.c.b16 %v3083, %v3082
          %v3096 = vpack.c.b16 %v3085, %v3084
          %v3097 = vpack.c.b16 %v3087, %v3086
          %v3098 = vpack.c.b16 %v3089, %v3088
          %v3099 = vpack.c.b16 %v3091, %v3090
          %3108 = vmatpush.bf16.msra.mxu0 %v3099
          %3109 = vmatpush.bf16.msra.mxu0 %v3098
          %3110 = vmatpush.bf16.msra.mxu0 %v3097
          %3111 = vmatpush.bf16.msra.mxu0 %v3096
          %3112 = vmatpush.bf16.msra.mxu0 %v3095
          %3113 = vmatpush.bf16.msra.mxu0 %v3094
          %3114 = vmatpush.bf16.msra.mxu0 %v3093
          %3115 = vmatpush.bf16.msra.mxu0 %v3092
          %3116 = vmatmul.bf16.gmra.mxu0 %v3039
          %v3117 = vpop.f32.mrf.mxu0
          %v3118 = vadd.f32 %v3058, %v3117
          %v3119 = vpop.f32.mrf.mxu0
          %3120 = vdwg.mxu0
          %v3121 = vld [vmem:[%s796] sm:$0xff]
          %v3122 = vld [vmem:[%s816] sm:$0xff]
          %v3123 = vadd.f32 %v3121, %v3122
          %v3124 = vadd.f32 %v3123, %v3118
          %v3125 = vld [vmem:[%s12] sm:$0x1]
          %v3126 = vld [vmem:[%s13] sm:$0x1]
          %3127 = vadd.xlane.f32.xlu0 %v3124
          %v3128 = vpop.xlane.xlu0 %3127
          %v3129 = vmul.f32 %v3128, %v1087
          %v3130 = vsub.f32 %v3124, %v3129
          %v3131 = vmul.f32 %v3130, %v3130
          %3132 = vadd.xlane.f32.xlu0 %v3131
          %v3133 = vpop.xlane.xlu0 %3132
          %v3134 = vmul.f32 %v3133, %v1087
          %v3135 = vadd.f32 %v3134, 1e-05
          %v3136 = vrsqrt.pop %v3135
          %v3137 = vmul.f32 %v3136, %v3135
          %v3138 = vmul.f32 %v3137, %v3136
          %v3139 = vmul.f32 0.5, %v3138
          %v3140 = vsub.f32 1.5, %v3139
          %v3141 = vmul.f32 %v3136, %v3140
          %vm3142 = vweird.f32 %v3135
          %vm3143 = vweird.f32 %v3136
          %vm3144 = vmor %vm3142, %vm3143
          %v3145 = vsel %vm3144, %v3136, %v3141
          %v3146 = vmul.f32 %v3130, %v3145
          %v3148 = vperm.slane %v3125, 0
          %v3150 = vmul.f32 %v3146, %v3148
          %v3152 = vperm.slane %v3126, 0
          %v3154 = vadd.f32 %v3150, %v3152
          %v3155 = vpack.c.bf16 %v3154, %v3154
          %v3156 = vld [vmem:[#allocation21] sm:$0xff]
          %v3157 = vld [vmem:[#allocation21 + $0x8] sm:$0xff]
          %v3158 = vld [vmem:[#allocation21 + $0x10] sm:$0xff]
          %v3159 = vld [vmem:[#allocation21 + $0x18] sm:$0xff]
          %v3160 = vld [vmem:[#allocation21 + $0x20] sm:$0xff]
          %v3161 = vld [vmem:[#allocation21 + $0x28] sm:$0xff]
          %v3162 = vld [vmem:[#allocation21 + $0x30] sm:$0xff]
          %v3163 = vld [vmem:[#allocation21 + $0x38] sm:$0xff]
          %v3164 = vld [vmem:[#allocation21 + $0x40] sm:$0xff]
          %v3165 = vld [vmem:[#allocation21 + $0x48] sm:$0xff]
          %v3166 = vld [vmem:[#allocation21 + $0x50] sm:$0xff]
          %v3167 = vld [vmem:[#allocation21 + $0x58] sm:$0xff]
          %v3168 = vld [vmem:[#allocation21 + $0x60] sm:$0xff]
          %v3169 = vld [vmem:[#allocation21 + $0x68] sm:$0xff]
          %v3170 = vld [vmem:[#allocation21 + $0x70] sm:$0xff]
          %v3171 = vld [vmem:[#allocation21 + $0x78] sm:$0xff]
          %v3172 = vld [vmem:[#allocation21 + $0x80] sm:$0xff]
          %v3173 = vld [vmem:[#allocation21 + $0x88] sm:$0xff]
          %v3174 = vld [vmem:[#allocation21 + $0x90] sm:$0xff]
          %v3175 = vld [vmem:[#allocation21 + $0x98] sm:$0xff]
          %v3176 = vld [vmem:[#allocation21 + $0xa0] sm:$0xff]
          %v3177 = vld [vmem:[#allocation21 + $0xa8] sm:$0xff]
          %v3178 = vld [vmem:[#allocation21 + $0xb0] sm:$0xff]
          %v3179 = vld [vmem:[#allocation21 + $0xb8] sm:$0xff]
          %v3180 = vld [vmem:[#allocation21 + $0xc0] sm:$0xff]
          %v3181 = vld [vmem:[#allocation21 + $0xc8] sm:$0xff]
          %v3182 = vld [vmem:[#allocation21 + $0xd0] sm:$0xff]
          %v3183 = vld [vmem:[#allocation21 + $0xd8] sm:$0xff]
          %v3184 = vld [vmem:[#allocation21 + $0xe0] sm:$0xff]
          %v3185 = vld [vmem:[#allocation21 + $0xe8] sm:$0xff]
          %v3186 = vld [vmem:[#allocation21 + $0xf0] sm:$0xff]
          %v3187 = vld [vmem:[#allocation21 + $0xf8] sm:$0xff]
          %v3188 = vld [vmem:[%s15] sm:$0xf]
          %v3190 = vperm.slane %v3188, 0
          %v3191 = vperm.slane %v3188, 1
          %v3192 = vperm.slane %v3188, 2
          %v3193 = vperm.slane %v3188, 3
          %v3230 = vunpack.c.l.b16 %v3156
          %v3231 = vunpack.c.h.b16 %v3156
          %v3232 = vunpack.c.l.b16 %v3157
          %v3233 = vunpack.c.h.b16 %v3157
          %v3234 = vunpack.c.l.b16 %v3158
          %v3235 = vunpack.c.h.b16 %v3158
          %v3236 = vunpack.c.l.b16 %v3159
          %v3237 = vunpack.c.h.b16 %v3159
          %v3238 = vunpack.c.l.b16 %v3160
          %v3239 = vunpack.c.h.b16 %v3160
          %v3240 = vunpack.c.l.b16 %v3161
          %v3241 = vunpack.c.h.b16 %v3161
          %v3242 = vunpack.c.l.b16 %v3162
          %v3243 = vunpack.c.h.b16 %v3162
          %v3244 = vunpack.c.l.b16 %v3163
          %v3245 = vunpack.c.h.b16 %v3163
          %v3246 = vunpack.c.l.b16 %v3164
          %v3247 = vunpack.c.h.b16 %v3164
          %v3248 = vunpack.c.l.b16 %v3165
          %v3249 = vunpack.c.h.b16 %v3165
          %v3250 = vunpack.c.l.b16 %v3166
          %v3251 = vunpack.c.h.b16 %v3166
          %v3252 = vunpack.c.l.b16 %v3167
          %v3253 = vunpack.c.h.b16 %v3167
          %v3254 = vunpack.c.l.b16 %v3168
          %v3255 = vunpack.c.h.b16 %v3168
          %v3256 = vunpack.c.l.b16 %v3169
          %v3257 = vunpack.c.h.b16 %v3169
          %v3258 = vunpack.c.l.b16 %v3170
          %v3259 = vunpack.c.h.b16 %v3170
          %v3260 = vunpack.c.l.b16 %v3171
          %v3261 = vunpack.c.h.b16 %v3171
          %v3262 = vunpack.c.l.b16 %v3172
          %v3263 = vunpack.c.h.b16 %v3172
          %v3264 = vunpack.c.l.b16 %v3173
          %v3265 = vunpack.c.h.b16 %v3173
          %v3266 = vunpack.c.l.b16 %v3174
          %v3267 = vunpack.c.h.b16 %v3174
          %v3268 = vunpack.c.l.b16 %v3175
          %v3269 = vunpack.c.h.b16 %v3175
          %v3270 = vunpack.c.l.b16 %v3176
          %v3271 = vunpack.c.h.b16 %v3176
          %v3272 = vunpack.c.l.b16 %v3177
          %v3273 = vunpack.c.h.b16 %v3177
          %v3274 = vunpack.c.l.b16 %v3178
          %v3275 = vunpack.c.h.b16 %v3178
          %v3276 = vunpack.c.l.b16 %v3179
          %v3277 = vunpack.c.h.b16 %v3179
          %v3278 = vunpack.c.l.b16 %v3180
          %v3279 = vunpack.c.h.b16 %v3180
          %v3280 = vunpack.c.l.b16 %v3181
          %v3281 = vunpack.c.h.b16 %v3181
          %v3282 = vunpack.c.l.b16 %v3182
          %v3283 = vunpack.c.h.b16 %v3182
          %v3284 = vunpack.c.l.b16 %v3183
          %v3285 = vunpack.c.h.b16 %v3183
          %v3286 = vunpack.c.l.b16 %v3184
          %v3287 = vunpack.c.h.b16 %v3184
          %v3288 = vunpack.c.l.b16 %v3185
          %v3289 = vunpack.c.h.b16 %v3185
          %v3290 = vunpack.c.l.b16 %v3186
          %v3291 = vunpack.c.h.b16 %v3186
          %v3292 = vunpack.c.l.b16 %v3187
          %v3293 = vunpack.c.h.b16 %v3187
          %v3294 = vpack.c.b16 %v3234, %v3230
          %v3295 = vpack.c.b16 %v3235, %v3231
          %v3296 = vpack.c.b16 %v3236, %v3232
          %v3297 = vpack.c.b16 %v3237, %v3233
          %v3298 = vpack.c.b16 %v3242, %v3238
          %v3299 = vpack.c.b16 %v3243, %v3239
          %v3300 = vpack.c.b16 %v3244, %v3240
          %v3301 = vpack.c.b16 %v3245, %v3241
          %v3302 = vpack.c.b16 %v3250, %v3246
          %v3303 = vpack.c.b16 %v3251, %v3247
          %v3304 = vpack.c.b16 %v3252, %v3248
          %v3305 = vpack.c.b16 %v3253, %v3249
          %v3306 = vpack.c.b16 %v3258, %v3254
          %v3307 = vpack.c.b16 %v3259, %v3255
          %v3308 = vpack.c.b16 %v3260, %v3256
          %v3309 = vpack.c.b16 %v3261, %v3257
          %v3310 = vpack.c.b16 %v3266, %v3262
          %v3311 = vpack.c.b16 %v3267, %v3263
          %v3312 = vpack.c.b16 %v3268, %v3264
          %v3313 = vpack.c.b16 %v3269, %v3265
          %v3314 = vpack.c.b16 %v3274, %v3270
          %v3315 = vpack.c.b16 %v3275, %v3271
          %v3316 = vpack.c.b16 %v3276, %v3272
          %v3317 = vpack.c.b16 %v3277, %v3273
          %v3318 = vpack.c.b16 %v3282, %v3278
          %v3319 = vpack.c.b16 %v3283, %v3279
          %v3320 = vpack.c.b16 %v3284, %v3280
          %v3321 = vpack.c.b16 %v3285, %v3281
          %v3322 = vpack.c.b16 %v3290, %v3286
          %v3323 = vpack.c.b16 %v3291, %v3287
          %v3324 = vpack.c.b16 %v3292, %v3288
          %v3325 = vpack.c.b16 %v3293, %v3289
          %3358 = vmatpush.bf16.msra.mxu0 %v3322
          %3359 = vmatpush.bf16.msra.mxu0 %v3318
          %3360 = vmatpush.bf16.msra.mxu0 %v3314
          %3361 = vmatpush.bf16.msra.mxu0 %v3310
          %3362 = vmatpush.bf16.msra.mxu0 %v3306
          %3363 = vmatpush.bf16.msra.mxu0 %v3302
          %3364 = vmatpush.bf16.msra.mxu0 %v3298
          %3365 = vmatpush.bf16.msra.mxu0 %v3294
          %3366 = vmatmul.bf16.gmra.mxu0 %v3155
          %v3367 = vpop.f32.mrf.mxu0
          %v3368 = vadd.f32 %v3190, %v3367
          %v3369 = vpop.f32.mrf.mxu0
          %3370 = vdwg.mxu0
          %3371 = vmatpush.bf16.msra.mxu0 %v3323
          %3372 = vmatpush.bf16.msra.mxu0 %v3319
          %3373 = vmatpush.bf16.msra.mxu0 %v3315
          %3374 = vmatpush.bf16.msra.mxu0 %v3311
          %3375 = vmatpush.bf16.msra.mxu0 %v3307
          %3376 = vmatpush.bf16.msra.mxu0 %v3303
          %3377 = vmatpush.bf16.msra.mxu0 %v3299
          %3378 = vmatpush.bf16.msra.mxu0 %v3295
          %3379 = vmatmul.bf16.gmra.mxu0 %v3155
          %v3380 = vpop.f32.mrf.mxu0
          %v3381 = vadd.f32 %v3191, %v3380
          %v3382 = vpop.f32.mrf.mxu0
          %3383 = vdwg.mxu0
          %3384 = vmatpush.bf16.msra.mxu0 %v3324
          %3385 = vmatpush.bf16.msra.mxu0 %v3320
          %3386 = vmatpush.bf16.msra.mxu0 %v3316
          %3387 = vmatpush.bf16.msra.mxu0 %v3312
          %3388 = vmatpush.bf16.msra.mxu0 %v3308
          %3389 = vmatpush.bf16.msra.mxu0 %v3304
          %3390 = vmatpush.bf16.msra.mxu0 %v3300
          %3391 = vmatpush.bf16.msra.mxu0 %v3296
          %3392 = vmatmul.bf16.gmra.mxu0 %v3155
          %v3393 = vpop.f32.mrf.mxu0
          %v3394 = vadd.f32 %v3192, %v3393
          %v3395 = vpop.f32.mrf.mxu0
          %3396 = vdwg.mxu0
          %3397 = vmatpush.bf16.msra.mxu0 %v3325
          %3398 = vmatpush.bf16.msra.mxu0 %v3321
          %3399 = vmatpush.bf16.msra.mxu0 %v3317
          %3400 = vmatpush.bf16.msra.mxu0 %v3313
          %3401 = vmatpush.bf16.msra.mxu0 %v3309
          %3402 = vmatpush.bf16.msra.mxu0 %v3305
          %3403 = vmatpush.bf16.msra.mxu0 %v3301
          %3404 = vmatpush.bf16.msra.mxu0 %v3297
          %3405 = vmatmul.bf16.gmra.mxu0 %v3155
          %v3406 = vpop.f32.mrf.mxu0
          %v3407 = vadd.f32 %v3193, %v3406
          %v3408 = vpop.f32.mrf.mxu0
          %3409 = vdwg.mxu0
          %v3410 = vmul.f32 %v3368, 0.5
          %v3411 = vmul.f32 %v3381, 0.5
          %v3412 = vmul.f32 %v3394, 0.5
          %v3413 = vmul.f32 %v3407, 0.5
          %v3414 = vmul.f32 %v3368, 0.70710677
          %v3415 = vmul.f32 %v3381, 0.70710677
          %v3416 = vmul.f32 %v3394, 0.70710677
          %v3417 = vmul.f32 %v3407, 0.70710677
          %v3418 = vmul.f32 %v3414, %v3414
          %v3419 = vmin.f32 16.0, %v3418
          %v3420 = vmul.f32 %v3419, 2.1237322e-06
          %v3421 = vadd.f32 %v3420, 0.00028619796
          %v3422 = vmul.f32 %v3419, %v3421
          %v3423 = vadd.f32 %v3422, 0.0036580483
          %v3424 = vmul.f32 %v3419, %v3423
          %v3425 = vadd.f32 %v3424, 0.05243302
          %v3426 = vmul.f32 %v3419, %v3425
          %v3427 = vadd.f32 %v3426, 0.18741608
          %v3428 = vmul.f32 %v3419, %v3427
          %v3429 = vadd.f32 %v3428, 1.1283791
          %v3430 = vmul.f32 %v3414, %v3429
          %v3431 = vmul.f32 %v3419, 3.8918573e-05
          %v3432 = vadd.f32 %v3431, 0.001143296
          %v3433 = vmul.f32 %v3419, %v3432
          %v3434 = vadd.f32 %v3433, 0.014752088
          %v3435 = vmul.f32 %v3419, %v3434
          %v3436 = vadd.f32 %v3435, 0.112945676
          %v3437 = vmul.f32 %v3419, %v3436
          %v3438 = vadd.f32 %v3437, 0.4994258
          %v3439 = vmul.f32 %v3419, %v3438
          %v3440 = vadd.f32 %v3439, 1.0
          %v3441 = vrcp.pop %v3440
          %v3442 = vmul.f32 %v3440, %v3441
          %v3443 = vsub.f32 1.0, %v3442
          %v3444 = vmul.f32 %v3441, %v3443
          %v3445 = vadd.f32 %v3441, %v3444
          %vm3446 = vweird.f32 %v3440
          %vm3447 = vweird.f32 %v3441
          %vm3448 = vmor %vm3446, %vm3447
          %v3449 = vsel %vm3448, %v3441, %v3445
          %v3450 = vand.u32 2147483647, %v3440
          %vm3451 = vcmp.eq.f32.partialorder %v3450, 8.507059e+37
          %v3452 = vand.u32 %v3440, 2147483648
          %v3453 = vor.u32 1.1754944e-38, %v3452
          %v3454 = vsel %vm3451, %v3453, %v3449
          %v3455 = vmul.f32 %v3430, %v3454
          %v3456 = vmin.f32 %v3455, 1.0
          %v3457 = vmax.f32 %v3456, -1.0
          %v3458 = vmul.f32 %v3415, %v3415
          %v3459 = vmin.f32 16.0, %v3458
          %v3460 = vmul.f32 %v3459, 2.1237322e-06
          %v3461 = vadd.f32 %v3460, 0.00028619796
          %v3462 = vmul.f32 %v3459, %v3461
          %v3463 = vadd.f32 %v3462, 0.0036580483
          %v3464 = vmul.f32 %v3459, %v3463
          %v3465 = vadd.f32 %v3464, 0.05243302
          %v3466 = vmul.f32 %v3459, %v3465
          %v3467 = vadd.f32 %v3466, 0.18741608
          %v3468 = vmul.f32 %v3459, %v3467
          %v3469 = vadd.f32 %v3468, 1.1283791
          %v3470 = vmul.f32 %v3415, %v3469
          %v3471 = vmul.f32 %v3459, 3.8918573e-05
          %v3472 = vadd.f32 %v3471, 0.001143296
          %v3473 = vmul.f32 %v3459, %v3472
          %v3474 = vadd.f32 %v3473, 0.014752088
          %v3475 = vmul.f32 %v3459, %v3474
          %v3476 = vadd.f32 %v3475, 0.112945676
          %v3477 = vmul.f32 %v3459, %v3476
          %v3478 = vadd.f32 %v3477, 0.4994258
          %v3479 = vmul.f32 %v3459, %v3478
          %v3480 = vadd.f32 %v3479, 1.0
          %v3481 = vrcp.pop %v3480
          %v3482 = vmul.f32 %v3480, %v3481
          %v3483 = vsub.f32 1.0, %v3482
          %v3484 = vmul.f32 %v3481, %v3483
          %v3485 = vadd.f32 %v3481, %v3484
          %vm3486 = vweird.f32 %v3480
          %vm3487 = vweird.f32 %v3481
          %vm3488 = vmor %vm3486, %vm3487
          %v3489 = vsel %vm3488, %v3481, %v3485
          %v3490 = vand.u32 2147483647, %v3480
          %vm3491 = vcmp.eq.f32.partialorder %v3490, 8.507059e+37
          %v3492 = vand.u32 %v3480, 2147483648
          %v3493 = vor.u32 1.1754944e-38, %v3492
          %v3494 = vsel %vm3491, %v3493, %v3489
          %v3495 = vmul.f32 %v3470, %v3494
          %v3496 = vmin.f32 %v3495, 1.0
          %v3497 = vmax.f32 %v3496, -1.0
          %v3498 = vmul.f32 %v3416, %v3416
          %v3499 = vmin.f32 16.0, %v3498
          %v3500 = vmul.f32 %v3499, 2.1237322e-06
          %v3501 = vadd.f32 %v3500, 0.00028619796
          %v3502 = vmul.f32 %v3499, %v3501
          %v3503 = vadd.f32 %v3502, 0.0036580483
          %v3504 = vmul.f32 %v3499, %v3503
          %v3505 = vadd.f32 %v3504, 0.05243302
          %v3506 = vmul.f32 %v3499, %v3505
          %v3507 = vadd.f32 %v3506, 0.18741608
          %v3508 = vmul.f32 %v3499, %v3507
          %v3509 = vadd.f32 %v3508, 1.1283791
          %v3510 = vmul.f32 %v3416, %v3509
          %v3511 = vmul.f32 %v3499, 3.8918573e-05
          %v3512 = vadd.f32 %v3511, 0.001143296
          %v3513 = vmul.f32 %v3499, %v3512
          %v3514 = vadd.f32 %v3513, 0.014752088
          %v3515 = vmul.f32 %v3499, %v3514
          %v3516 = vadd.f32 %v3515, 0.112945676
          %v3517 = vmul.f32 %v3499, %v3516
          %v3518 = vadd.f32 %v3517, 0.4994258
          %v3519 = vmul.f32 %v3499, %v3518
          %v3520 = vadd.f32 %v3519, 1.0
          %v3521 = vrcp.pop %v3520
          %v3522 = vmul.f32 %v3520, %v3521
          %v3523 = vsub.f32 1.0, %v3522
          %v3524 = vmul.f32 %v3521, %v3523
          %v3525 = vadd.f32 %v3521, %v3524
          %vm3526 = vweird.f32 %v3520
          %vm3527 = vweird.f32 %v3521
          %vm3528 = vmor %vm3526, %vm3527
          %v3529 = vsel %vm3528, %v3521, %v3525
          %v3530 = vand.u32 2147483647, %v3520
          %vm3531 = vcmp.eq.f32.partialorder %v3530, 8.507059e+37
          %v3532 = vand.u32 %v3520, 2147483648
          %v3533 = vor.u32 1.1754944e-38, %v3532
          %v3534 = vsel %vm3531, %v3533, %v3529
          %v3535 = vmul.f32 %v3510, %v3534
          %v3536 = vmin.f32 %v3535, 1.0
          %v3537 = vmax.f32 %v3536, -1.0
          %v3538 = vmul.f32 %v3417, %v3417
          %v3539 = vmin.f32 16.0, %v3538
          %v3540 = vmul.f32 %v3539, 2.1237322e-06
          %v3541 = vadd.f32 %v3540, 0.00028619796
          %v3542 = vmul.f32 %v3539, %v3541
          %v3543 = vadd.f32 %v3542, 0.0036580483
          %v3544 = vmul.f32 %v3539, %v3543
          %v3545 = vadd.f32 %v3544, 0.05243302
          %v3546 = vmul.f32 %v3539, %v3545
          %v3547 = vadd.f32 %v3546, 0.18741608
          %v3548 = vmul.f32 %v3539, %v3547
          %v3549 = vadd.f32 %v3548, 1.1283791
          %v3550 = vmul.f32 %v3417, %v3549
          %v3551 = vmul.f32 %v3539, 3.8918573e-05
          %v3552 = vadd.f32 %v3551, 0.001143296
          %v3553 = vmul.f32 %v3539, %v3552
          %v3554 = vadd.f32 %v3553, 0.014752088
          %v3555 = vmul.f32 %v3539, %v3554
          %v3556 = vadd.f32 %v3555, 0.112945676
          %v3557 = vmul.f32 %v3539, %v3556
          %v3558 = vadd.f32 %v3557, 0.4994258
          %v3559 = vmul.f32 %v3539, %v3558
          %v3560 = vadd.f32 %v3559, 1.0
          %v3561 = vrcp.pop %v3560
          %v3562 = vmul.f32 %v3560, %v3561
          %v3563 = vsub.f32 1.0, %v3562
          %v3564 = vmul.f32 %v3561, %v3563
          %v3565 = vadd.f32 %v3561, %v3564
          %vm3566 = vweird.f32 %v3560
          %vm3567 = vweird.f32 %v3561
          %vm3568 = vmor %vm3566, %vm3567
          %v3569 = vsel %vm3568, %v3561, %v3565
          %v3570 = vand.u32 2147483647, %v3560
          %vm3571 = vcmp.eq.f32.partialorder %v3570, 8.507059e+37
          %v3572 = vand.u32 %v3560, 2147483648
          %v3573 = vor.u32 1.1754944e-38, %v3572
          %v3574 = vsel %vm3571, %v3573, %v3569
          %v3575 = vmul.f32 %v3550, %v3574
          %v3576 = vmin.f32 %v3575, 1.0
          %v3577 = vmax.f32 %v3576, -1.0
          %v3578 = vadd.f32 %v3457, 1.0
          %v3579 = vadd.f32 %v3497, 1.0
          %v3580 = vadd.f32 %v3537, 1.0
          %v3581 = vadd.f32 %v3577, 1.0
          %v3582 = vmul.f32 %v3410, %v3578
          %v3583 = vmul.f32 %v3411, %v3579
          %v3584 = vmul.f32 %v3412, %v3580
          %v3585 = vmul.f32 %v3413, %v3581
          %v3586 = vpack.c.bf16 %v3582, %v3582
          %v3587 = vpack.c.bf16 %v3583, %v3583
          %v3588 = vpack.c.bf16 %v3584, %v3584
          %v3589 = vpack.c.bf16 %v3585, %v3585
          %v3590 = vld [vmem:[#allocation23] sm:$0xf]
          %v3591 = vld [vmem:[#allocation23 + $0x4] sm:$0xf]
          %v3592 = vld [vmem:[#allocation23 + $0x8] sm:$0xf]
          %v3593 = vld [vmem:[#allocation23 + $0xc] sm:$0xf]
          %v3594 = vld [vmem:[#allocation23 + $0x10] sm:$0xf]
          %v3595 = vld [vmem:[#allocation23 + $0x14] sm:$0xf]
          %v3596 = vld [vmem:[#allocation23 + $0x18] sm:$0xf]
          %v3597 = vld [vmem:[#allocation23 + $0x1c] sm:$0xf]
          %v3598 = vld [vmem:[#allocation23 + $0x20] sm:$0xf]
          %v3599 = vld [vmem:[#allocation23 + $0x24] sm:$0xf]
          %v3600 = vld [vmem:[#allocation23 + $0x28] sm:$0xf]
          %v3601 = vld [vmem:[#allocation23 + $0x2c] sm:$0xf]
          %v3602 = vld [vmem:[#allocation23 + $0x30] sm:$0xf]
          %v3603 = vld [vmem:[#allocation23 + $0x34] sm:$0xf]
          %v3604 = vld [vmem:[#allocation23 + $0x38] sm:$0xf]
          %v3605 = vld [vmem:[#allocation23 + $0x3c] sm:$0xf]
          %v3606 = vld [vmem:[#allocation23 + $0x40] sm:$0xf]
          %v3607 = vld [vmem:[#allocation23 + $0x44] sm:$0xf]
          %v3608 = vld [vmem:[#allocation23 + $0x48] sm:$0xf]
          %v3609 = vld [vmem:[#allocation23 + $0x4c] sm:$0xf]
          %v3610 = vld [vmem:[#allocation23 + $0x50] sm:$0xf]
          %v3611 = vld [vmem:[#allocation23 + $0x54] sm:$0xf]
          %v3612 = vld [vmem:[#allocation23 + $0x58] sm:$0xf]
          %v3613 = vld [vmem:[#allocation23 + $0x5c] sm:$0xf]
          %v3614 = vld [vmem:[#allocation23 + $0x60] sm:$0xf]
          %v3615 = vld [vmem:[#allocation23 + $0x64] sm:$0xf]
          %v3616 = vld [vmem:[#allocation23 + $0x68] sm:$0xf]
          %v3617 = vld [vmem:[#allocation23 + $0x6c] sm:$0xf]
          %v3618 = vld [vmem:[#allocation23 + $0x70] sm:$0xf]
          %v3619 = vld [vmem:[#allocation23 + $0x74] sm:$0xf]
          %v3620 = vld [vmem:[#allocation23 + $0x78] sm:$0xf]
          %v3621 = vld [vmem:[#allocation23 + $0x7c] sm:$0xf]
          %v3622 = vld [vmem:[#allocation23 + $0x80] sm:$0xf]
          %v3623 = vld [vmem:[#allocation23 + $0x84] sm:$0xf]
          %v3624 = vld [vmem:[#allocation23 + $0x88] sm:$0xf]
          %v3625 = vld [vmem:[#allocation23 + $0x8c] sm:$0xf]
          %v3626 = vld [vmem:[#allocation23 + $0x90] sm:$0xf]
          %v3627 = vld [vmem:[#allocation23 + $0x94] sm:$0xf]
          %v3628 = vld [vmem:[#allocation23 + $0x98] sm:$0xf]
          %v3629 = vld [vmem:[#allocation23 + $0x9c] sm:$0xf]
          %v3630 = vld [vmem:[#allocation23 + $0xa0] sm:$0xf]
          %v3631 = vld [vmem:[#allocation23 + $0xa4] sm:$0xf]
          %v3632 = vld [vmem:[#allocation23 + $0xa8] sm:$0xf]
          %v3633 = vld [vmem:[#allocation23 + $0xac] sm:$0xf]
          %v3634 = vld [vmem:[#allocation23 + $0xb0] sm:$0xf]
          %v3635 = vld [vmem:[#allocation23 + $0xb4] sm:$0xf]
          %v3636 = vld [vmem:[#allocation23 + $0xb8] sm:$0xf]
          %v3637 = vld [vmem:[#allocation23 + $0xbc] sm:$0xf]
          %v3638 = vld [vmem:[#allocation23 + $0xc0] sm:$0xf]
          %v3639 = vld [vmem:[#allocation23 + $0xc4] sm:$0xf]
          %v3640 = vld [vmem:[#allocation23 + $0xc8] sm:$0xf]
          %v3641 = vld [vmem:[#allocation23 + $0xcc] sm:$0xf]
          %v3642 = vld [vmem:[#allocation23 + $0xd0] sm:$0xf]
          %v3643 = vld [vmem:[#allocation23 + $0xd4] sm:$0xf]
          %v3644 = vld [vmem:[#allocation23 + $0xd8] sm:$0xf]
          %v3645 = vld [vmem:[#allocation23 + $0xdc] sm:$0xf]
          %v3646 = vld [vmem:[#allocation23 + $0xe0] sm:$0xf]
          %v3647 = vld [vmem:[#allocation23 + $0xe4] sm:$0xf]
          %v3648 = vld [vmem:[#allocation23 + $0xe8] sm:$0xf]
          %v3649 = vld [vmem:[#allocation23 + $0xec] sm:$0xf]
          %v3650 = vld [vmem:[#allocation23 + $0xf0] sm:$0xf]
          %v3651 = vld [vmem:[#allocation23 + $0xf4] sm:$0xf]
          %v3652 = vld [vmem:[#allocation23 + $0xf8] sm:$0xf]
          %v3653 = vld [vmem:[#allocation23 + $0xfc] sm:$0xf]
          %v3654 = vld [vmem:[%s17] sm:$0x1]
          %v3656 = vperm.slane %v3654, 0
          %v3722 = vunpack.c.l.b16 %v3590
          %v3723 = vunpack.c.l.b16 %v3591
          %v3724 = vunpack.c.l.b16 %v3592
          %v3725 = vunpack.c.l.b16 %v3593
          %v3726 = vunpack.c.l.b16 %v3594
          %v3727 = vunpack.c.l.b16 %v3595
          %v3728 = vunpack.c.l.b16 %v3596
          %v3729 = vunpack.c.l.b16 %v3597
          %v3730 = vunpack.c.l.b16 %v3598
          %v3731 = vunpack.c.l.b16 %v3599
          %v3732 = vunpack.c.l.b16 %v3600
          %v3733 = vunpack.c.l.b16 %v3601
          %v3734 = vunpack.c.l.b16 %v3602
          %v3735 = vunpack.c.l.b16 %v3603
          %v3736 = vunpack.c.l.b16 %v3604
          %v3737 = vunpack.c.l.b16 %v3605
          %v3738 = vunpack.c.l.b16 %v3606
          %v3739 = vunpack.c.l.b16 %v3607
          %v3740 = vunpack.c.l.b16 %v3608
          %v3741 = vunpack.c.l.b16 %v3609
          %v3742 = vunpack.c.l.b16 %v3610
          %v3743 = vunpack.c.l.b16 %v3611
          %v3744 = vunpack.c.l.b16 %v3612
          %v3745 = vunpack.c.l.b16 %v3613
          %v3746 = vunpack.c.l.b16 %v3614
          %v3747 = vunpack.c.l.b16 %v3615
          %v3748 = vunpack.c.l.b16 %v3616
          %v3749 = vunpack.c.l.b16 %v3617
          %v3750 = vunpack.c.l.b16 %v3618
          %v3751 = vunpack.c.l.b16 %v3619
          %v3752 = vunpack.c.l.b16 %v3620
          %v3753 = vunpack.c.l.b16 %v3621
          %v3754 = vunpack.c.l.b16 %v3622
          %v3755 = vunpack.c.l.b16 %v3623
          %v3756 = vunpack.c.l.b16 %v3624
          %v3757 = vunpack.c.l.b16 %v3625
          %v3758 = vunpack.c.l.b16 %v3626
          %v3759 = vunpack.c.l.b16 %v3627
          %v3760 = vunpack.c.l.b16 %v3628
          %v3761 = vunpack.c.l.b16 %v3629
          %v3762 = vunpack.c.l.b16 %v3630
          %v3763 = vunpack.c.l.b16 %v3631
          %v3764 = vunpack.c.l.b16 %v3632
          %v3765 = vunpack.c.l.b16 %v3633
          %v3766 = vunpack.c.l.b16 %v3634
          %v3767 = vunpack.c.l.b16 %v3635
          %v3768 = vunpack.c.l.b16 %v3636
          %v3769 = vunpack.c.l.b16 %v3637
          %v3770 = vunpack.c.l.b16 %v3638
          %v3771 = vunpack.c.l.b16 %v3639
          %v3772 = vunpack.c.l.b16 %v3640
          %v3773 = vunpack.c.l.b16 %v3641
          %v3774 = vunpack.c.l.b16 %v3642
          %v3775 = vunpack.c.l.b16 %v3643
          %v3776 = vunpack.c.l.b16 %v3644
          %v3777 = vunpack.c.l.b16 %v3645
          %v3778 = vunpack.c.l.b16 %v3646
          %v3779 = vunpack.c.l.b16 %v3647
          %v3780 = vunpack.c.l.b16 %v3648
          %v3781 = vunpack.c.l.b16 %v3649
          %v3782 = vunpack.c.l.b16 %v3650
          %v3783 = vunpack.c.l.b16 %v3651
          %v3784 = vunpack.c.l.b16 %v3652
          %v3785 = vunpack.c.l.b16 %v3653
          %v3786 = vpack.c.b16 %v3723, %v3722
          %v3787 = vpack.c.b16 %v3725, %v3724
          %v3788 = vpack.c.b16 %v3727, %v3726
          %v3789 = vpack.c.b16 %v3729, %v3728
          %v3790 = vpack.c.b16 %v3731, %v3730
          %v3791 = vpack.c.b16 %v3733, %v3732
          %v3792 = vpack.c.b16 %v3735, %v3734
          %v3793 = vpack.c.b16 %v3737, %v3736
          %v3794 = vpack.c.b16 %v3739, %v3738
          %v3795 = vpack.c.b16 %v3741, %v3740
          %v3796 = vpack.c.b16 %v3743, %v3742
          %v3797 = vpack.c.b16 %v3745, %v3744
          %v3798 = vpack.c.b16 %v3747, %v3746
          %v3799 = vpack.c.b16 %v3749, %v3748
          %v3800 = vpack.c.b16 %v3751, %v3750
          %v3801 = vpack.c.b16 %v3753, %v3752
          %v3802 = vpack.c.b16 %v3755, %v3754
          %v3803 = vpack.c.b16 %v3757, %v3756
          %v3804 = vpack.c.b16 %v3759, %v3758
          %v3805 = vpack.c.b16 %v3761, %v3760
          %v3806 = vpack.c.b16 %v3763, %v3762
          %v3807 = vpack.c.b16 %v3765, %v3764
          %v3808 = vpack.c.b16 %v3767, %v3766
          %v3809 = vpack.c.b16 %v3769, %v3768
          %v3810 = vpack.c.b16 %v3771, %v3770
          %v3811 = vpack.c.b16 %v3773, %v3772
          %v3812 = vpack.c.b16 %v3775, %v3774
          %v3813 = vpack.c.b16 %v3777, %v3776
          %v3814 = vpack.c.b16 %v3779, %v3778
          %v3815 = vpack.c.b16 %v3781, %v3780
          %v3816 = vpack.c.b16 %v3783, %v3782
          %v3817 = vpack.c.b16 %v3785, %v3784
          %3850 = vmatpush.bf16.msra.mxu0 %v3793
          %3851 = vmatpush.bf16.msra.mxu0 %v3792
          %3852 = vmatpush.bf16.msra.mxu0 %v3791
          %3853 = vmatpush.bf16.msra.mxu0 %v3790
          %3854 = vmatpush.bf16.msra.mxu0 %v3789
          %3855 = vmatpush.bf16.msra.mxu0 %v3788
          %3856 = vmatpush.bf16.msra.mxu0 %v3787
          %3857 = vmatpush.bf16.msra.mxu0 %v3786
          %3858 = vmatmul.bf16.gmra.mxu0 %v3586
          %v3859 = vpop.f32.mrf.mxu0
          %v3860 = vadd.f32 %v3656, %v3859
          %v3861 = vpop.f32.mrf.mxu0
          %3862 = vdwg.mxu0
          %3863 = vmatpush.bf16.msra.mxu0 %v3801
          %3864 = vmatpush.bf16.msra.mxu0 %v3800
          %3865 = vmatpush.bf16.msra.mxu0 %v3799
          %3866 = vmatpush.bf16.msra.mxu0 %v3798
          %3867 = vmatpush.bf16.msra.mxu0 %v3797
          %3868 = vmatpush.bf16.msra.mxu0 %v3796
          %3869 = vmatpush.bf16.msra.mxu0 %v3795
          %3870 = vmatpush.bf16.msra.mxu0 %v3794
          %3871 = vmatmul.bf16.gmra.mxu0 %v3587
          %v3872 = vpop.f32.mrf.mxu0
          %v3873 = vadd.f32 %v3860, %v3872
          %v3874 = vpop.f32.mrf.mxu0
          %3875 = vdwg.mxu0
          %3876 = vmatpush.bf16.msra.mxu0 %v3809
          %3877 = vmatpush.bf16.msra.mxu0 %v3808
          %3878 = vmatpush.bf16.msra.mxu0 %v3807
          %3879 = vmatpush.bf16.msra.mxu0 %v3806
          %3880 = vmatpush.bf16.msra.mxu0 %v3805
          %3881 = vmatpush.bf16.msra.mxu0 %v3804
          %3882 = vmatpush.bf16.msra.mxu0 %v3803
          %3883 = vmatpush.bf16.msra.mxu0 %v3802
          %3884 = vmatmul.bf16.gmra.mxu0 %v3588
          %v3885 = vpop.f32.mrf.mxu0
          %v3886 = vadd.f32 %v3873, %v3885
          %v3887 = vpop.f32.mrf.mxu0
          %3888 = vdwg.mxu0
          %3889 = vmatpush.bf16.msra.mxu0 %v3817
          %3890 = vmatpush.bf16.msra.mxu0 %v3816
          %3891 = vmatpush.bf16.msra.mxu0 %v3815
          %3892 = vmatpush.bf16.msra.mxu0 %v3814
          %3893 = vmatpush.bf16.msra.mxu0 %v3813
          %3894 = vmatpush.bf16.msra.mxu0 %v3812
          %3895 = vmatpush.bf16.msra.mxu0 %v3811
          %3896 = vmatpush.bf16.msra.mxu0 %v3810
          %3897 = vmatmul.bf16.gmra.mxu0 %v3589
          %v3898 = vpop.f32.mrf.mxu0
          %v3899 = vadd.f32 %v3886, %v3898
          %v3900 = vpop.f32.mrf.mxu0
          %3901 = vdwg.mxu0
          %v3902 = vadd.f32 %v3124, %v3899
          %3903 = vst [vmem:[%s943] sm:$0xff] %v3902
        $region152: #{tpu_custom_call.1} parent=99 // pred_fallthru
          _
        %s3904 = sand.u32 %s532, 1
        %s3905 = scalar_lea.sflag [#allocation8], %s3904
        %s3906 = sand.u32 %s532, 1
        %s3907 = smul.addr %s3906, 8
        %s3908 = scalar_lea.vmem [#allocation24], %s3907
        // Predicated region
        $region153: #{tpu_custom_call.1} parent=99 // pred_check
          %p3909 = pneg %p542
        $region154: #{tpu_custom_call.1} parent=99 // pred_check_branch
          %3911 = sbr.rel (%p3909) target = $region156
        $region155: #{tpu_custom_call.1} parent=99 // pred_region
          %3913 = vsyncadd %s3905, 0
          %s3914 = smul.addr %s51, 2
          %s3915 = sadd.s32 %s52, %s3914
          %s3916 = smul.addr %s3915, 8
          %s3917 = scalar_lea.hbm %s20, %s3916
          %s3919 = sshll.u32 %s3908, 4
          %s3920 = int_to_ptr.vmem [resolvable:$true] %s3919
          %s3921 = sshll.u32 %s3917, 4
          %s3922 = int_to_ptr.hbm [resolvable:$true] %s3921
          %3924 = dma.vmem_to_hbm [thread:$0]  %s3920, 128, %s3922, %s3905
        $region156: #{tpu_custom_call.1} parent=99 // pred_fallthru
          _
      $region100: #{tpu_custom_call.1} parent=5 // pred_fallthru
        _
      %p3925 = scmp.le.s32.totalorder 2, %s41
      // Predicated region
      $region157: #{tpu_custom_call.1} parent=5 // pred_check
        %p3926 = pneg %p3925
      $region158: #{tpu_custom_call.1} parent=5 // pred_check_branch
        %3928 = sbr.rel (%p3926) target = $region160
      $region159: #{tpu_custom_call.1} parent=5 // pred_region
        %s3929 = ssub.s32 %s41, 2
        // Predicated region
        $region161: #{tpu_custom_call.1} parent=159 // pred_check
          %p3930 = pneg %p548
        $region162: #{tpu_custom_call.1} parent=159 // pred_check_branch
          %3932 = sbr.rel (%p3930) target = $region164
        $region163: #{tpu_custom_call.1} parent=159 // pred_region
          %s3933 = sand.u32 %s533, 1
          %s3934 = scalar_lea.sflag [#allocation8], %s3933
          %s3935 = sand.u32 %s533, 1
          %s3936 = smul.addr %s3935, 8
          %s3937 = scalar_lea.vmem [#allocation24], %s3936
          %3939 = dma.done %s3934, 128
        $region164: #{tpu_custom_call.1} parent=159 // pred_fallthru
          _
      $region160: #{tpu_custom_call.1} parent=5 // pred_fallthru
        _
    $region6: #{tpu_custom_call.1} parent=1 // loop_footer
      %s45 = sadd.s32 1, %s41
    $region7: #{tpu_custom_call.1} parent=1 // loop_footer_branch
      %40 = sbr.rel target = $region3
    $region8: #{tpu_custom_call.1} parent=1 // loop_exit
      _
    %3940 = vsyncpa [#allocation7], 1
    %s3941 = scalar_lea.sflag [#allocation7], 1
    %3942 = vsyncpa %s3941, 1
    %3943 = vsyncpa [#allocation10], 1
    %s3944 = scalar_lea.sflag [#allocation10], 1
    %3945 = vsyncpa %s3944, 1
    %3946 = vsyncpa [#allocation13], 1
    %s3947 = scalar_lea.sflag [#allocation13], 1
    %3948 = vsyncpa %s3947, 1
    %3949 = vsyncpa [#allocation16], 1
    %3950 = vsyncpa [#allocation19], 1
    %3951 = vsyncpa [#allocation22], 1
    %3952 = vsyncpa [#allocation8], 1
    %s3953 = scalar_lea.sflag [#allocation8], 1
    %3954 = vsyncpa %s3953, 1

</llo_original>
